<compile_context>
chip_gen: v7x
topology: tpu7x:2x2x1
jax: 0.10.0
libtpu: 0.0.40
codegen_flags: <defaults>
</compile_context>

<pallas_src>
import jax
import jax.numpy as jnp
from jax import lax
from jax.experimental import pallas as pl
from jax.experimental.pallas import tpu as pltpu

CHANNELS = 1
IMG_SIZE = 32
IMG_FEATS = CHANNELS * IMG_SIZE * IMG_SIZE  # 1024
N_CLASSES = 26
N_CLASSES_PAD = 128                         # pad LUT rows to a full lane dim
D_IN = IMG_FEATS + N_CLASSES                # 1050
HIDDEN = 512


def _leaky_relu(x, slope=0.2):
    # max(x, 0.2*x) == LeakyReLU(0.2): 2 VALU ops (no compare+select).
    return jnp.maximum(x, slope * x)


def _round_up(x, m):
    return pl.cdiv(x, m) * m


def _default_tb():
    # v6e: a bigger batch tile amortizes the ~0.35us grid-step overhead.
    # v5e: per-step compute is already ~5us -> keep 512 (less VMEM pressure).
    # v7x: keep <=512 by default (64 MiB physical VMEM, 2 TCs get >=2 steps).
    try:
        kind = jax.devices()[0].device_kind.lower()
    except Exception:
        return 512
    return 1024 if "v6" in kind else 512


def discriminator_kernel(x_ref, lbl_ref, w1_ref, lut_ref, w2_ref, b2_ref,
                         w3_ref, b3_ref, w4_ref, b4_ref, out_ref):
    # ---- Layer 1 ------------------------------------------------------
    # In-kernel f32 -> bf16 cast of the image tile (hidden under the MXU).
    x = x_ref[...].astype(jnp.bfloat16)                          # (tb, 1024)
    # Label one-hot built in-kernel from the int32 label column; the folded
    # (emb @ W1_label + b1) LUT turns the (B,1050) concat into a tiny K=128
    # MXU matmul.  Garbage labels in padded edge rows can only select a valid
    # or zero LUT row -> finite, and those rows are discarded anyway.
    iota = lax.broadcasted_iota(
        jnp.int32, (x_ref.shape[0], lut_ref.shape[0]), 1)        # (tb, 128)
    onehot = (lbl_ref[...] == iota).astype(jnp.bfloat16)         # (tb, 128)
    h = jnp.dot(x, w1_ref[...], preferred_element_type=jnp.float32)
    h = h + jnp.dot(onehot, lut_ref[...], preferred_element_type=jnp.float32)
    h = _leaky_relu(h)                                           # f32 (tb, 512)

    # ---- Layer 2 (Dropout(0.4) -> identity at inference) ---------------
    h = _leaky_relu(jnp.dot(h.astype(jnp.bfloat16), w2_ref[...],
                            preferred_element_type=jnp.float32) + b2_ref[...])

    # ---- Layer 3 (Dropout(0.4) -> identity at inference) ---------------
    h = _leaky_relu(jnp.dot(h.astype(jnp.bfloat16), w3_ref[...],
                            preferred_element_type=jnp.float32) + b3_ref[...])

    # ---- Layer 4: N=1 output -> VPU multiply + lane reduction ----------
    out = jnp.sum(h * w4_ref[...], axis=-1, keepdims=True) + b4_ref[0, 0]
    out_ref[...] = out.astype(out_ref.dtype)                     # (tb, 1)


def init_params(key):
    """Deterministic synthetic parameters (shapes match the nn.Module)."""
    ks = jax.random.split(key, 9)

    def linear(kw, kb, fan_in, fan_out):
        bound = 1.0 / jnp.sqrt(jnp.float32(fan_in))
        w = jax.random.uniform(kw, (fan_in, fan_out), jnp.float32, -bound, bound)
        b = jax.random.uniform(kb, (1, fan_out), jnp.float32, -bound, bound)
        return w, b

    emb = jax.random.normal(ks[0], (N_CLASSES, N_CLASSES), jnp.float32)
    w1, b1 = linear(ks[1], ks[2], D_IN, HIDDEN)
    w2, b2 = linear(ks[3], ks[4], HIDDEN, HIDDEN)
    w3, b3 = linear(ks[5], ks[6], HIDDEN, HIDDEN)
    w4, b4 = linear(ks[7], ks[8], HIDDEN, 1)
    return dict(emb=emb, w1=w1, b1=b1, w2=w2, b2=b2,
                w3=w3, b3=b3, w4=w4, b4=b4)


def prepare_params(params):
    """One-time fold + cast of the nn.Module parameters into kernel layout.

    Do this once (not per forward call) so no weight re-cast traffic is paid
    per inference step.
    """
    # Fold Embedding(26,26) -> W1[1024:1050] -> +b1 into a (26, 512) table,
    # zero-pad rows to 128 so the one-hot matmul has lane-aligned K.
    lut = params["emb"] @ params["w1"][IMG_FEATS:] + params["b1"]      # (26, 512)
    lut = jnp.pad(lut, ((0, N_CLASSES_PAD - N_CLASSES), (0, 0)))
    return dict(
        w1=params["w1"][:IMG_FEATS].astype(jnp.bfloat16),              # (1024, 512)
        lut=lut.astype(jnp.bfloat16),                                  # (128, 512)
        w2=params["w2"].astype(jnp.bfloat16),                          # (512, 512)
        b2=params["b2"],                                               # (1, 512) f32
        w3=params["w3"].astype(jnp.bfloat16),                          # (512, 512)
        b3=params["b3"],                                               # (1, 512) f32
        w4=params["w4"].reshape(1, HIDDEN),                            # (1, 512) f32
        b4=params["b4"].reshape(1, 1),                                 # (1, 1)   f32
    )


def discriminator_forward(prepared, img, labels, *, tb=None):
    """img: (B, 1, 32, 32) float32 NCHW; labels: (B,) int in [0, 26)."""
    B = img.shape[0]
    x = img.reshape(B, IMG_FEATS)                 # f32; bf16 cast happens in-kernel
    lbl = labels.reshape(B, 1).astype(jnp.int32)  # 4 bytes/sample DMA

    # Batch tile: sublane-align, and cap at ~B/2 so the parallel batch axis
    # has >=2 grid steps (v7x megacore sharding + DMA/compute pipelining).
    if tb is None:
        tb = _default_tb()
    tb = _round_up(max(int(tb), 16), 16)
    tb_eff = min(tb, _round_up(pl.cdiv(B, 2), 16))
    grid = (pl.cdiv(B, tb_eff),)                  # partial edge block, no pad copies

    row_map = lambda i: (i, 0)      # batch-tiled activations / labels / outputs
    const_map = lambda i: (0, 0)    # weights stay VMEM-resident across steps

    out = pl.pallas_call(
        discriminator_kernel,
        out_shape=jax.ShapeDtypeStruct((B, 1), jnp.float32),
        grid=grid,
        in_specs=[
            pl.BlockSpec((tb_eff, IMG_FEATS), row_map),                # x (f32)
            pl.BlockSpec((tb_eff, 1), row_map),                        # labels (i32)
            pl.BlockSpec((IMG_FEATS, HIDDEN), const_map),              # w1[:1024] bf16
            pl.BlockSpec((N_CLASSES_PAD, HIDDEN), const_map),          # label LUT bf16
            pl.BlockSpec((HIDDEN, HIDDEN), const_map),                 # w2 bf16
            pl.BlockSpec((1, HIDDEN), const_map),                      # b2 f32
            pl.BlockSpec((HIDDEN, HIDDEN), const_map),                 # w3 bf16
            pl.BlockSpec((1, HIDDEN), const_map),                      # b3 f32
            pl.BlockSpec((1, HIDDEN), const_map),                      # w4 (as row) f32
            pl.BlockSpec(memory_space=pltpu.MemorySpace.SMEM),         # b4 scalar
        ],
        out_specs=pl.BlockSpec((tb_eff, 1), row_map),
        compiler_params=pltpu.CompilerParams(
            dimension_semantics=("parallel",),
            vmem_limit_bytes=(64 if tb_eff > 512 else 32) * 1024 * 1024),
    )(x, lbl, prepared["w1"], prepared["lut"], prepared["w2"], prepared["b2"],
      prepared["w3"], prepared["b3"], prepared["w4"], prepared["b4"])

    return out


def _reference_forward(params, img, labels):
    """Pure-JAX f32 reference for correctness check (exact module semantics)."""
    B = img.shape[0]
    x = jnp.concatenate(
        [img.reshape(B, -1), jnp.take(params["emb"], labels, axis=0)], -1)
    h = _leaky_relu(x @ params["w1"] + params["b1"])
    h = _leaky_relu(h @ params["w2"] + params["b2"])
    h = _leaky_relu(h @ params["w3"] + params["b3"])
    return h @ params["w4"] + params["b4"]


if __name__ == "__main__":
    key = jax.random.PRNGKey(0)
    k_params, k_img, k_lbl = jax.random.split(key, 3)

    params = init_params(k_params)
    prepared = prepare_params(params)

    # Small batch: single grid step, edge block larger than the batch.
    B = 2
    img = jax.random.normal(k_img, (B, CHANNELS, IMG_SIZE, IMG_SIZE), jnp.float32)
    labels = jax.random.randint(k_lbl, (B,), 0, N_CLASSES, jnp.int32)

    out = jax.block_until_ready(discriminator_forward(prepared, img, labels))
    ref = _reference_forward(params, img, labels)
    assert out.shape == (B, 1)
    # bf16 matmuls with f32 accumulation -> looser tolerance than pure f32.
    assert jnp.allclose(out, ref, atol=5e-2, rtol=5e-2), float(
        jnp.max(jnp.abs(out - ref)))

    # Larger batch: multiple grid steps + a partial final block (no padding).
    B2 = 40
    k_img2, k_lbl2 = jax.random.split(jax.random.PRNGKey(1), 2)
    img2 = jax.random.normal(k_img2, (B2, CHANNELS, IMG_SIZE, IMG_SIZE),
                             jnp.float32)
    labels2 = jax.random.randint(k_lbl2, (B2,), 0, N_CLASSES, jnp.int32)
    out2 = jax.block_until_ready(
        discriminator_forward(prepared, img2, labels2, tb=64))
    ref2 = _reference_forward(params, img2, labels2)
    assert out2.shape == (B2, 1)
    assert jnp.allclose(out2, ref2, atol=5e-2, rtol=5e-2), float(
        jnp.max(jnp.abs(out2 - ref2)))

    print("KERNEL_OK")
</pallas_src>

<mosaic_0001>
module attributes {stable_mosaic.version = 11 : i64} {
  func.func @discriminator_kernel(%arg0: i32, %arg1: memref<16x1024xf32, #tpu.memory_space<vmem>>, %arg2: memref<16x1xi32, #tpu.memory_space<vmem>>, %arg3: memref<1024x512xbf16, #tpu.memory_space<vmem>>, %arg4: memref<128x512xbf16, #tpu.memory_space<vmem>>, %arg5: memref<512x512xbf16, #tpu.memory_space<vmem>>, %arg6: memref<1x512xf32, #tpu.memory_space<vmem>>, %arg7: memref<512x512xbf16, #tpu.memory_space<vmem>>, %arg8: memref<1x512xf32, #tpu.memory_space<vmem>>, %arg9: memref<1x512xf32, #tpu.memory_space<vmem>>, %arg10: memref<1x1xf32, #tpu.memory_space<smem>>, %arg11: memref<16x1xf32, #tpu.memory_space<vmem>>) attributes {dimension_semantics = [#tpu.dimension_semantics<parallel>], iteration_bounds = array<i64: 1>, scalar_prefetch = 0 : i64, scratch_operands = 0 : i64, tpu.core_type = #tpu.core_type<tc>, window_params = [{transform_indices = @transform_0, window_bounds = array<i64: 16, 1024>}, {transform_indices = @transform_1, window_bounds = array<i64: 16, 1>}, {pipeline_mode = #tpu.pipeline_mode<synchronous>, transform_indices = @transform_2, window_bounds = array<i64: 1024, 512>}, {pipeline_mode = #tpu.pipeline_mode<synchronous>, transform_indices = @transform_3, window_bounds = array<i64: 128, 512>}, {pipeline_mode = #tpu.pipeline_mode<synchronous>, transform_indices = @transform_4, window_bounds = array<i64: 512, 512>}, {pipeline_mode = #tpu.pipeline_mode<synchronous>, transform_indices = @transform_5, window_bounds = array<i64: 1, 512>}, {pipeline_mode = #tpu.pipeline_mode<synchronous>, transform_indices = @transform_6, window_bounds = array<i64: 512, 512>}, {pipeline_mode = #tpu.pipeline_mode<synchronous>, transform_indices = @transform_7, window_bounds = array<i64: 1, 512>}, {pipeline_mode = #tpu.pipeline_mode<synchronous>, transform_indices = @transform_8, window_bounds = array<i64: 1, 512>}, {transform_indices = @transform_9, window_bounds = array<i64: 1, 1>}, {transform_indices = @transform_10, window_bounds = array<i64: 16, 1>}]} {
    %c0 = arith.constant 0 : index
    %c0_0 = arith.constant 0 : index
    %0 = vector.load %arg1[%c0, %c0_0] : memref<16x1024xf32, #tpu.memory_space<vmem>>, vector<16x1024xf32>
    %1 = arith.truncf %0 : vector<16x1024xf32> to vector<16x1024xbf16>
    %2 = tpu.iota {dimensions = array<i32: 1>} : vector<16x128xi32>
    %c0_1 = arith.constant 0 : index
    %c0_2 = arith.constant 0 : index
    %3 = vector.load %arg2[%c0_1, %c0_2] : memref<16x1xi32, #tpu.memory_space<vmem>>, vector<16x1xi32>
    %4 = vector.broadcast %3 : vector<16x1xi32> to vector<16x128xi32>
    %5 = arith.cmpi eq, %4, %2 : vector<16x128xi32>
    %6 = arith.extui %5 : vector<16x128xi1> to vector<16x128xi32>
    %7 = arith.sitofp %6 : vector<16x128xi32> to vector<16x128xf32>
    %8 = arith.truncf %7 : vector<16x128xf32> to vector<16x128xbf16>
    %c0_3 = arith.constant 0 : index
    %c0_4 = arith.constant 0 : index
    %9 = vector.load %arg3[%c0_3, %c0_4] : memref<1024x512xbf16, #tpu.memory_space<vmem>>, vector<1024x512xbf16>
    %cst = arith.constant dense<0.000000e+00> : vector<16x512xf32>
    %10 = tpu.matmul %1, %9, %cst {dimension_numbers = #tpu.dot_dimension_numbers<[1], [0], [0], [1], [0, 0, 1, 1], [], []>} : vector<16x1024xbf16>, vector<1024x512xbf16>, vector<16x512xf32> -> vector<16x512xf32>
    %c0_5 = arith.constant 0 : index
    %c0_6 = arith.constant 0 : index
    %11 = vector.load %arg4[%c0_5, %c0_6] : memref<128x512xbf16, #tpu.memory_space<vmem>>, vector<128x512xbf16>
    %cst_7 = arith.constant dense<0.000000e+00> : vector<16x512xf32>
    %12 = tpu.matmul %8, %11, %cst_7 {dimension_numbers = #tpu.dot_dimension_numbers<[1], [0], [0], [1], [0, 0, 1, 1], [], []>} : vector<16x128xbf16>, vector<128x512xbf16>, vector<16x512xf32> -> vector<16x512xf32>
    %13 = arith.addf %10, %12 : vector<16x512xf32>
    %cst_8 = arith.constant 2.000000e-01 : f32
    %14 = vector.broadcast %cst_8 : f32 to vector<16x512xf32>
    %15 = arith.mulf %14, %13 : vector<16x512xf32>
    %16 = arith.maximumf %13, %15 : vector<16x512xf32>
    %17 = arith.truncf %16 : vector<16x512xf32> to vector<16x512xbf16>
    %c0_9 = arith.constant 0 : index
    %c0_10 = arith.constant 0 : index
    %18 = vector.load %arg5[%c0_9, %c0_10] : memref<512x512xbf16, #tpu.memory_space<vmem>>, vector<512x512xbf16>
    %cst_11 = arith.constant dense<0.000000e+00> : vector<16x512xf32>
    %19 = tpu.matmul %17, %18, %cst_11 {dimension_numbers = #tpu.dot_dimension_numbers<[1], [0], [0], [1], [0, 0, 1, 1], [], []>} : vector<16x512xbf16>, vector<512x512xbf16>, vector<16x512xf32> -> vector<16x512xf32>
    %c0_12 = arith.constant 0 : index
    %c0_13 = arith.constant 0 : index
    %20 = vector.load %arg6[%c0_12, %c0_13] : memref<1x512xf32, #tpu.memory_space<vmem>>, vector<1x512xf32>
    %21 = vector.broadcast %20 : vector<1x512xf32> to vector<16x512xf32>
    %22 = arith.addf %19, %21 : vector<16x512xf32>
    %cst_14 = arith.constant 2.000000e-01 : f32
    %23 = vector.broadcast %cst_14 : f32 to vector<16x512xf32>
    %24 = arith.mulf %23, %22 : vector<16x512xf32>
    %25 = arith.maximumf %22, %24 : vector<16x512xf32>
    %26 = arith.truncf %25 : vector<16x512xf32> to vector<16x512xbf16>
    %c0_15 = arith.constant 0 : index
    %c0_16 = arith.constant 0 : index
    %27 = vector.load %arg7[%c0_15, %c0_16] : memref<512x512xbf16, #tpu.memory_space<vmem>>, vector<512x512xbf16>
    %cst_17 = arith.constant dense<0.000000e+00> : vector<16x512xf32>
    %28 = tpu.matmul %26, %27, %cst_17 {dimension_numbers = #tpu.dot_dimension_numbers<[1], [0], [0], [1], [0, 0, 1, 1], [], []>} : vector<16x512xbf16>, vector<512x512xbf16>, vector<16x512xf32> -> vector<16x512xf32>
    %c0_18 = arith.constant 0 : index
    %c0_19 = arith.constant 0 : index
    %29 = vector.load %arg8[%c0_18, %c0_19] : memref<1x512xf32, #tpu.memory_space<vmem>>, vector<1x512xf32>
    %30 = vector.broadcast %29 : vector<1x512xf32> to vector<16x512xf32>
    %31 = arith.addf %28, %30 : vector<16x512xf32>
    %cst_20 = arith.constant 2.000000e-01 : f32
    %32 = vector.broadcast %cst_20 : f32 to vector<16x512xf32>
    %33 = arith.mulf %32, %31 : vector<16x512xf32>
    %34 = arith.maximumf %31, %33 : vector<16x512xf32>
    %c0_21 = arith.constant 0 : index
    %c0_22 = arith.constant 0 : index
    %35 = vector.load %arg9[%c0_21, %c0_22] : memref<1x512xf32, #tpu.memory_space<vmem>>, vector<1x512xf32>
    %36 = vector.broadcast %35 : vector<1x512xf32> to vector<16x512xf32>
    %37 = arith.mulf %34, %36 : vector<16x512xf32>
    %cst_23 = arith.constant dense<0.000000e+00> : vector<16xf32>
    %38 = vector.multi_reduction <add>, %37, %cst_23 [1] : vector<16x512xf32> to vector<16xf32>
    %39 = vector.shape_cast %38 : vector<16xf32> to vector<16x1xf32>
    %c0_24 = arith.constant 0 : index
    %c0_25 = arith.constant 0 : index
    %40 = memref.load %arg10[%c0_24, %c0_25] : memref<1x1xf32, #tpu.memory_space<smem>>
    %41 = vector.broadcast %40 : f32 to vector<16x1xf32>
    %42 = arith.addf %39, %41 : vector<16x1xf32>
    %c0_26 = arith.constant 0 : index
    %c0_27 = arith.constant 0 : index
    %43 = vector.load %arg11[%c0_26, %c0_27] : memref<16x1xf32, #tpu.memory_space<vmem>>, vector<16x1xf32>
    tpu.vector_store %arg11[%c0_26, %c0_27], %42 {strides = array<i32>} : memref<16x1xf32, #tpu.memory_space<vmem>>, vector<16x1xf32>,
    return
  }
  func.func @transform_0(%arg0: i32) -> (i32, i32) {
    %c0_i32 = arith.constant 0 : i32
    %c0_i32_0 = arith.constant 0 : i32
    return %arg0, %c0_i32 : i32, i32
  }
  func.func @transform_1(%arg0: i32) -> (i32, i32) {
    %c0_i32 = arith.constant 0 : i32
    %c0_i32_0 = arith.constant 0 : i32
    return %arg0, %c0_i32 : i32, i32
  }
  func.func @transform_2(%arg0: i32) -> (i32, i32) {
    %c0_i32 = arith.constant 0 : i32
    %c0_i32_0 = arith.constant 0 : i32
    %c0_i32_1 = arith.constant 0 : i32
    return %c0_i32, %c0_i32_0 : i32, i32
  }
  func.func @transform_3(%arg0: i32) -> (i32, i32) {
    %c0_i32 = arith.constant 0 : i32
    %c0_i32_0 = arith.constant 0 : i32
    %c0_i32_1 = arith.constant 0 : i32
    return %c0_i32, %c0_i32_0 : i32, i32
  }
  func.func @transform_4(%arg0: i32) -> (i32, i32) {
    %c0_i32 = arith.constant 0 : i32
    %c0_i32_0 = arith.constant 0 : i32
    %c0_i32_1 = arith.constant 0 : i32
    return %c0_i32, %c0_i32_0 : i32, i32
  }
  func.func @transform_5(%arg0: i32) -> (i32, i32) {
    %c0_i32 = arith.constant 0 : i32
    %c0_i32_0 = arith.constant 0 : i32
    %c0_i32_1 = arith.constant 0 : i32
    return %c0_i32, %c0_i32_0 : i32, i32
  }
  func.func @transform_6(%arg0: i32) -> (i32, i32) {
    %c0_i32 = arith.constant 0 : i32
    %c0_i32_0 = arith.constant 0 : i32
    %c0_i32_1 = arith.constant 0 : i32
    return %c0_i32, %c0_i32_0 : i32, i32
  }
  func.func @transform_7(%arg0: i32) -> (i32, i32) {
    %c0_i32 = arith.constant 0 : i32
    %c0_i32_0 = arith.constant 0 : i32
    %c0_i32_1 = arith.constant 0 : i32
    return %c0_i32, %c0_i32_0 : i32, i32
  }
  func.func @transform_8(%arg0: i32) -> (i32, i32) {
    %c0_i32 = arith.constant 0 : i32
    %c0_i32_0 = arith.constant 0 : i32
    %c0_i32_1 = arith.constant 0 : i32
    return %c0_i32, %c0_i32_0 : i32, i32
  }
  func.func @transform_9(%arg0: i32) -> (i32, i32) {
    %c0_i32 = arith.constant 0 : i32
    %c0_i32_0 = arith.constant 0 : i32
    %c0_i32_1 = arith.constant 0 : i32
    return %c0_i32, %c0_i32_0 : i32, i32
  }
  func.func @transform_10(%arg0: i32) -> (i32, i32) {
    %c0_i32 = arith.constant 0 : i32
    %c0_i32_0 = arith.constant 0 : i32
    return %arg0, %c0_i32 : i32, i32
  }
}

</mosaic_0001>

<llo_original>
// kernel: tpu_custom_call.1
$region0: #{tpu_custom_call.1}
  #allocation0 [shape = 'u32[]', space=smem, size = 0x4, offset = 0x4, fixed_abs, tag = 'smem constant byte address 0x4 - core index']
  #allocation1 [shape = 'u32[144,128]{1,0:T(1,128)}', space=vmem, size = 0x12000, scoped, tag = 'internal scratch']
  #allocation2 [shape = 'f32[1,1]{1,0:T(1,128)S(6)}', space=smem, size = 0x200, scoped, tag = 'scoped memory for tpu_custom_call.1']
  %s0 = inlined_call_operand.hbm [shape: f32[2,1024], index: 0, kind: input, shape index: {}]
  %s1 = inlined_call_operand.vmem [shape: s32[2,1], index: 1, kind: input, shape index: {}]
  %s2 = inlined_call_operand.hbm [shape: bf16[1024,512], index: 2, kind: input, shape index: {}]
  %s3 = inlined_call_operand.hbm [shape: bf16[128,512], index: 3, kind: input, shape index: {}]
  %s4 = inlined_call_operand.hbm [shape: bf16[512,512], index: 4, kind: input, shape index: {}]
  %s5 = inlined_call_operand.vmem [shape: f32[1,512], index: 5, kind: input, shape index: {}]
  %s6 = inlined_call_operand.hbm [shape: bf16[512,512], index: 6, kind: input, shape index: {}]
  %s7 = inlined_call_operand.vmem [shape: f32[1,512], index: 7, kind: input, shape index: {}]
  %s8 = inlined_call_operand.vmem [shape: f32[1,512], index: 8, kind: input, shape index: {}]
  %s9 = inlined_call_operand.<no memory space> [shape: f32[1,1], index: 9, kind: input, shape index: {}]
  %s10 = inlined_call_operand.vmem [shape: f32[2,1], index: 10, kind: output, shape index: {}]
  %s11 = sld [smem:[#allocation0]]
  $region100: #{tpu_custom_call.1} parent=0
    _
  %s13 = ssub.s32 1, %s11
  %s14 = scalar_select 0, %s13, %s11
  %15 = sst [smem:[#allocation2]] %s9
  $region1: #{tpu_custom_call.1} parent=0
    #allocation3 [shape = 'u8[65536]{0}', space=vmem, size = 0x10000, scoped, tag = 'input window, operand 0, single buffered']
    #allocation4 [shape = 's32[1]{0}', space=sflag, size = 0x4, scoped, tag = 'scoped memory for tpu_custom_call.1']
    #allocation5 [shape = 'u8[1048576]{0}', space=vmem, size = 0x100000, scoped, tag = 'input window, operand 2, single buffered']
    #allocation6 [shape = 's32[1]{0}', space=sflag, size = 0x4, scoped, tag = 'scoped memory for tpu_custom_call.1']
    #allocation7 [shape = 'u8[131072]{0}', space=vmem, size = 0x20000, scoped, tag = 'input window, operand 3, single buffered']
    #allocation8 [shape = 'u8[524288]{0}', space=vmem, size = 0x80000, scoped, tag = 'input window, operand 4, single buffered']
    #allocation9 [shape = 's32[1]{0}', space=sflag, size = 0x4, scoped, tag = 'scoped memory for tpu_custom_call.1']
    #allocation10 [shape = 'u8[524288]{0}', space=vmem, size = 0x80000, scoped, tag = 'input window, operand 6, single buffered']
    #allocation11 [shape = 'u8[8192]{0}', space=vmem, size = 0x2000, scoped, tag = 'output window, operand 0, single buffered']
    %16 = vsyncpa [#allocation4], 0
    %17 = vsyncpa [#allocation6], 0
    %18 = vsyncpa [#allocation9], 0
    // Predicated region
    $region2: #{tpu_custom_call.1} parent=1 // pred_check
      _
    $region3: #{tpu_custom_call.1} parent=1 // pred_check_branch
      %20 = sbr.rel (0) target = $region5
    $region4: #{tpu_custom_call.1} parent=1 // pred_region
      %s22 = ssub.s32 2048, 256
      %23 = vsyncadd [#allocation4], %s22
      %s24 = sshll.u32 [#allocation3], 4
      %s25 = int_to_ptr.vmem [resolvable:$true] %s24
      %30 = dma.hbm_to_vmem [thread:$0]  %s0, 256, %s25, [#allocation4], 256, 256, 16
    $region5: #{tpu_custom_call.1} parent=1 // pred_fallthru
      _
    // Predicated region
    $region6: #{tpu_custom_call.1} parent=1 // pred_check
      _
    $region7: #{tpu_custom_call.1} parent=1 // pred_check_branch
      %32 = sbr.rel (0) target = $region9
    $region8: #{tpu_custom_call.1} parent=1 // pred_region
      _
    $region9: #{tpu_custom_call.1} parent=1 // pred_fallthru
      _
    // Predicated region
    $region10: #{tpu_custom_call.1} parent=1 // pred_check
      _
    $region11: #{tpu_custom_call.1} parent=1 // pred_check_branch
      %34 = sbr.rel (0) target = $region13
    $region12: #{tpu_custom_call.1} parent=1 // pred_region
      %s36 = ssub.s32 32768, 32768
      %37 = vsyncadd [#allocation6], %s36
      %s38 = sshll.u32 [#allocation5], 4
      %s39 = int_to_ptr.vmem [resolvable:$true] %s38
      %44 = dma.hbm_to_vmem [thread:$0]  %s2, 32768, %s39, [#allocation6], 256, 256, 16
    $region13: #{tpu_custom_call.1} parent=1 // pred_fallthru
      _
    // Predicated region
    $region14: #{tpu_custom_call.1} parent=1 // pred_check
      _
    $region15: #{tpu_custom_call.1} parent=1 // pred_check_branch
      %46 = sbr.rel (0) target = $region17
    $region16: #{tpu_custom_call.1} parent=1 // pred_region
      %s48 = ssub.s32 4096, 4096
      %49 = vsyncadd [#allocation6], %s48
      %s50 = sshll.u32 [#allocation7], 4
      %s51 = int_to_ptr.vmem [resolvable:$true] %s50
      %56 = dma.hbm_to_vmem [thread:$0]  %s3, 4096, %s51, [#allocation6], 256, 256, 16
    $region17: #{tpu_custom_call.1} parent=1 // pred_fallthru
      _
    // Predicated region
    $region18: #{tpu_custom_call.1} parent=1 // pred_check
      _
    $region19: #{tpu_custom_call.1} parent=1 // pred_check_branch
      %58 = sbr.rel (0) target = $region21
    $region20: #{tpu_custom_call.1} parent=1 // pred_region
      %s60 = ssub.s32 16384, 16384
      %61 = vsyncadd [#allocation9], %s60
      %s62 = sshll.u32 [#allocation8], 4
      %s63 = int_to_ptr.vmem [resolvable:$true] %s62
      %68 = dma.hbm_to_vmem [thread:$0]  %s4, 16384, %s63, [#allocation9], 256, 256, 16
    $region21: #{tpu_custom_call.1} parent=1 // pred_fallthru
      _
    // Predicated region
    $region22: #{tpu_custom_call.1} parent=1 // pred_check
      _
    $region23: #{tpu_custom_call.1} parent=1 // pred_check_branch
      %70 = sbr.rel (0) target = $region25
    $region24: #{tpu_custom_call.1} parent=1 // pred_region
      _
    $region25: #{tpu_custom_call.1} parent=1 // pred_fallthru
      _
    // Predicated region
    $region26: #{tpu_custom_call.1} parent=1 // pred_check
      _
    $region27: #{tpu_custom_call.1} parent=1 // pred_check_branch
      %72 = sbr.rel (0) target = $region29
    $region28: #{tpu_custom_call.1} parent=1 // pred_region
      %s74 = ssub.s32 16384, 16384
      %75 = vsyncadd [#allocation9], %s74
      %s76 = sshll.u32 [#allocation10], 4
      %s77 = int_to_ptr.vmem [resolvable:$true] %s76
      %82 = dma.hbm_to_vmem [thread:$0]  %s6, 16384, %s77, [#allocation9], 256, 256, 16
    $region29: #{tpu_custom_call.1} parent=1 // pred_fallthru
      _
    // Predicated region
    $region30: #{tpu_custom_call.1} parent=1 // pred_check
      _
    $region31: #{tpu_custom_call.1} parent=1 // pred_check_branch
      %84 = sbr.rel (0) target = $region33
    $region32: #{tpu_custom_call.1} parent=1 // pred_region
      _
    $region33: #{tpu_custom_call.1} parent=1 // pred_fallthru
      _
    // Predicated region
    $region34: #{tpu_custom_call.1} parent=1 // pred_check
      _
    $region35: #{tpu_custom_call.1} parent=1 // pred_check_branch
      %86 = sbr.rel (0) target = $region37
    $region36: #{tpu_custom_call.1} parent=1 // pred_region
      _
    $region37: #{tpu_custom_call.1} parent=1 // pred_fallthru
      _
    // Predicated region
    $region38: #{tpu_custom_call.1} parent=1 // pred_check
      _
    $region39: #{tpu_custom_call.1} parent=1 // pred_check_branch
      %88 = sbr.rel (0) target = $region41
    $region40: #{tpu_custom_call.1} parent=1 // pred_region
      _
    $region41: #{tpu_custom_call.1} parent=1 // pred_fallthru
      _
    // Predicated region
    $region42: #{tpu_custom_call.1} parent=1 // pred_check
      _
    $region43: #{tpu_custom_call.1} parent=1 // pred_check_branch
      %90 = sbr.rel (0) target = $region45
    $region44: #{tpu_custom_call.1} parent=1 // pred_region
      %91 = dma.done [#allocation4], 2048
    $region45: #{tpu_custom_call.1} parent=1 // pred_fallthru
      _
    // Predicated region
    $region46: #{tpu_custom_call.1} parent=1 // pred_check
      _
    $region47: #{tpu_custom_call.1} parent=1 // pred_check_branch
      %93 = sbr.rel (0) target = $region49
    $region48: #{tpu_custom_call.1} parent=1 // pred_region
      %94 = dma.done [#allocation6], 32768
    $region49: #{tpu_custom_call.1} parent=1 // pred_fallthru
      _
    // Predicated region
    $region50: #{tpu_custom_call.1} parent=1 // pred_check
      _
    $region51: #{tpu_custom_call.1} parent=1 // pred_check_branch
      %96 = sbr.rel (0) target = $region53
    $region52: #{tpu_custom_call.1} parent=1 // pred_region
      %97 = dma.done [#allocation6], 4096
    $region53: #{tpu_custom_call.1} parent=1 // pred_fallthru
      _
    // Predicated region
    $region54: #{tpu_custom_call.1} parent=1 // pred_check
      _
    $region55: #{tpu_custom_call.1} parent=1 // pred_check_branch
      %99 = sbr.rel (0) target = $region57
    $region56: #{tpu_custom_call.1} parent=1 // pred_region
      %100 = dma.done [#allocation9], 16384
    $region57: #{tpu_custom_call.1} parent=1 // pred_fallthru
      _
    // Predicated region
    $region58: #{tpu_custom_call.1} parent=1 // pred_check
      _
    $region59: #{tpu_custom_call.1} parent=1 // pred_check_branch
      %102 = sbr.rel (0) target = $region61
    $region60: #{tpu_custom_call.1} parent=1 // pred_region
      %103 = dma.done [#allocation9], 16384
    $region61: #{tpu_custom_call.1} parent=1 // pred_fallthru
      _
    %v105 = vld [vmem:[#allocation3] sm:$0xff]
    %v106 = vld [vmem:[#allocation3 + $0x8] sm:$0xff]
    %v107 = vld [vmem:[#allocation3 + $0x10] sm:$0xff]
    %v108 = vld [vmem:[#allocation3 + $0x18] sm:$0xff]
    %v109 = vld [vmem:[#allocation3 + $0x20] sm:$0xff]
    %v110 = vld [vmem:[#allocation3 + $0x28] sm:$0xff]
    %v111 = vld [vmem:[#allocation3 + $0x30] sm:$0xff]
    %v112 = vld [vmem:[#allocation3 + $0x38] sm:$0xff]
    %v113 = vld [vmem:[#allocation3 + $0x40] sm:$0xff]
    %v114 = vld [vmem:[#allocation3 + $0x48] sm:$0xff]
    %v115 = vld [vmem:[#allocation3 + $0x50] sm:$0xff]
    %v116 = vld [vmem:[#allocation3 + $0x58] sm:$0xff]
    %v117 = vld [vmem:[#allocation3 + $0x60] sm:$0xff]
    %v118 = vld [vmem:[#allocation3 + $0x68] sm:$0xff]
    %v119 = vld [vmem:[#allocation3 + $0x70] sm:$0xff]
    %v120 = vld [vmem:[#allocation3 + $0x78] sm:$0xff]
    %v137 = vcombine.low %v105, %v107
    %v138 = vcombine.high %v105, %v107
    %v139 = vcombine.low %v109, %v111
    %v140 = vcombine.high %v109, %v111
    %v142 = vunpack.c.l.s4 1983009808
    %v143 = vunpack.c.0.s8 %v142
    %v144 = vlaneseq
    %v145 = vshrl.u32 %v144, 7
    %v146 = vsub.s32 %v143, %v145
    %v147 = vrot.slane %v137, %v146
    %v149 = vunpack.c.l.s4 1983009808
    %v150 = vunpack.c.0.s8 %v149
    %v151 = vlaneseq
    %v152 = vshrl.u32 %v151, 7
    %v153 = vsub.s32 %v150, %v152
    %v154 = vrot.slane %v138, %v153
    %v156 = vunpack.c.l.s4 1983009808
    %v157 = vunpack.c.0.s8 %v156
    %v158 = vlaneseq
    %v159 = vshrl.u32 %v158, 7
    %v160 = vsub.s32 %v157, %v159
    %v161 = vrot.slane %v139, %v160
    %v163 = vunpack.c.l.s4 1983009808
    %v164 = vunpack.c.0.s8 %v163
    %v165 = vlaneseq
    %v166 = vshrl.u32 %v165, 7
    %v167 = vsub.s32 %v164, %v166
    %v168 = vrot.slane %v140, %v167
    %v169 = vcombine.low %v147, %v161
    %v170 = vcombine.high %v147, %v161
    %v171 = vcombine.low %v154, %v168
    %v172 = vcombine.high %v154, %v168
    %v173 = vcombine.low %v106, %v108
    %v174 = vcombine.high %v106, %v108
    %v175 = vcombine.low %v110, %v112
    %v176 = vcombine.high %v110, %v112
    %v178 = vunpack.c.l.s4 1983009808
    %v179 = vunpack.c.0.s8 %v178
    %v180 = vlaneseq
    %v181 = vshrl.u32 %v180, 7
    %v182 = vsub.s32 %v179, %v181
    %v183 = vrot.slane %v173, %v182
    %v185 = vunpack.c.l.s4 1983009808
    %v186 = vunpack.c.0.s8 %v185
    %v187 = vlaneseq
    %v188 = vshrl.u32 %v187, 7
    %v189 = vsub.s32 %v186, %v188
    %v190 = vrot.slane %v174, %v189
    %v192 = vunpack.c.l.s4 1983009808
    %v193 = vunpack.c.0.s8 %v192
    %v194 = vlaneseq
    %v195 = vshrl.u32 %v194, 7
    %v196 = vsub.s32 %v193, %v195
    %v197 = vrot.slane %v175, %v196
    %v199 = vunpack.c.l.s4 1983009808
    %v200 = vunpack.c.0.s8 %v199
    %v201 = vlaneseq
    %v202 = vshrl.u32 %v201, 7
    %v203 = vsub.s32 %v200, %v202
    %v204 = vrot.slane %v176, %v203
    %v205 = vcombine.low %v183, %v197
    %v206 = vcombine.high %v183, %v197
    %v207 = vcombine.low %v190, %v204
    %v208 = vcombine.high %v190, %v204
    %v209 = vcombine.low %v113, %v115
    %v210 = vcombine.high %v113, %v115
    %v211 = vcombine.low %v117, %v119
    %v212 = vcombine.high %v117, %v119
    %v214 = vunpack.c.l.s4 1983009808
    %v215 = vunpack.c.0.s8 %v214
    %v216 = vlaneseq
    %v217 = vshrl.u32 %v216, 7
    %v218 = vsub.s32 %v215, %v217
    %v219 = vrot.slane %v209, %v218
    %v221 = vunpack.c.l.s4 1983009808
    %v222 = vunpack.c.0.s8 %v221
    %v223 = vlaneseq
    %v224 = vshrl.u32 %v223, 7
    %v225 = vsub.s32 %v222, %v224
    %v226 = vrot.slane %v210, %v225
    %v228 = vunpack.c.l.s4 1983009808
    %v229 = vunpack.c.0.s8 %v228
    %v230 = vlaneseq
    %v231 = vshrl.u32 %v230, 7
    %v232 = vsub.s32 %v229, %v231
    %v233 = vrot.slane %v211, %v232
    %v235 = vunpack.c.l.s4 1983009808
    %v236 = vunpack.c.0.s8 %v235
    %v237 = vlaneseq
    %v238 = vshrl.u32 %v237, 7
    %v239 = vsub.s32 %v236, %v238
    %v240 = vrot.slane %v212, %v239
    %v241 = vcombine.low %v219, %v233
    %v242 = vcombine.high %v219, %v233
    %v243 = vcombine.low %v226, %v240
    %v244 = vcombine.high %v226, %v240
    %v245 = vcombine.low %v114, %v116
    %v246 = vcombine.high %v114, %v116
    %v247 = vcombine.low %v118, %v120
    %v248 = vcombine.high %v118, %v120
    %v250 = vunpack.c.l.s4 1983009808
    %v251 = vunpack.c.0.s8 %v250
    %v252 = vlaneseq
    %v253 = vshrl.u32 %v252, 7
    %v254 = vsub.s32 %v251, %v253
    %v255 = vrot.slane %v245, %v254
    %v257 = vunpack.c.l.s4 1983009808
    %v258 = vunpack.c.0.s8 %v257
    %v259 = vlaneseq
    %v260 = vshrl.u32 %v259, 7
    %v261 = vsub.s32 %v258, %v260
    %v262 = vrot.slane %v246, %v261
    %v264 = vunpack.c.l.s4 1983009808
    %v265 = vunpack.c.0.s8 %v264
    %v266 = vlaneseq
    %v267 = vshrl.u32 %v266, 7
    %v268 = vsub.s32 %v265, %v267
    %v269 = vrot.slane %v247, %v268
    %v271 = vunpack.c.l.s4 1983009808
    %v272 = vunpack.c.0.s8 %v271
    %v273 = vlaneseq
    %v274 = vshrl.u32 %v273, 7
    %v275 = vsub.s32 %v272, %v274
    %v276 = vrot.slane %v248, %v275
    %v277 = vcombine.low %v255, %v269
    %v278 = vcombine.high %v255, %v269
    %v279 = vcombine.low %v262, %v276
    %v280 = vcombine.high %v262, %v276
    %v297 = vpack.c.bf16 %v241, %v169
    %v298 = vpack.c.bf16 %v242, %v170
    %v299 = vpack.c.bf16 %v243, %v171
    %v300 = vpack.c.bf16 %v244, %v172
    %v301 = vpack.c.bf16 %v277, %v205
    %v302 = vpack.c.bf16 %v278, %v206
    %v303 = vpack.c.bf16 %v279, %v207
    %v304 = vpack.c.bf16 %v280, %v208
    %v305 = vlaneseq
    %v306 = vand.u32 %v305, 127
    %v307 = vld [vmem:[%s1] sm:$0xff]
    %v308 = vld [vmem:[%s1 + $0x8] sm:$0xff]
    %309 = vset.pattern.permute.xlu0 0
    %310 = vperm.xlu0 %309, %v307
    %v311 = vpop.permute.xlu0 %310
    %312 = vset.pattern.permute.xlu0 0
    %313 = vperm.xlu0 %312, %v308
    %v314 = vpop.permute.xlu0 %313
    %vm315 = vcmp.eq.s32.totalorder %v311, %v306
    %vm316 = vcmp.eq.s32.totalorder %v314, %v306
    %v317 = vsel %vm315, 1, 0
    %v318 = vsel %vm316, 1, 0
    %v319 = vcvt.s32.f32 %v317
    %v320 = vcvt.s32.f32 %v318
    %v321 = vpack.c.bf16 %v320, %v319
    %v322 = vld [vmem:[#allocation5] sm:$0xff]
    %v323 = vld [vmem:[#allocation5 + $0x8] sm:$0xff]
    %v324 = vld [vmem:[#allocation5 + $0x10] sm:$0xff]
    %v325 = vld [vmem:[#allocation5 + $0x18] sm:$0xff]
    %v326 = vld [vmem:[#allocation5 + $0x20] sm:$0xff]
    %v327 = vld [vmem:[#allocation5 + $0x28] sm:$0xff]
    %v328 = vld [vmem:[#allocation5 + $0x30] sm:$0xff]
    %v329 = vld [vmem:[#allocation5 + $0x38] sm:$0xff]
    %v330 = vld [vmem:[#allocation5 + $0x40] sm:$0xff]
    %v331 = vld [vmem:[#allocation5 + $0x48] sm:$0xff]
    %v332 = vld [vmem:[#allocation5 + $0x50] sm:$0xff]
    %v333 = vld [vmem:[#allocation5 + $0x58] sm:$0xff]
    %v334 = vld [vmem:[#allocation5 + $0x60] sm:$0xff]
    %v335 = vld [vmem:[#allocation5 + $0x68] sm:$0xff]
    %v336 = vld [vmem:[#allocation5 + $0x70] sm:$0xff]
    %v337 = vld [vmem:[#allocation5 + $0x78] sm:$0xff]
    %v338 = vld [vmem:[#allocation5 + $0x80] sm:$0xff]
    %v339 = vld [vmem:[#allocation5 + $0x88] sm:$0xff]
    %v340 = vld [vmem:[#allocation5 + $0x90] sm:$0xff]
    %v341 = vld [vmem:[#allocation5 + $0x98] sm:$0xff]
    %v342 = vld [vmem:[#allocation5 + $0xa0] sm:$0xff]
    %v343 = vld [vmem:[#allocation5 + $0xa8] sm:$0xff]
    %v344 = vld [vmem:[#allocation5 + $0xb0] sm:$0xff]
    %v345 = vld [vmem:[#allocation5 + $0xb8] sm:$0xff]
    %v346 = vld [vmem:[#allocation5 + $0xc0] sm:$0xff]
    %v347 = vld [vmem:[#allocation5 + $0xc8] sm:$0xff]
    %v348 = vld [vmem:[#allocation5 + $0xd0] sm:$0xff]
    %v349 = vld [vmem:[#allocation5 + $0xd8] sm:$0xff]
    %v350 = vld [vmem:[#allocation5 + $0xe0] sm:$0xff]
    %v351 = vld [vmem:[#allocation5 + $0xe8] sm:$0xff]
    %v352 = vld [vmem:[#allocation5 + $0xf0] sm:$0xff]
    %v353 = vld [vmem:[#allocation5 + $0xf8] sm:$0xff]
    %v354 = vld [vmem:[#allocation5 + $0x100] sm:$0xff]
    %v355 = vld [vmem:[#allocation5 + $0x108] sm:$0xff]
    %v356 = vld [vmem:[#allocation5 + $0x110] sm:$0xff]
    %v357 = vld [vmem:[#allocation5 + $0x118] sm:$0xff]
    %v358 = vld [vmem:[#allocation5 + $0x120] sm:$0xff]
    %v359 = vld [vmem:[#allocation5 + $0x128] sm:$0xff]
    %v360 = vld [vmem:[#allocation5 + $0x130] sm:$0xff]
    %v361 = vld [vmem:[#allocation5 + $0x138] sm:$0xff]
    %v362 = vld [vmem:[#allocation5 + $0x140] sm:$0xff]
    %v363 = vld [vmem:[#allocation5 + $0x148] sm:$0xff]
    %v364 = vld [vmem:[#allocation5 + $0x150] sm:$0xff]
    %v365 = vld [vmem:[#allocation5 + $0x158] sm:$0xff]
    %v366 = vld [vmem:[#allocation5 + $0x160] sm:$0xff]
    %v367 = vld [vmem:[#allocation5 + $0x168] sm:$0xff]
    %v368 = vld [vmem:[#allocation5 + $0x170] sm:$0xff]
    %v369 = vld [vmem:[#allocation5 + $0x178] sm:$0xff]
    %v370 = vld [vmem:[#allocation5 + $0x180] sm:$0xff]
    %v371 = vld [vmem:[#allocation5 + $0x188] sm:$0xff]
    %v372 = vld [vmem:[#allocation5 + $0x190] sm:$0xff]
    %v373 = vld [vmem:[#allocation5 + $0x198] sm:$0xff]
    %v374 = vld [vmem:[#allocation5 + $0x1a0] sm:$0xff]
    %v375 = vld [vmem:[#allocation5 + $0x1a8] sm:$0xff]
    %v376 = vld [vmem:[#allocation5 + $0x1b0] sm:$0xff]
    %v377 = vld [vmem:[#allocation5 + $0x1b8] sm:$0xff]
    %v378 = vld [vmem:[#allocation5 + $0x1c0] sm:$0xff]
    %v379 = vld [vmem:[#allocation5 + $0x1c8] sm:$0xff]
    %v380 = vld [vmem:[#allocation5 + $0x1d0] sm:$0xff]
    %v381 = vld [vmem:[#allocation5 + $0x1d8] sm:$0xff]
    %v382 = vld [vmem:[#allocation5 + $0x1e0] sm:$0xff]
    %v383 = vld [vmem:[#allocation5 + $0x1e8] sm:$0xff]
    %v384 = vld [vmem:[#allocation5 + $0x1f0] sm:$0xff]
    %v385 = vld [vmem:[#allocation5 + $0x1f8] sm:$0xff]
    %v386 = vld [vmem:[#allocation5 + $0x200] sm:$0xff]
    %v387 = vld [vmem:[#allocation5 + $0x208] sm:$0xff]
    %v388 = vld [vmem:[#allocation5 + $0x210] sm:$0xff]
    %v389 = vld [vmem:[#allocation5 + $0x218] sm:$0xff]
    %v390 = vld [vmem:[#allocation5 + $0x220] sm:$0xff]
    %v391 = vld [vmem:[#allocation5 + $0x228] sm:$0xff]
    %v392 = vld [vmem:[#allocation5 + $0x230] sm:$0xff]
    %v393 = vld [vmem:[#allocation5 + $0x238] sm:$0xff]
    %v394 = vld [vmem:[#allocation5 + $0x240] sm:$0xff]
    %v395 = vld [vmem:[#allocation5 + $0x248] sm:$0xff]
    %v396 = vld [vmem:[#allocation5 + $0x250] sm:$0xff]
    %v397 = vld [vmem:[#allocation5 + $0x258] sm:$0xff]
    %v398 = vld [vmem:[#allocation5 + $0x260] sm:$0xff]
    %v399 = vld [vmem:[#allocation5 + $0x268] sm:$0xff]
    %v400 = vld [vmem:[#allocation5 + $0x270] sm:$0xff]
    %v401 = vld [vmem:[#allocation5 + $0x278] sm:$0xff]
    %v402 = vld [vmem:[#allocation5 + $0x280] sm:$0xff]
    %v403 = vld [vmem:[#allocation5 + $0x288] sm:$0xff]
    %v404 = vld [vmem:[#allocation5 + $0x290] sm:$0xff]
    %v405 = vld [vmem:[#allocation5 + $0x298] sm:$0xff]
    %v406 = vld [vmem:[#allocation5 + $0x2a0] sm:$0xff]
    %v407 = vld [vmem:[#allocation5 + $0x2a8] sm:$0xff]
    %v408 = vld [vmem:[#allocation5 + $0x2b0] sm:$0xff]
    %v409 = vld [vmem:[#allocation5 + $0x2b8] sm:$0xff]
    %v410 = vld [vmem:[#allocation5 + $0x2c0] sm:$0xff]
    %v411 = vld [vmem:[#allocation5 + $0x2c8] sm:$0xff]
    %v412 = vld [vmem:[#allocation5 + $0x2d0] sm:$0xff]
    %v413 = vld [vmem:[#allocation5 + $0x2d8] sm:$0xff]
    %v414 = vld [vmem:[#allocation5 + $0x2e0] sm:$0xff]
    %v415 = vld [vmem:[#allocation5 + $0x2e8] sm:$0xff]
    %v416 = vld [vmem:[#allocation5 + $0x2f0] sm:$0xff]
    %v417 = vld [vmem:[#allocation5 + $0x2f8] sm:$0xff]
    %v418 = vld [vmem:[#allocation5 + $0x300] sm:$0xff]
    %v419 = vld [vmem:[#allocation5 + $0x308] sm:$0xff]
    %v420 = vld [vmem:[#allocation5 + $0x310] sm:$0xff]
    %v421 = vld [vmem:[#allocation5 + $0x318] sm:$0xff]
    %v422 = vld [vmem:[#allocation5 + $0x320] sm:$0xff]
    %v423 = vld [vmem:[#allocation5 + $0x328] sm:$0xff]
    %v424 = vld [vmem:[#allocation5 + $0x330] sm:$0xff]
    %v425 = vld [vmem:[#allocation5 + $0x338] sm:$0xff]
    %v426 = vld [vmem:[#allocation5 + $0x340] sm:$0xff]
    %v427 = vld [vmem:[#allocation5 + $0x348] sm:$0xff]
    %v428 = vld [vmem:[#allocation5 + $0x350] sm:$0xff]
    %v429 = vld [vmem:[#allocation5 + $0x358] sm:$0xff]
    %v430 = vld [vmem:[#allocation5 + $0x360] sm:$0xff]
    %v431 = vld [vmem:[#allocation5 + $0x368] sm:$0xff]
    %v432 = vld [vmem:[#allocation5 + $0x370] sm:$0xff]
    %v433 = vld [vmem:[#allocation5 + $0x378] sm:$0xff]
    %v434 = vld [vmem:[#allocation5 + $0x380] sm:$0xff]
    %v435 = vld [vmem:[#allocation5 + $0x388] sm:$0xff]
    %v436 = vld [vmem:[#allocation5 + $0x390] sm:$0xff]
    %v437 = vld [vmem:[#allocation5 + $0x398] sm:$0xff]
    %v438 = vld [vmem:[#allocation5 + $0x3a0] sm:$0xff]
    %v439 = vld [vmem:[#allocation5 + $0x3a8] sm:$0xff]
    %v440 = vld [vmem:[#allocation5 + $0x3b0] sm:$0xff]
    %v441 = vld [vmem:[#allocation5 + $0x3b8] sm:$0xff]
    %v442 = vld [vmem:[#allocation5 + $0x3c0] sm:$0xff]
    %v443 = vld [vmem:[#allocation5 + $0x3c8] sm:$0xff]
    %v444 = vld [vmem:[#allocation5 + $0x3d0] sm:$0xff]
    %v445 = vld [vmem:[#allocation5 + $0x3d8] sm:$0xff]
    %v446 = vld [vmem:[#allocation5 + $0x3e0] sm:$0xff]
    %v447 = vld [vmem:[#allocation5 + $0x3e8] sm:$0xff]
    %v448 = vld [vmem:[#allocation5 + $0x3f0] sm:$0xff]
    %v449 = vld [vmem:[#allocation5 + $0x3f8] sm:$0xff]
    %v450 = vld [vmem:[#allocation5 + $0x400] sm:$0xff]
    %v451 = vld [vmem:[#allocation5 + $0x408] sm:$0xff]
    %v452 = vld [vmem:[#allocation5 + $0x410] sm:$0xff]
    %v453 = vld [vmem:[#allocation5 + $0x418] sm:$0xff]
    %v454 = vld [vmem:[#allocation5 + $0x420] sm:$0xff]
    %v455 = vld [vmem:[#allocation5 + $0x428] sm:$0xff]
    %v456 = vld [vmem:[#allocation5 + $0x430] sm:$0xff]
    %v457 = vld [vmem:[#allocation5 + $0x438] sm:$0xff]
    %v458 = vld [vmem:[#allocation5 + $0x440] sm:$0xff]
    %v459 = vld [vmem:[#allocation5 + $0x448] sm:$0xff]
    %v460 = vld [vmem:[#allocation5 + $0x450] sm:$0xff]
    %v461 = vld [vmem:[#allocation5 + $0x458] sm:$0xff]
    %v462 = vld [vmem:[#allocation5 + $0x460] sm:$0xff]
    %v463 = vld [vmem:[#allocation5 + $0x468] sm:$0xff]
    %v464 = vld [vmem:[#allocation5 + $0x470] sm:$0xff]
    %v465 = vld [vmem:[#allocation5 + $0x478] sm:$0xff]
    %v466 = vld [vmem:[#allocation5 + $0x480] sm:$0xff]
    %v467 = vld [vmem:[#allocation5 + $0x488] sm:$0xff]
    %v468 = vld [vmem:[#allocation5 + $0x490] sm:$0xff]
    %v469 = vld [vmem:[#allocation5 + $0x498] sm:$0xff]
    %v470 = vld [vmem:[#allocation5 + $0x4a0] sm:$0xff]
    %v471 = vld [vmem:[#allocation5 + $0x4a8] sm:$0xff]
    %v472 = vld [vmem:[#allocation5 + $0x4b0] sm:$0xff]
    %v473 = vld [vmem:[#allocation5 + $0x4b8] sm:$0xff]
    %v474 = vld [vmem:[#allocation5 + $0x4c0] sm:$0xff]
    %v475 = vld [vmem:[#allocation5 + $0x4c8] sm:$0xff]
    %v476 = vld [vmem:[#allocation5 + $0x4d0] sm:$0xff]
    %v477 = vld [vmem:[#allocation5 + $0x4d8] sm:$0xff]
    %v478 = vld [vmem:[#allocation5 + $0x4e0] sm:$0xff]
    %v479 = vld [vmem:[#allocation5 + $0x4e8] sm:$0xff]
    %v480 = vld [vmem:[#allocation5 + $0x4f0] sm:$0xff]
    %v481 = vld [vmem:[#allocation5 + $0x4f8] sm:$0xff]
    %v482 = vld [vmem:[#allocation5 + $0x500] sm:$0xff]
    %v483 = vld [vmem:[#allocation5 + $0x508] sm:$0xff]
    %v484 = vld [vmem:[#allocation5 + $0x510] sm:$0xff]
    %v485 = vld [vmem:[#allocation5 + $0x518] sm:$0xff]
    %v486 = vld [vmem:[#allocation5 + $0x520] sm:$0xff]
    %v487 = vld [vmem:[#allocation5 + $0x528] sm:$0xff]
    %v488 = vld [vmem:[#allocation5 + $0x530] sm:$0xff]
    %v489 = vld [vmem:[#allocation5 + $0x538] sm:$0xff]
    %v490 = vld [vmem:[#allocation5 + $0x540] sm:$0xff]
    %v491 = vld [vmem:[#allocation5 + $0x548] sm:$0xff]
    %v492 = vld [vmem:[#allocation5 + $0x550] sm:$0xff]
    %v493 = vld [vmem:[#allocation5 + $0x558] sm:$0xff]
    %v494 = vld [vmem:[#allocation5 + $0x560] sm:$0xff]
    %v495 = vld [vmem:[#allocation5 + $0x568] sm:$0xff]
    %v496 = vld [vmem:[#allocation5 + $0x570] sm:$0xff]
    %v497 = vld [vmem:[#allocation5 + $0x578] sm:$0xff]
    %v498 = vld [vmem:[#allocation5 + $0x580] sm:$0xff]
    %v499 = vld [vmem:[#allocation5 + $0x588] sm:$0xff]
    %v500 = vld [vmem:[#allocation5 + $0x590] sm:$0xff]
    %v501 = vld [vmem:[#allocation5 + $0x598] sm:$0xff]
    %v502 = vld [vmem:[#allocation5 + $0x5a0] sm:$0xff]
    %v503 = vld [vmem:[#allocation5 + $0x5a8] sm:$0xff]
    %v504 = vld [vmem:[#allocation5 + $0x5b0] sm:$0xff]
    %v505 = vld [vmem:[#allocation5 + $0x5b8] sm:$0xff]
    %v506 = vld [vmem:[#allocation5 + $0x5c0] sm:$0xff]
    %v507 = vld [vmem:[#allocation5 + $0x5c8] sm:$0xff]
    %v508 = vld [vmem:[#allocation5 + $0x5d0] sm:$0xff]
    %v509 = vld [vmem:[#allocation5 + $0x5d8] sm:$0xff]
    %v510 = vld [vmem:[#allocation5 + $0x5e0] sm:$0xff]
    %v511 = vld [vmem:[#allocation5 + $0x5e8] sm:$0xff]
    %v512 = vld [vmem:[#allocation5 + $0x5f0] sm:$0xff]
    %v513 = vld [vmem:[#allocation5 + $0x5f8] sm:$0xff]
    %v514 = vld [vmem:[#allocation5 + $0x600] sm:$0xff]
    %v515 = vld [vmem:[#allocation5 + $0x608] sm:$0xff]
    %v516 = vld [vmem:[#allocation5 + $0x610] sm:$0xff]
    %v517 = vld [vmem:[#allocation5 + $0x618] sm:$0xff]
    %v518 = vld [vmem:[#allocation5 + $0x620] sm:$0xff]
    %v519 = vld [vmem:[#allocation5 + $0x628] sm:$0xff]
    %v520 = vld [vmem:[#allocation5 + $0x630] sm:$0xff]
    %v521 = vld [vmem:[#allocation5 + $0x638] sm:$0xff]
    %v522 = vld [vmem:[#allocation5 + $0x640] sm:$0xff]
    %v523 = vld [vmem:[#allocation5 + $0x648] sm:$0xff]
    %v524 = vld [vmem:[#allocation5 + $0x650] sm:$0xff]
    %v525 = vld [vmem:[#allocation5 + $0x658] sm:$0xff]
    %v526 = vld [vmem:[#allocation5 + $0x660] sm:$0xff]
    %v527 = vld [vmem:[#allocation5 + $0x668] sm:$0xff]
    %v528 = vld [vmem:[#allocation5 + $0x670] sm:$0xff]
    %v529 = vld [vmem:[#allocation5 + $0x678] sm:$0xff]
    %v530 = vld [vmem:[#allocation5 + $0x680] sm:$0xff]
    %v531 = vld [vmem:[#allocation5 + $0x688] sm:$0xff]
    %v532 = vld [vmem:[#allocation5 + $0x690] sm:$0xff]
    %v533 = vld [vmem:[#allocation5 + $0x698] sm:$0xff]
    %v534 = vld [vmem:[#allocation5 + $0x6a0] sm:$0xff]
    %v535 = vld [vmem:[#allocation5 + $0x6a8] sm:$0xff]
    %v536 = vld [vmem:[#allocation5 + $0x6b0] sm:$0xff]
    %v537 = vld [vmem:[#allocation5 + $0x6b8] sm:$0xff]
    %v538 = vld [vmem:[#allocation5 + $0x6c0] sm:$0xff]
    %v539 = vld [vmem:[#allocation5 + $0x6c8] sm:$0xff]
    %v540 = vld [vmem:[#allocation5 + $0x6d0] sm:$0xff]
    %v541 = vld [vmem:[#allocation5 + $0x6d8] sm:$0xff]
    %v542 = vld [vmem:[#allocation5 + $0x6e0] sm:$0xff]
    %v543 = vld [vmem:[#allocation5 + $0x6e8] sm:$0xff]
    %v544 = vld [vmem:[#allocation5 + $0x6f0] sm:$0xff]
    %v545 = vld [vmem:[#allocation5 + $0x6f8] sm:$0xff]
    %v546 = vld [vmem:[#allocation5 + $0x700] sm:$0xff]
    %v547 = vld [vmem:[#allocation5 + $0x708] sm:$0xff]
    %v548 = vld [vmem:[#allocation5 + $0x710] sm:$0xff]
    %v549 = vld [vmem:[#allocation5 + $0x718] sm:$0xff]
    %v550 = vld [vmem:[#allocation5 + $0x720] sm:$0xff]
    %v551 = vld [vmem:[#allocation5 + $0x728] sm:$0xff]
    %v552 = vld [vmem:[#allocation5 + $0x730] sm:$0xff]
    %v553 = vld [vmem:[#allocation5 + $0x738] sm:$0xff]
    %v554 = vld [vmem:[#allocation5 + $0x740] sm:$0xff]
    %v555 = vld [vmem:[#allocation5 + $0x748] sm:$0xff]
    %v556 = vld [vmem:[#allocation5 + $0x750] sm:$0xff]
    %v557 = vld [vmem:[#allocation5 + $0x758] sm:$0xff]
    %v558 = vld [vmem:[#allocation5 + $0x760] sm:$0xff]
    %v559 = vld [vmem:[#allocation5 + $0x768] sm:$0xff]
    %v560 = vld [vmem:[#allocation5 + $0x770] sm:$0xff]
    %v561 = vld [vmem:[#allocation5 + $0x778] sm:$0xff]
    %v562 = vld [vmem:[#allocation5 + $0x780] sm:$0xff]
    %v563 = vld [vmem:[#allocation5 + $0x788] sm:$0xff]
    %v564 = vld [vmem:[#allocation5 + $0x790] sm:$0xff]
    %v565 = vld [vmem:[#allocation5 + $0x798] sm:$0xff]
    %v566 = vld [vmem:[#allocation5 + $0x7a0] sm:$0xff]
    %v567 = vld [vmem:[#allocation5 + $0x7a8] sm:$0xff]
    %v568 = vld [vmem:[#allocation5 + $0x7b0] sm:$0xff]
    %v569 = vld [vmem:[#allocation5 + $0x7b8] sm:$0xff]
    %v570 = vld [vmem:[#allocation5 + $0x7c0] sm:$0xff]
    %v571 = vld [vmem:[#allocation5 + $0x7c8] sm:$0xff]
    %v572 = vld [vmem:[#allocation5 + $0x7d0] sm:$0xff]
    %v573 = vld [vmem:[#allocation5 + $0x7d8] sm:$0xff]
    %v574 = vld [vmem:[#allocation5 + $0x7e0] sm:$0xff]
    %v575 = vld [vmem:[#allocation5 + $0x7e8] sm:$0xff]
    %v576 = vld [vmem:[#allocation5 + $0x7f0] sm:$0xff]
    %v577 = vld [vmem:[#allocation5 + $0x7f8] sm:$0xff]
    %v578 = vld [vmem:[#allocation7] sm:$0xff]
    %v579 = vld [vmem:[#allocation7 + $0x8] sm:$0xff]
    %v580 = vld [vmem:[#allocation7 + $0x10] sm:$0xff]
    %v581 = vld [vmem:[#allocation7 + $0x18] sm:$0xff]
    %v582 = vld [vmem:[#allocation7 + $0x20] sm:$0xff]
    %v583 = vld [vmem:[#allocation7 + $0x28] sm:$0xff]
    %v584 = vld [vmem:[#allocation7 + $0x30] sm:$0xff]
    %v585 = vld [vmem:[#allocation7 + $0x38] sm:$0xff]
    %v586 = vld [vmem:[#allocation7 + $0x40] sm:$0xff]
    %v587 = vld [vmem:[#allocation7 + $0x48] sm:$0xff]
    %v588 = vld [vmem:[#allocation7 + $0x50] sm:$0xff]
    %v589 = vld [vmem:[#allocation7 + $0x58] sm:$0xff]
    %v590 = vld [vmem:[#allocation7 + $0x60] sm:$0xff]
    %v591 = vld [vmem:[#allocation7 + $0x68] sm:$0xff]
    %v592 = vld [vmem:[#allocation7 + $0x70] sm:$0xff]
    %v593 = vld [vmem:[#allocation7 + $0x78] sm:$0xff]
    %v594 = vld [vmem:[#allocation7 + $0x80] sm:$0xff]
    %v595 = vld [vmem:[#allocation7 + $0x88] sm:$0xff]
    %v596 = vld [vmem:[#allocation7 + $0x90] sm:$0xff]
    %v597 = vld [vmem:[#allocation7 + $0x98] sm:$0xff]
    %v598 = vld [vmem:[#allocation7 + $0xa0] sm:$0xff]
    %v599 = vld [vmem:[#allocation7 + $0xa8] sm:$0xff]
    %v600 = vld [vmem:[#allocation7 + $0xb0] sm:$0xff]
    %v601 = vld [vmem:[#allocation7 + $0xb8] sm:$0xff]
    %v602 = vld [vmem:[#allocation7 + $0xc0] sm:$0xff]
    %v603 = vld [vmem:[#allocation7 + $0xc8] sm:$0xff]
    %v604 = vld [vmem:[#allocation7 + $0xd0] sm:$0xff]
    %v605 = vld [vmem:[#allocation7 + $0xd8] sm:$0xff]
    %v606 = vld [vmem:[#allocation7 + $0xe0] sm:$0xff]
    %v607 = vld [vmem:[#allocation7 + $0xe8] sm:$0xff]
    %v608 = vld [vmem:[#allocation7 + $0xf0] sm:$0xff]
    %v609 = vld [vmem:[#allocation7 + $0xf8] sm:$0xff]
    %v642 = vunpack.c.l.b16 %v578
    %v643 = vunpack.c.h.b16 %v578
    %v644 = vunpack.c.l.b16 %v579
    %v645 = vunpack.c.h.b16 %v579
    %v646 = vunpack.c.l.b16 %v580
    %v647 = vunpack.c.h.b16 %v580
    %v648 = vunpack.c.l.b16 %v581
    %v649 = vunpack.c.h.b16 %v581
    %v650 = vunpack.c.l.b16 %v582
    %v651 = vunpack.c.h.b16 %v582
    %v652 = vunpack.c.l.b16 %v583
    %v653 = vunpack.c.h.b16 %v583
    %v654 = vunpack.c.l.b16 %v584
    %v655 = vunpack.c.h.b16 %v584
    %v656 = vunpack.c.l.b16 %v585
    %v657 = vunpack.c.h.b16 %v585
    %v658 = vunpack.c.l.b16 %v586
    %v659 = vunpack.c.h.b16 %v586
    %v660 = vunpack.c.l.b16 %v587
    %v661 = vunpack.c.h.b16 %v587
    %v662 = vunpack.c.l.b16 %v588
    %v663 = vunpack.c.h.b16 %v588
    %v664 = vunpack.c.l.b16 %v589
    %v665 = vunpack.c.h.b16 %v589
    %v666 = vunpack.c.l.b16 %v590
    %v667 = vunpack.c.h.b16 %v590
    %v668 = vunpack.c.l.b16 %v591
    %v669 = vunpack.c.h.b16 %v591
    %v670 = vunpack.c.l.b16 %v592
    %v671 = vunpack.c.h.b16 %v592
    %v672 = vunpack.c.l.b16 %v593
    %v673 = vunpack.c.h.b16 %v593
    %v674 = vunpack.c.l.b16 %v594
    %v675 = vunpack.c.h.b16 %v594
    %v676 = vunpack.c.l.b16 %v595
    %v677 = vunpack.c.h.b16 %v595
    %v678 = vunpack.c.l.b16 %v596
    %v679 = vunpack.c.h.b16 %v596
    %v680 = vunpack.c.l.b16 %v597
    %v681 = vunpack.c.h.b16 %v597
    %v682 = vunpack.c.l.b16 %v598
    %v683 = vunpack.c.h.b16 %v598
    %v684 = vunpack.c.l.b16 %v599
    %v685 = vunpack.c.h.b16 %v599
    %v686 = vunpack.c.l.b16 %v600
    %v687 = vunpack.c.h.b16 %v600
    %v688 = vunpack.c.l.b16 %v601
    %v689 = vunpack.c.h.b16 %v601
    %v690 = vunpack.c.l.b16 %v602
    %v691 = vunpack.c.h.b16 %v602
    %v692 = vunpack.c.l.b16 %v603
    %v693 = vunpack.c.h.b16 %v603
    %v694 = vunpack.c.l.b16 %v604
    %v695 = vunpack.c.h.b16 %v604
    %v696 = vunpack.c.l.b16 %v605
    %v697 = vunpack.c.h.b16 %v605
    %v698 = vunpack.c.l.b16 %v606
    %v699 = vunpack.c.h.b16 %v606
    %v700 = vunpack.c.l.b16 %v607
    %v701 = vunpack.c.h.b16 %v607
    %v702 = vunpack.c.l.b16 %v608
    %v703 = vunpack.c.h.b16 %v608
    %v704 = vunpack.c.l.b16 %v609
    %v705 = vunpack.c.h.b16 %v609
    %v706 = vpack.c.b16 %v646, %v642
    %v707 = vpack.c.b16 %v647, %v643
    %v708 = vpack.c.b16 %v648, %v644
    %v709 = vpack.c.b16 %v649, %v645
    %v710 = vpack.c.b16 %v654, %v650
    %v711 = vpack.c.b16 %v655, %v651
    %v712 = vpack.c.b16 %v656, %v652
    %v713 = vpack.c.b16 %v657, %v653
    %v714 = vpack.c.b16 %v662, %v658
    %v715 = vpack.c.b16 %v663, %v659
    %v716 = vpack.c.b16 %v664, %v660
    %v717 = vpack.c.b16 %v665, %v661
    %v718 = vpack.c.b16 %v670, %v666
    %v719 = vpack.c.b16 %v671, %v667
    %v720 = vpack.c.b16 %v672, %v668
    %v721 = vpack.c.b16 %v673, %v669
    %v722 = vpack.c.b16 %v678, %v674
    %v723 = vpack.c.b16 %v679, %v675
    %v724 = vpack.c.b16 %v680, %v676
    %v725 = vpack.c.b16 %v681, %v677
    %v726 = vpack.c.b16 %v686, %v682
    %v727 = vpack.c.b16 %v687, %v683
    %v728 = vpack.c.b16 %v688, %v684
    %v729 = vpack.c.b16 %v689, %v685
    %v730 = vpack.c.b16 %v694, %v690
    %v731 = vpack.c.b16 %v695, %v691
    %v732 = vpack.c.b16 %v696, %v692
    %v733 = vpack.c.b16 %v697, %v693
    %v734 = vpack.c.b16 %v702, %v698
    %v735 = vpack.c.b16 %v703, %v699
    %v736 = vpack.c.b16 %v704, %v700
    %v737 = vpack.c.b16 %v705, %v701
    %770 = vmatprep.subr.bf16.mxu0 %v707
    %771 = vmatpush1.bf16.msra.mxu0 %v706
    %772 = vmatprep.subr.bf16.mxu0 %v711
    %773 = vmatpush1.bf16.msra.mxu0 %v710
    %774 = vmatprep.subr.bf16.mxu0 %v715
    %775 = vmatpush1.bf16.msra.mxu0 %v714
    %776 = vmatprep.subr.bf16.mxu0 %v719
    %777 = vmatpush1.bf16.msra.mxu0 %v718
    %778 = vmatprep.subr.bf16.mxu0 %v723
    %779 = vmatpush1.bf16.msra.mxu0 %v722
    %780 = vmatprep.subr.bf16.mxu0 %v727
    %781 = vmatpush1.bf16.msra.mxu0 %v726
    %782 = vmatprep.subr.bf16.mxu0 %v731
    %783 = vmatpush1.bf16.msra.mxu0 %v730
    %784 = vmatprep.subr.bf16.mxu0 %v735
    %785 = vmatpush1.bf16.msra.mxu0 %v734
    %786 = vmatprep.subr.bf16.mxu0 0
    %787 = vmatpush1.bf16.msra.mxu0 0
    %788 = vmatprep.subr.bf16.mxu0 0
    %789 = vmatpush1.bf16.msra.mxu0 0
    %790 = vmatprep.subr.bf16.mxu0 0
    %791 = vmatpush1.bf16.msra.mxu0 0
    %792 = vmatprep.subr.bf16.mxu0 0
    %793 = vmatpush1.bf16.msra.mxu0 0
    %794 = vmatprep.subr.bf16.mxu0 0
    %795 = vmatpush1.bf16.msra.mxu0 0
    %796 = vmatprep.subr.bf16.mxu0 0
    %797 = vmatpush1.bf16.msra.mxu0 0
    %798 = vmatprep.subr.bf16.mxu0 0
    %799 = vmatpush1.bf16.msra.mxu0 0
    %800 = vmatprep.subr.bf16.mxu0 0
    %801 = vmatpush1.bf16.msra.mxu0 0
    %802 = vmatprep.mubr.bf16.mxu0 0
    %803 = vmatmul.mubr.bf16.gmra.mrb[0].mxu0 %v321
    %v804 = vpop.f32.mrb[0].mxu0
    %v805 = vadd.f32 0.0, %v804
    %v806 = vpop.f32.mrb[0].mxu0
    %v807 = vadd.f32 0.0, %v806
    %v808 = vpop.f32.mrb[0].mxu0
    %v809 = vadd.f32 0.0, %v808
    %v810 = vpop.f32.mrb[0].mxu0
    %v811 = vadd.f32 0.0, %v810
    %812 = vdwg.mxu0
    %813 = vmatprep.subr.bf16.mxu0 %v709
    %814 = vmatpush1.bf16.msra.mxu0 %v708
    %815 = vmatprep.subr.bf16.mxu0 %v713
    %816 = vmatpush1.bf16.msra.mxu0 %v712
    %817 = vmatprep.subr.bf16.mxu0 %v717
    %818 = vmatpush1.bf16.msra.mxu0 %v716
    %819 = vmatprep.subr.bf16.mxu0 %v721
    %820 = vmatpush1.bf16.msra.mxu0 %v720
    %821 = vmatprep.subr.bf16.mxu0 %v725
    %822 = vmatpush1.bf16.msra.mxu0 %v724
    %823 = vmatprep.subr.bf16.mxu0 %v729
    %824 = vmatpush1.bf16.msra.mxu0 %v728
    %825 = vmatprep.subr.bf16.mxu0 %v733
    %826 = vmatpush1.bf16.msra.mxu0 %v732
    %827 = vmatprep.subr.bf16.mxu0 %v737
    %828 = vmatpush1.bf16.msra.mxu0 %v736
    %829 = vmatprep.subr.bf16.mxu0 0
    %830 = vmatpush1.bf16.msra.mxu0 0
    %831 = vmatprep.subr.bf16.mxu0 0
    %832 = vmatpush1.bf16.msra.mxu0 0
    %833 = vmatprep.subr.bf16.mxu0 0
    %834 = vmatpush1.bf16.msra.mxu0 0
    %835 = vmatprep.subr.bf16.mxu0 0
    %836 = vmatpush1.bf16.msra.mxu0 0
    %837 = vmatprep.subr.bf16.mxu0 0
    %838 = vmatpush1.bf16.msra.mxu0 0
    %839 = vmatprep.subr.bf16.mxu0 0
    %840 = vmatpush1.bf16.msra.mxu0 0
    %841 = vmatprep.subr.bf16.mxu0 0
    %842 = vmatpush1.bf16.msra.mxu0 0
    %843 = vmatprep.subr.bf16.mxu0 0
    %844 = vmatpush1.bf16.msra.mxu0 0
    %845 = vmatprep.mubr.bf16.mxu0 0
    %846 = vmatmul.mubr.bf16.gmra.mrb[0].mxu0 %v321
    %v847 = vpop.f32.mrb[0].mxu0
    %v848 = vadd.f32 0.0, %v847
    %v849 = vpop.f32.mrb[0].mxu0
    %v850 = vadd.f32 0.0, %v849
    %v851 = vpop.f32.mrb[0].mxu0
    %v852 = vadd.f32 0.0, %v851
    %v853 = vpop.f32.mrb[0].mxu0
    %v854 = vadd.f32 0.0, %v853
    %855 = vdwg.mxu0
    %v1112 = vunpack.c.l.b16 %v322
    %v1113 = vunpack.c.h.b16 %v322
    %v1114 = vunpack.c.l.b16 %v323
    %v1115 = vunpack.c.h.b16 %v323
    %v1116 = vunpack.c.l.b16 %v324
    %v1117 = vunpack.c.h.b16 %v324
    %v1118 = vunpack.c.l.b16 %v325
    %v1119 = vunpack.c.h.b16 %v325
    %v1120 = vunpack.c.l.b16 %v326
    %v1121 = vunpack.c.h.b16 %v326
    %v1122 = vunpack.c.l.b16 %v327
    %v1123 = vunpack.c.h.b16 %v327
    %v1124 = vunpack.c.l.b16 %v328
    %v1125 = vunpack.c.h.b16 %v328
    %v1126 = vunpack.c.l.b16 %v329
    %v1127 = vunpack.c.h.b16 %v329
    %v1128 = vunpack.c.l.b16 %v330
    %v1129 = vunpack.c.h.b16 %v330
    %v1130 = vunpack.c.l.b16 %v331
    %v1131 = vunpack.c.h.b16 %v331
    %v1132 = vunpack.c.l.b16 %v332
    %v1133 = vunpack.c.h.b16 %v332
    %v1134 = vunpack.c.l.b16 %v333
    %v1135 = vunpack.c.h.b16 %v333
    %v1136 = vunpack.c.l.b16 %v334
    %v1137 = vunpack.c.h.b16 %v334
    %v1138 = vunpack.c.l.b16 %v335
    %v1139 = vunpack.c.h.b16 %v335
    %v1140 = vunpack.c.l.b16 %v336
    %v1141 = vunpack.c.h.b16 %v336
    %v1142 = vunpack.c.l.b16 %v337
    %v1143 = vunpack.c.h.b16 %v337
    %v1144 = vunpack.c.l.b16 %v338
    %v1145 = vunpack.c.h.b16 %v338
    %v1146 = vunpack.c.l.b16 %v339
    %v1147 = vunpack.c.h.b16 %v339
    %v1148 = vunpack.c.l.b16 %v340
    %v1149 = vunpack.c.h.b16 %v340
    %v1150 = vunpack.c.l.b16 %v341
    %v1151 = vunpack.c.h.b16 %v341
    %v1152 = vunpack.c.l.b16 %v342
    %v1153 = vunpack.c.h.b16 %v342
    %v1154 = vunpack.c.l.b16 %v343
    %v1155 = vunpack.c.h.b16 %v343
    %v1156 = vunpack.c.l.b16 %v344
    %v1157 = vunpack.c.h.b16 %v344
    %v1158 = vunpack.c.l.b16 %v345
    %v1159 = vunpack.c.h.b16 %v345
    %v1160 = vunpack.c.l.b16 %v346
    %v1161 = vunpack.c.h.b16 %v346
    %v1162 = vunpack.c.l.b16 %v347
    %v1163 = vunpack.c.h.b16 %v347
    %v1164 = vunpack.c.l.b16 %v348
    %v1165 = vunpack.c.h.b16 %v348
    %v1166 = vunpack.c.l.b16 %v349
    %v1167 = vunpack.c.h.b16 %v349
    %v1168 = vunpack.c.l.b16 %v350
    %v1169 = vunpack.c.h.b16 %v350
    %v1170 = vunpack.c.l.b16 %v351
    %v1171 = vunpack.c.h.b16 %v351
    %v1172 = vunpack.c.l.b16 %v352
    %v1173 = vunpack.c.h.b16 %v352
    %v1174 = vunpack.c.l.b16 %v353
    %v1175 = vunpack.c.h.b16 %v353
    %v1176 = vunpack.c.l.b16 %v354
    %v1177 = vunpack.c.h.b16 %v354
    %v1178 = vunpack.c.l.b16 %v355
    %v1179 = vunpack.c.h.b16 %v355
    %v1180 = vunpack.c.l.b16 %v356
    %v1181 = vunpack.c.h.b16 %v356
    %v1182 = vunpack.c.l.b16 %v357
    %v1183 = vunpack.c.h.b16 %v357
    %v1184 = vunpack.c.l.b16 %v358
    %v1185 = vunpack.c.h.b16 %v358
    %v1186 = vunpack.c.l.b16 %v359
    %v1187 = vunpack.c.h.b16 %v359
    %v1188 = vunpack.c.l.b16 %v360
    %v1189 = vunpack.c.h.b16 %v360
    %v1190 = vunpack.c.l.b16 %v361
    %v1191 = vunpack.c.h.b16 %v361
    %v1192 = vunpack.c.l.b16 %v362
    %v1193 = vunpack.c.h.b16 %v362
    %v1194 = vunpack.c.l.b16 %v363
    %v1195 = vunpack.c.h.b16 %v363
    %v1196 = vunpack.c.l.b16 %v364
    %v1197 = vunpack.c.h.b16 %v364
    %v1198 = vunpack.c.l.b16 %v365
    %v1199 = vunpack.c.h.b16 %v365
    %v1200 = vunpack.c.l.b16 %v366
    %v1201 = vunpack.c.h.b16 %v366
    %v1202 = vunpack.c.l.b16 %v367
    %v1203 = vunpack.c.h.b16 %v367
    %v1204 = vunpack.c.l.b16 %v368
    %v1205 = vunpack.c.h.b16 %v368
    %v1206 = vunpack.c.l.b16 %v369
    %v1207 = vunpack.c.h.b16 %v369
    %v1208 = vunpack.c.l.b16 %v370
    %v1209 = vunpack.c.h.b16 %v370
    %v1210 = vunpack.c.l.b16 %v371
    %v1211 = vunpack.c.h.b16 %v371
    %v1212 = vunpack.c.l.b16 %v372
    %v1213 = vunpack.c.h.b16 %v372
    %v1214 = vunpack.c.l.b16 %v373
    %v1215 = vunpack.c.h.b16 %v373
    %v1216 = vunpack.c.l.b16 %v374
    %v1217 = vunpack.c.h.b16 %v374
    %v1218 = vunpack.c.l.b16 %v375
    %v1219 = vunpack.c.h.b16 %v375
    %v1220 = vunpack.c.l.b16 %v376
    %v1221 = vunpack.c.h.b16 %v376
    %v1222 = vunpack.c.l.b16 %v377
    %v1223 = vunpack.c.h.b16 %v377
    %v1224 = vunpack.c.l.b16 %v378
    %v1225 = vunpack.c.h.b16 %v378
    %v1226 = vunpack.c.l.b16 %v379
    %v1227 = vunpack.c.h.b16 %v379
    %v1228 = vunpack.c.l.b16 %v380
    %v1229 = vunpack.c.h.b16 %v380
    %v1230 = vunpack.c.l.b16 %v381
    %v1231 = vunpack.c.h.b16 %v381
    %v1232 = vunpack.c.l.b16 %v382
    %v1233 = vunpack.c.h.b16 %v382
    %v1234 = vunpack.c.l.b16 %v383
    %v1235 = vunpack.c.h.b16 %v383
    %v1236 = vunpack.c.l.b16 %v384
    %v1237 = vunpack.c.h.b16 %v384
    %v1238 = vunpack.c.l.b16 %v385
    %v1239 = vunpack.c.h.b16 %v385
    %v1240 = vunpack.c.l.b16 %v386
    %v1241 = vunpack.c.h.b16 %v386
    %v1242 = vunpack.c.l.b16 %v387
    %v1243 = vunpack.c.h.b16 %v387
    %v1244 = vunpack.c.l.b16 %v388
    %v1245 = vunpack.c.h.b16 %v388
    %v1246 = vunpack.c.l.b16 %v389
    %v1247 = vunpack.c.h.b16 %v389
    %v1248 = vunpack.c.l.b16 %v390
    %v1249 = vunpack.c.h.b16 %v390
    %v1250 = vunpack.c.l.b16 %v391
    %v1251 = vunpack.c.h.b16 %v391
    %v1252 = vunpack.c.l.b16 %v392
    %v1253 = vunpack.c.h.b16 %v392
    %v1254 = vunpack.c.l.b16 %v393
    %v1255 = vunpack.c.h.b16 %v393
    %v1256 = vunpack.c.l.b16 %v394
    %v1257 = vunpack.c.h.b16 %v394
    %v1258 = vunpack.c.l.b16 %v395
    %v1259 = vunpack.c.h.b16 %v395
    %v1260 = vunpack.c.l.b16 %v396
    %v1261 = vunpack.c.h.b16 %v396
    %v1262 = vunpack.c.l.b16 %v397
    %v1263 = vunpack.c.h.b16 %v397
    %v1264 = vunpack.c.l.b16 %v398
    %v1265 = vunpack.c.h.b16 %v398
    %v1266 = vunpack.c.l.b16 %v399
    %v1267 = vunpack.c.h.b16 %v399
    %v1268 = vunpack.c.l.b16 %v400
    %v1269 = vunpack.c.h.b16 %v400
    %v1270 = vunpack.c.l.b16 %v401
    %v1271 = vunpack.c.h.b16 %v401
    %v1272 = vunpack.c.l.b16 %v402
    %v1273 = vunpack.c.h.b16 %v402
    %v1274 = vunpack.c.l.b16 %v403
    %v1275 = vunpack.c.h.b16 %v403
    %v1276 = vunpack.c.l.b16 %v404
    %v1277 = vunpack.c.h.b16 %v404
    %v1278 = vunpack.c.l.b16 %v405
    %v1279 = vunpack.c.h.b16 %v405
    %v1280 = vunpack.c.l.b16 %v406
    %v1281 = vunpack.c.h.b16 %v406
    %v1282 = vunpack.c.l.b16 %v407
    %v1283 = vunpack.c.h.b16 %v407
    %v1284 = vunpack.c.l.b16 %v408
    %v1285 = vunpack.c.h.b16 %v408
    %v1286 = vunpack.c.l.b16 %v409
    %v1287 = vunpack.c.h.b16 %v409
    %v1288 = vunpack.c.l.b16 %v410
    %v1289 = vunpack.c.h.b16 %v410
    %v1290 = vunpack.c.l.b16 %v411
    %v1291 = vunpack.c.h.b16 %v411
    %v1292 = vunpack.c.l.b16 %v412
    %v1293 = vunpack.c.h.b16 %v412
    %v1294 = vunpack.c.l.b16 %v413
    %v1295 = vunpack.c.h.b16 %v413
    %v1296 = vunpack.c.l.b16 %v414
    %v1297 = vunpack.c.h.b16 %v414
    %v1298 = vunpack.c.l.b16 %v415
    %v1299 = vunpack.c.h.b16 %v415
    %v1300 = vunpack.c.l.b16 %v416
    %v1301 = vunpack.c.h.b16 %v416
    %v1302 = vunpack.c.l.b16 %v417
    %v1303 = vunpack.c.h.b16 %v417
    %v1304 = vunpack.c.l.b16 %v418
    %v1305 = vunpack.c.h.b16 %v418
    %v1306 = vunpack.c.l.b16 %v419
    %v1307 = vunpack.c.h.b16 %v419
    %v1308 = vunpack.c.l.b16 %v420
    %v1309 = vunpack.c.h.b16 %v420
    %v1310 = vunpack.c.l.b16 %v421
    %v1311 = vunpack.c.h.b16 %v421
    %v1312 = vunpack.c.l.b16 %v422
    %v1313 = vunpack.c.h.b16 %v422
    %v1314 = vunpack.c.l.b16 %v423
    %v1315 = vunpack.c.h.b16 %v423
    %v1316 = vunpack.c.l.b16 %v424
    %v1317 = vunpack.c.h.b16 %v424
    %v1318 = vunpack.c.l.b16 %v425
    %v1319 = vunpack.c.h.b16 %v425
    %v1320 = vunpack.c.l.b16 %v426
    %v1321 = vunpack.c.h.b16 %v426
    %v1322 = vunpack.c.l.b16 %v427
    %v1323 = vunpack.c.h.b16 %v427
    %v1324 = vunpack.c.l.b16 %v428
    %v1325 = vunpack.c.h.b16 %v428
    %v1326 = vunpack.c.l.b16 %v429
    %v1327 = vunpack.c.h.b16 %v429
    %v1328 = vunpack.c.l.b16 %v430
    %v1329 = vunpack.c.h.b16 %v430
    %v1330 = vunpack.c.l.b16 %v431
    %v1331 = vunpack.c.h.b16 %v431
    %v1332 = vunpack.c.l.b16 %v432
    %v1333 = vunpack.c.h.b16 %v432
    %v1334 = vunpack.c.l.b16 %v433
    %v1335 = vunpack.c.h.b16 %v433
    %v1336 = vunpack.c.l.b16 %v434
    %v1337 = vunpack.c.h.b16 %v434
    %v1338 = vunpack.c.l.b16 %v435
    %v1339 = vunpack.c.h.b16 %v435
    %v1340 = vunpack.c.l.b16 %v436
    %v1341 = vunpack.c.h.b16 %v436
    %v1342 = vunpack.c.l.b16 %v437
    %v1343 = vunpack.c.h.b16 %v437
    %v1344 = vunpack.c.l.b16 %v438
    %v1345 = vunpack.c.h.b16 %v438
    %v1346 = vunpack.c.l.b16 %v439
    %v1347 = vunpack.c.h.b16 %v439
    %v1348 = vunpack.c.l.b16 %v440
    %v1349 = vunpack.c.h.b16 %v440
    %v1350 = vunpack.c.l.b16 %v441
    %v1351 = vunpack.c.h.b16 %v441
    %v1352 = vunpack.c.l.b16 %v442
    %v1353 = vunpack.c.h.b16 %v442
    %v1354 = vunpack.c.l.b16 %v443
    %v1355 = vunpack.c.h.b16 %v443
    %v1356 = vunpack.c.l.b16 %v444
    %v1357 = vunpack.c.h.b16 %v444
    %v1358 = vunpack.c.l.b16 %v445
    %v1359 = vunpack.c.h.b16 %v445
    %v1360 = vunpack.c.l.b16 %v446
    %v1361 = vunpack.c.h.b16 %v446
    %v1362 = vunpack.c.l.b16 %v447
    %v1363 = vunpack.c.h.b16 %v447
    %v1364 = vunpack.c.l.b16 %v448
    %v1365 = vunpack.c.h.b16 %v448
    %v1366 = vunpack.c.l.b16 %v449
    %v1367 = vunpack.c.h.b16 %v449
    %v1368 = vunpack.c.l.b16 %v450
    %v1369 = vunpack.c.h.b16 %v450
    %v1370 = vunpack.c.l.b16 %v451
    %v1371 = vunpack.c.h.b16 %v451
    %v1372 = vunpack.c.l.b16 %v452
    %v1373 = vunpack.c.h.b16 %v452
    %v1374 = vunpack.c.l.b16 %v453
    %v1375 = vunpack.c.h.b16 %v453
    %v1376 = vunpack.c.l.b16 %v454
    %v1377 = vunpack.c.h.b16 %v454
    %v1378 = vunpack.c.l.b16 %v455
    %v1379 = vunpack.c.h.b16 %v455
    %v1380 = vunpack.c.l.b16 %v456
    %v1381 = vunpack.c.h.b16 %v456
    %v1382 = vunpack.c.l.b16 %v457
    %v1383 = vunpack.c.h.b16 %v457
    %v1384 = vunpack.c.l.b16 %v458
    %v1385 = vunpack.c.h.b16 %v458
    %v1386 = vunpack.c.l.b16 %v459
    %v1387 = vunpack.c.h.b16 %v459
    %v1388 = vunpack.c.l.b16 %v460
    %v1389 = vunpack.c.h.b16 %v460
    %v1390 = vunpack.c.l.b16 %v461
    %v1391 = vunpack.c.h.b16 %v461
    %v1392 = vunpack.c.l.b16 %v462
    %v1393 = vunpack.c.h.b16 %v462
    %v1394 = vunpack.c.l.b16 %v463
    %v1395 = vunpack.c.h.b16 %v463
    %v1396 = vunpack.c.l.b16 %v464
    %v1397 = vunpack.c.h.b16 %v464
    %v1398 = vunpack.c.l.b16 %v465
    %v1399 = vunpack.c.h.b16 %v465
    %v1400 = vunpack.c.l.b16 %v466
    %v1401 = vunpack.c.h.b16 %v466
    %v1402 = vunpack.c.l.b16 %v467
    %v1403 = vunpack.c.h.b16 %v467
    %v1404 = vunpack.c.l.b16 %v468
    %v1405 = vunpack.c.h.b16 %v468
    %v1406 = vunpack.c.l.b16 %v469
    %v1407 = vunpack.c.h.b16 %v469
    %v1408 = vunpack.c.l.b16 %v470
    %v1409 = vunpack.c.h.b16 %v470
    %v1410 = vunpack.c.l.b16 %v471
    %v1411 = vunpack.c.h.b16 %v471
    %v1412 = vunpack.c.l.b16 %v472
    %v1413 = vunpack.c.h.b16 %v472
    %v1414 = vunpack.c.l.b16 %v473
    %v1415 = vunpack.c.h.b16 %v473
    %v1416 = vunpack.c.l.b16 %v474
    %v1417 = vunpack.c.h.b16 %v474
    %v1418 = vunpack.c.l.b16 %v475
    %v1419 = vunpack.c.h.b16 %v475
    %v1420 = vunpack.c.l.b16 %v476
    %v1421 = vunpack.c.h.b16 %v476
    %v1422 = vunpack.c.l.b16 %v477
    %v1423 = vunpack.c.h.b16 %v477
    %v1424 = vunpack.c.l.b16 %v478
    %v1425 = vunpack.c.h.b16 %v478
    %v1426 = vunpack.c.l.b16 %v479
    %v1427 = vunpack.c.h.b16 %v479
    %v1428 = vunpack.c.l.b16 %v480
    %v1429 = vunpack.c.h.b16 %v480
    %v1430 = vunpack.c.l.b16 %v481
    %v1431 = vunpack.c.h.b16 %v481
    %v1432 = vunpack.c.l.b16 %v482
    %v1433 = vunpack.c.h.b16 %v482
    %v1434 = vunpack.c.l.b16 %v483
    %v1435 = vunpack.c.h.b16 %v483
    %v1436 = vunpack.c.l.b16 %v484
    %v1437 = vunpack.c.h.b16 %v484
    %v1438 = vunpack.c.l.b16 %v485
    %v1439 = vunpack.c.h.b16 %v485
    %v1440 = vunpack.c.l.b16 %v486
    %v1441 = vunpack.c.h.b16 %v486
    %v1442 = vunpack.c.l.b16 %v487
    %v1443 = vunpack.c.h.b16 %v487
    %v1444 = vunpack.c.l.b16 %v488
    %v1445 = vunpack.c.h.b16 %v488
    %v1446 = vunpack.c.l.b16 %v489
    %v1447 = vunpack.c.h.b16 %v489
    %v1448 = vunpack.c.l.b16 %v490
    %v1449 = vunpack.c.h.b16 %v490
    %v1450 = vunpack.c.l.b16 %v491
    %v1451 = vunpack.c.h.b16 %v491
    %v1452 = vunpack.c.l.b16 %v492
    %v1453 = vunpack.c.h.b16 %v492
    %v1454 = vunpack.c.l.b16 %v493
    %v1455 = vunpack.c.h.b16 %v493
    %v1456 = vunpack.c.l.b16 %v494
    %v1457 = vunpack.c.h.b16 %v494
    %v1458 = vunpack.c.l.b16 %v495
    %v1459 = vunpack.c.h.b16 %v495
    %v1460 = vunpack.c.l.b16 %v496
    %v1461 = vunpack.c.h.b16 %v496
    %v1462 = vunpack.c.l.b16 %v497
    %v1463 = vunpack.c.h.b16 %v497
    %v1464 = vunpack.c.l.b16 %v498
    %v1465 = vunpack.c.h.b16 %v498
    %v1466 = vunpack.c.l.b16 %v499
    %v1467 = vunpack.c.h.b16 %v499
    %v1468 = vunpack.c.l.b16 %v500
    %v1469 = vunpack.c.h.b16 %v500
    %v1470 = vunpack.c.l.b16 %v501
    %v1471 = vunpack.c.h.b16 %v501
    %v1472 = vunpack.c.l.b16 %v502
    %v1473 = vunpack.c.h.b16 %v502
    %v1474 = vunpack.c.l.b16 %v503
    %v1475 = vunpack.c.h.b16 %v503
    %v1476 = vunpack.c.l.b16 %v504
    %v1477 = vunpack.c.h.b16 %v504
    %v1478 = vunpack.c.l.b16 %v505
    %v1479 = vunpack.c.h.b16 %v505
    %v1480 = vunpack.c.l.b16 %v506
    %v1481 = vunpack.c.h.b16 %v506
    %v1482 = vunpack.c.l.b16 %v507
    %v1483 = vunpack.c.h.b16 %v507
    %v1484 = vunpack.c.l.b16 %v508
    %v1485 = vunpack.c.h.b16 %v508
    %v1486 = vunpack.c.l.b16 %v509
    %v1487 = vunpack.c.h.b16 %v509
    %v1488 = vunpack.c.l.b16 %v510
    %v1489 = vunpack.c.h.b16 %v510
    %v1490 = vunpack.c.l.b16 %v511
    %v1491 = vunpack.c.h.b16 %v511
    %v1492 = vunpack.c.l.b16 %v512
    %v1493 = vunpack.c.h.b16 %v512
    %v1494 = vunpack.c.l.b16 %v513
    %v1495 = vunpack.c.h.b16 %v513
    %v1496 = vunpack.c.l.b16 %v514
    %v1497 = vunpack.c.h.b16 %v514
    %v1498 = vunpack.c.l.b16 %v515
    %v1499 = vunpack.c.h.b16 %v515
    %v1500 = vunpack.c.l.b16 %v516
    %v1501 = vunpack.c.h.b16 %v516
    %v1502 = vunpack.c.l.b16 %v517
    %v1503 = vunpack.c.h.b16 %v517
    %v1504 = vunpack.c.l.b16 %v518
    %v1505 = vunpack.c.h.b16 %v518
    %v1506 = vunpack.c.l.b16 %v519
    %v1507 = vunpack.c.h.b16 %v519
    %v1508 = vunpack.c.l.b16 %v520
    %v1509 = vunpack.c.h.b16 %v520
    %v1510 = vunpack.c.l.b16 %v521
    %v1511 = vunpack.c.h.b16 %v521
    %v1512 = vunpack.c.l.b16 %v522
    %v1513 = vunpack.c.h.b16 %v522
    %v1514 = vunpack.c.l.b16 %v523
    %v1515 = vunpack.c.h.b16 %v523
    %v1516 = vunpack.c.l.b16 %v524
    %v1517 = vunpack.c.h.b16 %v524
    %v1518 = vunpack.c.l.b16 %v525
    %v1519 = vunpack.c.h.b16 %v525
    %v1520 = vunpack.c.l.b16 %v526
    %v1521 = vunpack.c.h.b16 %v526
    %v1522 = vunpack.c.l.b16 %v527
    %v1523 = vunpack.c.h.b16 %v527
    %v1524 = vunpack.c.l.b16 %v528
    %v1525 = vunpack.c.h.b16 %v528
    %v1526 = vunpack.c.l.b16 %v529
    %v1527 = vunpack.c.h.b16 %v529
    %v1528 = vunpack.c.l.b16 %v530
    %v1529 = vunpack.c.h.b16 %v530
    %v1530 = vunpack.c.l.b16 %v531
    %v1531 = vunpack.c.h.b16 %v531
    %v1532 = vunpack.c.l.b16 %v532
    %v1533 = vunpack.c.h.b16 %v532
    %v1534 = vunpack.c.l.b16 %v533
    %v1535 = vunpack.c.h.b16 %v533
    %v1536 = vunpack.c.l.b16 %v534
    %v1537 = vunpack.c.h.b16 %v534
    %v1538 = vunpack.c.l.b16 %v535
    %v1539 = vunpack.c.h.b16 %v535
    %v1540 = vunpack.c.l.b16 %v536
    %v1541 = vunpack.c.h.b16 %v536
    %v1542 = vunpack.c.l.b16 %v537
    %v1543 = vunpack.c.h.b16 %v537
    %v1544 = vunpack.c.l.b16 %v538
    %v1545 = vunpack.c.h.b16 %v538
    %v1546 = vunpack.c.l.b16 %v539
    %v1547 = vunpack.c.h.b16 %v539
    %v1548 = vunpack.c.l.b16 %v540
    %v1549 = vunpack.c.h.b16 %v540
    %v1550 = vunpack.c.l.b16 %v541
    %v1551 = vunpack.c.h.b16 %v541
    %v1552 = vunpack.c.l.b16 %v542
    %v1553 = vunpack.c.h.b16 %v542
    %v1554 = vunpack.c.l.b16 %v543
    %v1555 = vunpack.c.h.b16 %v543
    %v1556 = vunpack.c.l.b16 %v544
    %v1557 = vunpack.c.h.b16 %v544
    %v1558 = vunpack.c.l.b16 %v545
    %v1559 = vunpack.c.h.b16 %v545
    %v1560 = vunpack.c.l.b16 %v546
    %v1561 = vunpack.c.h.b16 %v546
    %v1562 = vunpack.c.l.b16 %v547
    %v1563 = vunpack.c.h.b16 %v547
    %v1564 = vunpack.c.l.b16 %v548
    %v1565 = vunpack.c.h.b16 %v548
    %v1566 = vunpack.c.l.b16 %v549
    %v1567 = vunpack.c.h.b16 %v549
    %v1568 = vunpack.c.l.b16 %v550
    %v1569 = vunpack.c.h.b16 %v550
    %v1570 = vunpack.c.l.b16 %v551
    %v1571 = vunpack.c.h.b16 %v551
    %v1572 = vunpack.c.l.b16 %v552
    %v1573 = vunpack.c.h.b16 %v552
    %v1574 = vunpack.c.l.b16 %v553
    %v1575 = vunpack.c.h.b16 %v553
    %v1576 = vunpack.c.l.b16 %v554
    %v1577 = vunpack.c.h.b16 %v554
    %v1578 = vunpack.c.l.b16 %v555
    %v1579 = vunpack.c.h.b16 %v555
    %v1580 = vunpack.c.l.b16 %v556
    %v1581 = vunpack.c.h.b16 %v556
    %v1582 = vunpack.c.l.b16 %v557
    %v1583 = vunpack.c.h.b16 %v557
    %v1584 = vunpack.c.l.b16 %v558
    %v1585 = vunpack.c.h.b16 %v558
    %v1586 = vunpack.c.l.b16 %v559
    %v1587 = vunpack.c.h.b16 %v559
    %v1588 = vunpack.c.l.b16 %v560
    %v1589 = vunpack.c.h.b16 %v560
    %v1590 = vunpack.c.l.b16 %v561
    %v1591 = vunpack.c.h.b16 %v561
    %v1592 = vunpack.c.l.b16 %v562
    %v1593 = vunpack.c.h.b16 %v562
    %v1594 = vunpack.c.l.b16 %v563
    %v1595 = vunpack.c.h.b16 %v563
    %v1596 = vunpack.c.l.b16 %v564
    %v1597 = vunpack.c.h.b16 %v564
    %v1598 = vunpack.c.l.b16 %v565
    %v1599 = vunpack.c.h.b16 %v565
    %v1600 = vunpack.c.l.b16 %v566
    %v1601 = vunpack.c.h.b16 %v566
    %v1602 = vunpack.c.l.b16 %v567
    %v1603 = vunpack.c.h.b16 %v567
    %v1604 = vunpack.c.l.b16 %v568
    %v1605 = vunpack.c.h.b16 %v568
    %v1606 = vunpack.c.l.b16 %v569
    %v1607 = vunpack.c.h.b16 %v569
    %v1608 = vunpack.c.l.b16 %v570
    %v1609 = vunpack.c.h.b16 %v570
    %v1610 = vunpack.c.l.b16 %v571
    %v1611 = vunpack.c.h.b16 %v571
    %v1612 = vunpack.c.l.b16 %v572
    %v1613 = vunpack.c.h.b16 %v572
    %v1614 = vunpack.c.l.b16 %v573
    %v1615 = vunpack.c.h.b16 %v573
    %v1616 = vunpack.c.l.b16 %v574
    %v1617 = vunpack.c.h.b16 %v574
    %v1618 = vunpack.c.l.b16 %v575
    %v1619 = vunpack.c.h.b16 %v575
    %v1620 = vunpack.c.l.b16 %v576
    %v1621 = vunpack.c.h.b16 %v576
    %v1622 = vunpack.c.l.b16 %v577
    %v1623 = vunpack.c.h.b16 %v577
    %v1624 = vpack.c.b16 %v1116, %v1112
    %v1625 = vpack.c.b16 %v1117, %v1113
    %v1626 = vpack.c.b16 %v1118, %v1114
    %v1627 = vpack.c.b16 %v1119, %v1115
    %v1628 = vpack.c.b16 %v1124, %v1120
    %v1629 = vpack.c.b16 %v1125, %v1121
    %v1630 = vpack.c.b16 %v1126, %v1122
    %v1631 = vpack.c.b16 %v1127, %v1123
    %v1632 = vpack.c.b16 %v1132, %v1128
    %v1633 = vpack.c.b16 %v1133, %v1129
    %v1634 = vpack.c.b16 %v1134, %v1130
    %v1635 = vpack.c.b16 %v1135, %v1131
    %v1636 = vpack.c.b16 %v1140, %v1136
    %v1637 = vpack.c.b16 %v1141, %v1137
    %v1638 = vpack.c.b16 %v1142, %v1138
    %v1639 = vpack.c.b16 %v1143, %v1139
    %v1640 = vpack.c.b16 %v1148, %v1144
    %v1641 = vpack.c.b16 %v1149, %v1145
    %v1642 = vpack.c.b16 %v1150, %v1146
    %v1643 = vpack.c.b16 %v1151, %v1147
    %v1644 = vpack.c.b16 %v1156, %v1152
    %v1645 = vpack.c.b16 %v1157, %v1153
    %v1646 = vpack.c.b16 %v1158, %v1154
    %v1647 = vpack.c.b16 %v1159, %v1155
    %v1648 = vpack.c.b16 %v1164, %v1160
    %v1649 = vpack.c.b16 %v1165, %v1161
    %v1650 = vpack.c.b16 %v1166, %v1162
    %v1651 = vpack.c.b16 %v1167, %v1163
    %v1652 = vpack.c.b16 %v1172, %v1168
    %v1653 = vpack.c.b16 %v1173, %v1169
    %v1654 = vpack.c.b16 %v1174, %v1170
    %v1655 = vpack.c.b16 %v1175, %v1171
    %v1656 = vpack.c.b16 %v1180, %v1176
    %v1657 = vpack.c.b16 %v1181, %v1177
    %v1658 = vpack.c.b16 %v1182, %v1178
    %v1659 = vpack.c.b16 %v1183, %v1179
    %v1660 = vpack.c.b16 %v1188, %v1184
    %v1661 = vpack.c.b16 %v1189, %v1185
    %v1662 = vpack.c.b16 %v1190, %v1186
    %v1663 = vpack.c.b16 %v1191, %v1187
    %v1664 = vpack.c.b16 %v1196, %v1192
    %v1665 = vpack.c.b16 %v1197, %v1193
    %v1666 = vpack.c.b16 %v1198, %v1194
    %v1667 = vpack.c.b16 %v1199, %v1195
    %v1668 = vpack.c.b16 %v1204, %v1200
    %v1669 = vpack.c.b16 %v1205, %v1201
    %v1670 = vpack.c.b16 %v1206, %v1202
    %v1671 = vpack.c.b16 %v1207, %v1203
    %v1672 = vpack.c.b16 %v1212, %v1208
    %v1673 = vpack.c.b16 %v1213, %v1209
    %v1674 = vpack.c.b16 %v1214, %v1210
    %v1675 = vpack.c.b16 %v1215, %v1211
    %v1676 = vpack.c.b16 %v1220, %v1216
    %v1677 = vpack.c.b16 %v1221, %v1217
    %v1678 = vpack.c.b16 %v1222, %v1218
    %v1679 = vpack.c.b16 %v1223, %v1219
    %v1680 = vpack.c.b16 %v1228, %v1224
    %v1681 = vpack.c.b16 %v1229, %v1225
    %v1682 = vpack.c.b16 %v1230, %v1226
    %v1683 = vpack.c.b16 %v1231, %v1227
    %v1684 = vpack.c.b16 %v1236, %v1232
    %v1685 = vpack.c.b16 %v1237, %v1233
    %v1686 = vpack.c.b16 %v1238, %v1234
    %v1687 = vpack.c.b16 %v1239, %v1235
    %v1688 = vpack.c.b16 %v1244, %v1240
    %v1689 = vpack.c.b16 %v1245, %v1241
    %v1690 = vpack.c.b16 %v1246, %v1242
    %v1691 = vpack.c.b16 %v1247, %v1243
    %v1692 = vpack.c.b16 %v1252, %v1248
    %v1693 = vpack.c.b16 %v1253, %v1249
    %v1694 = vpack.c.b16 %v1254, %v1250
    %v1695 = vpack.c.b16 %v1255, %v1251
    %v1696 = vpack.c.b16 %v1260, %v1256
    %v1697 = vpack.c.b16 %v1261, %v1257
    %v1698 = vpack.c.b16 %v1262, %v1258
    %v1699 = vpack.c.b16 %v1263, %v1259
    %v1700 = vpack.c.b16 %v1268, %v1264
    %v1701 = vpack.c.b16 %v1269, %v1265
    %v1702 = vpack.c.b16 %v1270, %v1266
    %v1703 = vpack.c.b16 %v1271, %v1267
    %v1704 = vpack.c.b16 %v1276, %v1272
    %v1705 = vpack.c.b16 %v1277, %v1273
    %v1706 = vpack.c.b16 %v1278, %v1274
    %v1707 = vpack.c.b16 %v1279, %v1275
    %v1708 = vpack.c.b16 %v1284, %v1280
    %v1709 = vpack.c.b16 %v1285, %v1281
    %v1710 = vpack.c.b16 %v1286, %v1282
    %v1711 = vpack.c.b16 %v1287, %v1283
    %v1712 = vpack.c.b16 %v1292, %v1288
    %v1713 = vpack.c.b16 %v1293, %v1289
    %v1714 = vpack.c.b16 %v1294, %v1290
    %v1715 = vpack.c.b16 %v1295, %v1291
    %v1716 = vpack.c.b16 %v1300, %v1296
    %v1717 = vpack.c.b16 %v1301, %v1297
    %v1718 = vpack.c.b16 %v1302, %v1298
    %v1719 = vpack.c.b16 %v1303, %v1299
    %v1720 = vpack.c.b16 %v1308, %v1304
    %v1721 = vpack.c.b16 %v1309, %v1305
    %v1722 = vpack.c.b16 %v1310, %v1306
    %v1723 = vpack.c.b16 %v1311, %v1307
    %v1724 = vpack.c.b16 %v1316, %v1312
    %v1725 = vpack.c.b16 %v1317, %v1313
    %v1726 = vpack.c.b16 %v1318, %v1314
    %v1727 = vpack.c.b16 %v1319, %v1315
    %v1728 = vpack.c.b16 %v1324, %v1320
    %v1729 = vpack.c.b16 %v1325, %v1321
    %v1730 = vpack.c.b16 %v1326, %v1322
    %v1731 = vpack.c.b16 %v1327, %v1323
    %v1732 = vpack.c.b16 %v1332, %v1328
    %v1733 = vpack.c.b16 %v1333, %v1329
    %v1734 = vpack.c.b16 %v1334, %v1330
    %v1735 = vpack.c.b16 %v1335, %v1331
    %v1736 = vpack.c.b16 %v1340, %v1336
    %v1737 = vpack.c.b16 %v1341, %v1337
    %v1738 = vpack.c.b16 %v1342, %v1338
    %v1739 = vpack.c.b16 %v1343, %v1339
    %v1740 = vpack.c.b16 %v1348, %v1344
    %v1741 = vpack.c.b16 %v1349, %v1345
    %v1742 = vpack.c.b16 %v1350, %v1346
    %v1743 = vpack.c.b16 %v1351, %v1347
    %v1744 = vpack.c.b16 %v1356, %v1352
    %v1745 = vpack.c.b16 %v1357, %v1353
    %v1746 = vpack.c.b16 %v1358, %v1354
    %v1747 = vpack.c.b16 %v1359, %v1355
    %v1748 = vpack.c.b16 %v1364, %v1360
    %v1749 = vpack.c.b16 %v1365, %v1361
    %v1750 = vpack.c.b16 %v1366, %v1362
    %v1751 = vpack.c.b16 %v1367, %v1363
    %v1752 = vpack.c.b16 %v1372, %v1368
    %v1753 = vpack.c.b16 %v1373, %v1369
    %v1754 = vpack.c.b16 %v1374, %v1370
    %v1755 = vpack.c.b16 %v1375, %v1371
    %v1756 = vpack.c.b16 %v1380, %v1376
    %v1757 = vpack.c.b16 %v1381, %v1377
    %v1758 = vpack.c.b16 %v1382, %v1378
    %v1759 = vpack.c.b16 %v1383, %v1379
    %v1760 = vpack.c.b16 %v1388, %v1384
    %v1761 = vpack.c.b16 %v1389, %v1385
    %v1762 = vpack.c.b16 %v1390, %v1386
    %v1763 = vpack.c.b16 %v1391, %v1387
    %v1764 = vpack.c.b16 %v1396, %v1392
    %v1765 = vpack.c.b16 %v1397, %v1393
    %v1766 = vpack.c.b16 %v1398, %v1394
    %v1767 = vpack.c.b16 %v1399, %v1395
    %v1768 = vpack.c.b16 %v1404, %v1400
    %v1769 = vpack.c.b16 %v1405, %v1401
    %v1770 = vpack.c.b16 %v1406, %v1402
    %v1771 = vpack.c.b16 %v1407, %v1403
    %v1772 = vpack.c.b16 %v1412, %v1408
    %v1773 = vpack.c.b16 %v1413, %v1409
    %v1774 = vpack.c.b16 %v1414, %v1410
    %v1775 = vpack.c.b16 %v1415, %v1411
    %v1776 = vpack.c.b16 %v1420, %v1416
    %v1777 = vpack.c.b16 %v1421, %v1417
    %v1778 = vpack.c.b16 %v1422, %v1418
    %v1779 = vpack.c.b16 %v1423, %v1419
    %v1780 = vpack.c.b16 %v1428, %v1424
    %v1781 = vpack.c.b16 %v1429, %v1425
    %v1782 = vpack.c.b16 %v1430, %v1426
    %v1783 = vpack.c.b16 %v1431, %v1427
    %v1784 = vpack.c.b16 %v1436, %v1432
    %v1785 = vpack.c.b16 %v1437, %v1433
    %v1786 = vpack.c.b16 %v1438, %v1434
    %v1787 = vpack.c.b16 %v1439, %v1435
    %v1788 = vpack.c.b16 %v1444, %v1440
    %v1789 = vpack.c.b16 %v1445, %v1441
    %v1790 = vpack.c.b16 %v1446, %v1442
    %v1791 = vpack.c.b16 %v1447, %v1443
    %v1792 = vpack.c.b16 %v1452, %v1448
    %v1793 = vpack.c.b16 %v1453, %v1449
    %v1794 = vpack.c.b16 %v1454, %v1450
    %v1795 = vpack.c.b16 %v1455, %v1451
    %v1796 = vpack.c.b16 %v1460, %v1456
    %v1797 = vpack.c.b16 %v1461, %v1457
    %v1798 = vpack.c.b16 %v1462, %v1458
    %v1799 = vpack.c.b16 %v1463, %v1459
    %v1800 = vpack.c.b16 %v1468, %v1464
    %v1801 = vpack.c.b16 %v1469, %v1465
    %v1802 = vpack.c.b16 %v1470, %v1466
    %v1803 = vpack.c.b16 %v1471, %v1467
    %v1804 = vpack.c.b16 %v1476, %v1472
    %v1805 = vpack.c.b16 %v1477, %v1473
    %v1806 = vpack.c.b16 %v1478, %v1474
    %v1807 = vpack.c.b16 %v1479, %v1475
    %v1808 = vpack.c.b16 %v1484, %v1480
    %v1809 = vpack.c.b16 %v1485, %v1481
    %v1810 = vpack.c.b16 %v1486, %v1482
    %v1811 = vpack.c.b16 %v1487, %v1483
    %v1812 = vpack.c.b16 %v1492, %v1488
    %v1813 = vpack.c.b16 %v1493, %v1489
    %v1814 = vpack.c.b16 %v1494, %v1490
    %v1815 = vpack.c.b16 %v1495, %v1491
    %v1816 = vpack.c.b16 %v1500, %v1496
    %v1817 = vpack.c.b16 %v1501, %v1497
    %v1818 = vpack.c.b16 %v1502, %v1498
    %v1819 = vpack.c.b16 %v1503, %v1499
    %v1820 = vpack.c.b16 %v1508, %v1504
    %v1821 = vpack.c.b16 %v1509, %v1505
    %v1822 = vpack.c.b16 %v1510, %v1506
    %v1823 = vpack.c.b16 %v1511, %v1507
    %v1824 = vpack.c.b16 %v1516, %v1512
    %v1825 = vpack.c.b16 %v1517, %v1513
    %v1826 = vpack.c.b16 %v1518, %v1514
    %v1827 = vpack.c.b16 %v1519, %v1515
    %v1828 = vpack.c.b16 %v1524, %v1520
    %v1829 = vpack.c.b16 %v1525, %v1521
    %v1830 = vpack.c.b16 %v1526, %v1522
    %v1831 = vpack.c.b16 %v1527, %v1523
    %v1832 = vpack.c.b16 %v1532, %v1528
    %v1833 = vpack.c.b16 %v1533, %v1529
    %v1834 = vpack.c.b16 %v1534, %v1530
    %v1835 = vpack.c.b16 %v1535, %v1531
    %v1836 = vpack.c.b16 %v1540, %v1536
    %v1837 = vpack.c.b16 %v1541, %v1537
    %v1838 = vpack.c.b16 %v1542, %v1538
    %v1839 = vpack.c.b16 %v1543, %v1539
    %v1840 = vpack.c.b16 %v1548, %v1544
    %v1841 = vpack.c.b16 %v1549, %v1545
    %v1842 = vpack.c.b16 %v1550, %v1546
    %v1843 = vpack.c.b16 %v1551, %v1547
    %v1844 = vpack.c.b16 %v1556, %v1552
    %v1845 = vpack.c.b16 %v1557, %v1553
    %v1846 = vpack.c.b16 %v1558, %v1554
    %v1847 = vpack.c.b16 %v1559, %v1555
    %v1848 = vpack.c.b16 %v1564, %v1560
    %v1849 = vpack.c.b16 %v1565, %v1561
    %v1850 = vpack.c.b16 %v1566, %v1562
    %v1851 = vpack.c.b16 %v1567, %v1563
    %v1852 = vpack.c.b16 %v1572, %v1568
    %v1853 = vpack.c.b16 %v1573, %v1569
    %v1854 = vpack.c.b16 %v1574, %v1570
    %v1855 = vpack.c.b16 %v1575, %v1571
    %v1856 = vpack.c.b16 %v1580, %v1576
    %v1857 = vpack.c.b16 %v1581, %v1577
    %v1858 = vpack.c.b16 %v1582, %v1578
    %v1859 = vpack.c.b16 %v1583, %v1579
    %v1860 = vpack.c.b16 %v1588, %v1584
    %v1861 = vpack.c.b16 %v1589, %v1585
    %v1862 = vpack.c.b16 %v1590, %v1586
    %v1863 = vpack.c.b16 %v1591, %v1587
    %v1864 = vpack.c.b16 %v1596, %v1592
    %v1865 = vpack.c.b16 %v1597, %v1593
    %v1866 = vpack.c.b16 %v1598, %v1594
    %v1867 = vpack.c.b16 %v1599, %v1595
    %v1868 = vpack.c.b16 %v1604, %v1600
    %v1869 = vpack.c.b16 %v1605, %v1601
    %v1870 = vpack.c.b16 %v1606, %v1602
    %v1871 = vpack.c.b16 %v1607, %v1603
    %v1872 = vpack.c.b16 %v1612, %v1608
    %v1873 = vpack.c.b16 %v1613, %v1609
    %v1874 = vpack.c.b16 %v1614, %v1610
    %v1875 = vpack.c.b16 %v1615, %v1611
    %v1876 = vpack.c.b16 %v1620, %v1616
    %v1877 = vpack.c.b16 %v1621, %v1617
    %v1878 = vpack.c.b16 %v1622, %v1618
    %v1879 = vpack.c.b16 %v1623, %v1619
    %2136 = vmatprep.subr.bf16.mxu0 %v1625
    %2137 = vmatpush1.bf16.msra.mxu0 %v1624
    %2138 = vmatprep.subr.bf16.mxu0 %v1629
    %2139 = vmatpush1.bf16.msra.mxu0 %v1628
    %2140 = vmatprep.subr.bf16.mxu0 %v1633
    %2141 = vmatpush1.bf16.msra.mxu0 %v1632
    %2142 = vmatprep.subr.bf16.mxu0 %v1637
    %2143 = vmatpush1.bf16.msra.mxu0 %v1636
    %2144 = vmatprep.subr.bf16.mxu0 %v1641
    %2145 = vmatpush1.bf16.msra.mxu0 %v1640
    %2146 = vmatprep.subr.bf16.mxu0 %v1645
    %2147 = vmatpush1.bf16.msra.mxu0 %v1644
    %2148 = vmatprep.subr.bf16.mxu0 %v1649
    %2149 = vmatpush1.bf16.msra.mxu0 %v1648
    %2150 = vmatprep.subr.bf16.mxu0 %v1653
    %2151 = vmatpush1.bf16.msra.mxu0 %v1652
    %2152 = vmatprep.subr.bf16.mxu0 %v1657
    %2153 = vmatpush1.bf16.msra.mxu0 %v1656
    %2154 = vmatprep.subr.bf16.mxu0 %v1661
    %2155 = vmatpush1.bf16.msra.mxu0 %v1660
    %2156 = vmatprep.subr.bf16.mxu0 %v1665
    %2157 = vmatpush1.bf16.msra.mxu0 %v1664
    %2158 = vmatprep.subr.bf16.mxu0 %v1669
    %2159 = vmatpush1.bf16.msra.mxu0 %v1668
    %2160 = vmatprep.subr.bf16.mxu0 %v1673
    %2161 = vmatpush1.bf16.msra.mxu0 %v1672
    %2162 = vmatprep.subr.bf16.mxu0 %v1677
    %2163 = vmatpush1.bf16.msra.mxu0 %v1676
    %2164 = vmatprep.subr.bf16.mxu0 %v1681
    %2165 = vmatpush1.bf16.msra.mxu0 %v1680
    %2166 = vmatprep.subr.bf16.mxu0 %v1685
    %2167 = vmatpush1.bf16.msra.mxu0 %v1684
    %2168 = vmatprep.mubr.bf16.mxu0 %v298
    %2169 = vmatmul.mubr.bf16.gmra.mrb[0].mxu0 %v297
    %v2170 = vpop.f32.mrb[0].mxu0
    %v2171 = vadd.f32 %v805, %v2170
    %v2172 = vpop.f32.mrb[0].mxu0
    %v2173 = vadd.f32 %v807, %v2172
    %v2174 = vpop.f32.mrb[0].mxu0
    %v2175 = vadd.f32 %v809, %v2174
    %v2176 = vpop.f32.mrb[0].mxu0
    %v2177 = vadd.f32 %v811, %v2176
    %2178 = vdwg.mxu0
    %2179 = vmatprep.subr.bf16.mxu0 %v1689
    %2180 = vmatpush1.bf16.msra.mxu0 %v1688
    %2181 = vmatprep.subr.bf16.mxu0 %v1693
    %2182 = vmatpush1.bf16.msra.mxu0 %v1692
    %2183 = vmatprep.subr.bf16.mxu0 %v1697
    %2184 = vmatpush1.bf16.msra.mxu0 %v1696
    %2185 = vmatprep.subr.bf16.mxu0 %v1701
    %2186 = vmatpush1.bf16.msra.mxu0 %v1700
    %2187 = vmatprep.subr.bf16.mxu0 %v1705
    %2188 = vmatpush1.bf16.msra.mxu0 %v1704
    %2189 = vmatprep.subr.bf16.mxu0 %v1709
    %2190 = vmatpush1.bf16.msra.mxu0 %v1708
    %2191 = vmatprep.subr.bf16.mxu0 %v1713
    %2192 = vmatpush1.bf16.msra.mxu0 %v1712
    %2193 = vmatprep.subr.bf16.mxu0 %v1717
    %2194 = vmatpush1.bf16.msra.mxu0 %v1716
    %2195 = vmatprep.subr.bf16.mxu0 %v1721
    %2196 = vmatpush1.bf16.msra.mxu0 %v1720
    %2197 = vmatprep.subr.bf16.mxu0 %v1725
    %2198 = vmatpush1.bf16.msra.mxu0 %v1724
    %2199 = vmatprep.subr.bf16.mxu0 %v1729
    %2200 = vmatpush1.bf16.msra.mxu0 %v1728
    %2201 = vmatprep.subr.bf16.mxu0 %v1733
    %2202 = vmatpush1.bf16.msra.mxu0 %v1732
    %2203 = vmatprep.subr.bf16.mxu0 %v1737
    %2204 = vmatpush1.bf16.msra.mxu0 %v1736
    %2205 = vmatprep.subr.bf16.mxu0 %v1741
    %2206 = vmatpush1.bf16.msra.mxu0 %v1740
    %2207 = vmatprep.subr.bf16.mxu0 %v1745
    %2208 = vmatpush1.bf16.msra.mxu0 %v1744
    %2209 = vmatprep.subr.bf16.mxu0 %v1749
    %2210 = vmatpush1.bf16.msra.mxu0 %v1748
    %2211 = vmatprep.mubr.bf16.mxu0 %v300
    %2212 = vmatmul.mubr.bf16.gmra.mrb[0].mxu0 %v299
    %v2213 = vpop.f32.mrb[0].mxu0
    %v2214 = vadd.f32 %v2171, %v2213
    %v2215 = vpop.f32.mrb[0].mxu0
    %v2216 = vadd.f32 %v2173, %v2215
    %v2217 = vpop.f32.mrb[0].mxu0
    %v2218 = vadd.f32 %v2175, %v2217
    %v2219 = vpop.f32.mrb[0].mxu0
    %v2220 = vadd.f32 %v2177, %v2219
    %2221 = vdwg.mxu0
    %2222 = vmatprep.subr.bf16.mxu0 %v1753
    %2223 = vmatpush1.bf16.msra.mxu0 %v1752
    %2224 = vmatprep.subr.bf16.mxu0 %v1757
    %2225 = vmatpush1.bf16.msra.mxu0 %v1756
    %2226 = vmatprep.subr.bf16.mxu0 %v1761
    %2227 = vmatpush1.bf16.msra.mxu0 %v1760
    %2228 = vmatprep.subr.bf16.mxu0 %v1765
    %2229 = vmatpush1.bf16.msra.mxu0 %v1764
    %2230 = vmatprep.subr.bf16.mxu0 %v1769
    %2231 = vmatpush1.bf16.msra.mxu0 %v1768
    %2232 = vmatprep.subr.bf16.mxu0 %v1773
    %2233 = vmatpush1.bf16.msra.mxu0 %v1772
    %2234 = vmatprep.subr.bf16.mxu0 %v1777
    %2235 = vmatpush1.bf16.msra.mxu0 %v1776
    %2236 = vmatprep.subr.bf16.mxu0 %v1781
    %2237 = vmatpush1.bf16.msra.mxu0 %v1780
    %2238 = vmatprep.subr.bf16.mxu0 %v1785
    %2239 = vmatpush1.bf16.msra.mxu0 %v1784
    %2240 = vmatprep.subr.bf16.mxu0 %v1789
    %2241 = vmatpush1.bf16.msra.mxu0 %v1788
    %2242 = vmatprep.subr.bf16.mxu0 %v1793
    %2243 = vmatpush1.bf16.msra.mxu0 %v1792
    %2244 = vmatprep.subr.bf16.mxu0 %v1797
    %2245 = vmatpush1.bf16.msra.mxu0 %v1796
    %2246 = vmatprep.subr.bf16.mxu0 %v1801
    %2247 = vmatpush1.bf16.msra.mxu0 %v1800
    %2248 = vmatprep.subr.bf16.mxu0 %v1805
    %2249 = vmatpush1.bf16.msra.mxu0 %v1804
    %2250 = vmatprep.subr.bf16.mxu0 %v1809
    %2251 = vmatpush1.bf16.msra.mxu0 %v1808
    %2252 = vmatprep.subr.bf16.mxu0 %v1813
    %2253 = vmatpush1.bf16.msra.mxu0 %v1812
    %2254 = vmatprep.mubr.bf16.mxu0 %v302
    %2255 = vmatmul.mubr.bf16.gmra.mrb[0].mxu0 %v301
    %v2256 = vpop.f32.mrb[0].mxu0
    %v2257 = vadd.f32 %v2214, %v2256
    %v2258 = vpop.f32.mrb[0].mxu0
    %v2259 = vadd.f32 %v2216, %v2258
    %v2260 = vpop.f32.mrb[0].mxu0
    %v2261 = vadd.f32 %v2218, %v2260
    %v2262 = vpop.f32.mrb[0].mxu0
    %v2263 = vadd.f32 %v2220, %v2262
    %2264 = vdwg.mxu0
    %2265 = vmatprep.subr.bf16.mxu0 %v1817
    %2266 = vmatpush1.bf16.msra.mxu0 %v1816
    %2267 = vmatprep.subr.bf16.mxu0 %v1821
    %2268 = vmatpush1.bf16.msra.mxu0 %v1820
    %2269 = vmatprep.subr.bf16.mxu0 %v1825
    %2270 = vmatpush1.bf16.msra.mxu0 %v1824
    %2271 = vmatprep.subr.bf16.mxu0 %v1829
    %2272 = vmatpush1.bf16.msra.mxu0 %v1828
    %2273 = vmatprep.subr.bf16.mxu0 %v1833
    %2274 = vmatpush1.bf16.msra.mxu0 %v1832
    %2275 = vmatprep.subr.bf16.mxu0 %v1837
    %2276 = vmatpush1.bf16.msra.mxu0 %v1836
    %2277 = vmatprep.subr.bf16.mxu0 %v1841
    %2278 = vmatpush1.bf16.msra.mxu0 %v1840
    %2279 = vmatprep.subr.bf16.mxu0 %v1845
    %2280 = vmatpush1.bf16.msra.mxu0 %v1844
    %2281 = vmatprep.subr.bf16.mxu0 %v1849
    %2282 = vmatpush1.bf16.msra.mxu0 %v1848
    %2283 = vmatprep.subr.bf16.mxu0 %v1853
    %2284 = vmatpush1.bf16.msra.mxu0 %v1852
    %2285 = vmatprep.subr.bf16.mxu0 %v1857
    %2286 = vmatpush1.bf16.msra.mxu0 %v1856
    %2287 = vmatprep.subr.bf16.mxu0 %v1861
    %2288 = vmatpush1.bf16.msra.mxu0 %v1860
    %2289 = vmatprep.subr.bf16.mxu0 %v1865
    %2290 = vmatpush1.bf16.msra.mxu0 %v1864
    %2291 = vmatprep.subr.bf16.mxu0 %v1869
    %2292 = vmatpush1.bf16.msra.mxu0 %v1868
    %2293 = vmatprep.subr.bf16.mxu0 %v1873
    %2294 = vmatpush1.bf16.msra.mxu0 %v1872
    %2295 = vmatprep.subr.bf16.mxu0 %v1877
    %2296 = vmatpush1.bf16.msra.mxu0 %v1876
    %2297 = vmatprep.mubr.bf16.mxu0 %v304
    %2298 = vmatmul.mubr.bf16.gmra.mrb[0].mxu0 %v303
    %v2299 = vpop.f32.mrb[0].mxu0
    %v2300 = vadd.f32 %v2257, %v2299
    %v2301 = vpop.f32.mrb[0].mxu0
    %v2302 = vadd.f32 %v2259, %v2301
    %v2303 = vpop.f32.mrb[0].mxu0
    %v2304 = vadd.f32 %v2261, %v2303
    %v2305 = vpop.f32.mrb[0].mxu0
    %v2306 = vadd.f32 %v2263, %v2305
    %2307 = vdwg.mxu0
    %2308 = vmatprep.subr.bf16.mxu0 %v1627
    %2309 = vmatpush1.bf16.msra.mxu0 %v1626
    %2310 = vmatprep.subr.bf16.mxu0 %v1631
    %2311 = vmatpush1.bf16.msra.mxu0 %v1630
    %2312 = vmatprep.subr.bf16.mxu0 %v1635
    %2313 = vmatpush1.bf16.msra.mxu0 %v1634
    %2314 = vmatprep.subr.bf16.mxu0 %v1639
    %2315 = vmatpush1.bf16.msra.mxu0 %v1638
    %2316 = vmatprep.subr.bf16.mxu0 %v1643
    %2317 = vmatpush1.bf16.msra.mxu0 %v1642
    %2318 = vmatprep.subr.bf16.mxu0 %v1647
    %2319 = vmatpush1.bf16.msra.mxu0 %v1646
    %2320 = vmatprep.subr.bf16.mxu0 %v1651
    %2321 = vmatpush1.bf16.msra.mxu0 %v1650
    %2322 = vmatprep.subr.bf16.mxu0 %v1655
    %2323 = vmatpush1.bf16.msra.mxu0 %v1654
    %2324 = vmatprep.subr.bf16.mxu0 %v1659
    %2325 = vmatpush1.bf16.msra.mxu0 %v1658
    %2326 = vmatprep.subr.bf16.mxu0 %v1663
    %2327 = vmatpush1.bf16.msra.mxu0 %v1662
    %2328 = vmatprep.subr.bf16.mxu0 %v1667
    %2329 = vmatpush1.bf16.msra.mxu0 %v1666
    %2330 = vmatprep.subr.bf16.mxu0 %v1671
    %2331 = vmatpush1.bf16.msra.mxu0 %v1670
    %2332 = vmatprep.subr.bf16.mxu0 %v1675
    %2333 = vmatpush1.bf16.msra.mxu0 %v1674
    %2334 = vmatprep.subr.bf16.mxu0 %v1679
    %2335 = vmatpush1.bf16.msra.mxu0 %v1678
    %2336 = vmatprep.subr.bf16.mxu0 %v1683
    %2337 = vmatpush1.bf16.msra.mxu0 %v1682
    %2338 = vmatprep.subr.bf16.mxu0 %v1687
    %2339 = vmatpush1.bf16.msra.mxu0 %v1686
    %2340 = vmatprep.mubr.bf16.mxu0 %v298
    %2341 = vmatmul.mubr.bf16.gmra.mrb[0].mxu0 %v297
    %v2342 = vpop.f32.mrb[0].mxu0
    %v2343 = vadd.f32 %v848, %v2342
    %v2344 = vpop.f32.mrb[0].mxu0
    %v2345 = vadd.f32 %v850, %v2344
    %v2346 = vpop.f32.mrb[0].mxu0
    %v2347 = vadd.f32 %v852, %v2346
    %v2348 = vpop.f32.mrb[0].mxu0
    %v2349 = vadd.f32 %v854, %v2348
    %2350 = vdwg.mxu0
    %2351 = vmatprep.subr.bf16.mxu0 %v1691
    %2352 = vmatpush1.bf16.msra.mxu0 %v1690
    %2353 = vmatprep.subr.bf16.mxu0 %v1695
    %2354 = vmatpush1.bf16.msra.mxu0 %v1694
    %2355 = vmatprep.subr.bf16.mxu0 %v1699
    %2356 = vmatpush1.bf16.msra.mxu0 %v1698
    %2357 = vmatprep.subr.bf16.mxu0 %v1703
    %2358 = vmatpush1.bf16.msra.mxu0 %v1702
    %2359 = vmatprep.subr.bf16.mxu0 %v1707
    %2360 = vmatpush1.bf16.msra.mxu0 %v1706
    %2361 = vmatprep.subr.bf16.mxu0 %v1711
    %2362 = vmatpush1.bf16.msra.mxu0 %v1710
    %2363 = vmatprep.subr.bf16.mxu0 %v1715
    %2364 = vmatpush1.bf16.msra.mxu0 %v1714
    %2365 = vmatprep.subr.bf16.mxu0 %v1719
    %2366 = vmatpush1.bf16.msra.mxu0 %v1718
    %2367 = vmatprep.subr.bf16.mxu0 %v1723
    %2368 = vmatpush1.bf16.msra.mxu0 %v1722
    %2369 = vmatprep.subr.bf16.mxu0 %v1727
    %2370 = vmatpush1.bf16.msra.mxu0 %v1726
    %2371 = vmatprep.subr.bf16.mxu0 %v1731
    %2372 = vmatpush1.bf16.msra.mxu0 %v1730
    %2373 = vmatprep.subr.bf16.mxu0 %v1735
    %2374 = vmatpush1.bf16.msra.mxu0 %v1734
    %2375 = vmatprep.subr.bf16.mxu0 %v1739
    %2376 = vmatpush1.bf16.msra.mxu0 %v1738
    %2377 = vmatprep.subr.bf16.mxu0 %v1743
    %2378 = vmatpush1.bf16.msra.mxu0 %v1742
    %2379 = vmatprep.subr.bf16.mxu0 %v1747
    %2380 = vmatpush1.bf16.msra.mxu0 %v1746
    %2381 = vmatprep.subr.bf16.mxu0 %v1751
    %2382 = vmatpush1.bf16.msra.mxu0 %v1750
    %2383 = vmatprep.mubr.bf16.mxu0 %v300
    %2384 = vmatmul.mubr.bf16.gmra.mrb[0].mxu0 %v299
    %v2385 = vpop.f32.mrb[0].mxu0
    %v2386 = vadd.f32 %v2343, %v2385
    %v2387 = vpop.f32.mrb[0].mxu0
    %v2388 = vadd.f32 %v2345, %v2387
    %v2389 = vpop.f32.mrb[0].mxu0
    %v2390 = vadd.f32 %v2347, %v2389
    %v2391 = vpop.f32.mrb[0].mxu0
    %v2392 = vadd.f32 %v2349, %v2391
    %2393 = vdwg.mxu0
    %2394 = vmatprep.subr.bf16.mxu0 %v1755
    %2395 = vmatpush1.bf16.msra.mxu0 %v1754
    %2396 = vmatprep.subr.bf16.mxu0 %v1759
    %2397 = vmatpush1.bf16.msra.mxu0 %v1758
    %2398 = vmatprep.subr.bf16.mxu0 %v1763
    %2399 = vmatpush1.bf16.msra.mxu0 %v1762
    %2400 = vmatprep.subr.bf16.mxu0 %v1767
    %2401 = vmatpush1.bf16.msra.mxu0 %v1766
    %2402 = vmatprep.subr.bf16.mxu0 %v1771
    %2403 = vmatpush1.bf16.msra.mxu0 %v1770
    %2404 = vmatprep.subr.bf16.mxu0 %v1775
    %2405 = vmatpush1.bf16.msra.mxu0 %v1774
    %2406 = vmatprep.subr.bf16.mxu0 %v1779
    %2407 = vmatpush1.bf16.msra.mxu0 %v1778
    %2408 = vmatprep.subr.bf16.mxu0 %v1783
    %2409 = vmatpush1.bf16.msra.mxu0 %v1782
    %2410 = vmatprep.subr.bf16.mxu0 %v1787
    %2411 = vmatpush1.bf16.msra.mxu0 %v1786
    %2412 = vmatprep.subr.bf16.mxu0 %v1791
    %2413 = vmatpush1.bf16.msra.mxu0 %v1790
    %2414 = vmatprep.subr.bf16.mxu0 %v1795
    %2415 = vmatpush1.bf16.msra.mxu0 %v1794
    %2416 = vmatprep.subr.bf16.mxu0 %v1799
    %2417 = vmatpush1.bf16.msra.mxu0 %v1798
    %2418 = vmatprep.subr.bf16.mxu0 %v1803
    %2419 = vmatpush1.bf16.msra.mxu0 %v1802
    %2420 = vmatprep.subr.bf16.mxu0 %v1807
    %2421 = vmatpush1.bf16.msra.mxu0 %v1806
    %2422 = vmatprep.subr.bf16.mxu0 %v1811
    %2423 = vmatpush1.bf16.msra.mxu0 %v1810
    %2424 = vmatprep.subr.bf16.mxu0 %v1815
    %2425 = vmatpush1.bf16.msra.mxu0 %v1814
    %2426 = vmatprep.mubr.bf16.mxu0 %v302
    %2427 = vmatmul.mubr.bf16.gmra.mrb[0].mxu0 %v301
    %v2428 = vpop.f32.mrb[0].mxu0
    %v2429 = vadd.f32 %v2386, %v2428
    %v2430 = vpop.f32.mrb[0].mxu0
    %v2431 = vadd.f32 %v2388, %v2430
    %v2432 = vpop.f32.mrb[0].mxu0
    %v2433 = vadd.f32 %v2390, %v2432
    %v2434 = vpop.f32.mrb[0].mxu0
    %v2435 = vadd.f32 %v2392, %v2434
    %2436 = vdwg.mxu0
    %2437 = vmatprep.subr.bf16.mxu0 %v1819
    %2438 = vmatpush1.bf16.msra.mxu0 %v1818
    %2439 = vmatprep.subr.bf16.mxu0 %v1823
    %2440 = vmatpush1.bf16.msra.mxu0 %v1822
    %2441 = vmatprep.subr.bf16.mxu0 %v1827
    %2442 = vmatpush1.bf16.msra.mxu0 %v1826
    %2443 = vmatprep.subr.bf16.mxu0 %v1831
    %2444 = vmatpush1.bf16.msra.mxu0 %v1830
    %2445 = vmatprep.subr.bf16.mxu0 %v1835
    %2446 = vmatpush1.bf16.msra.mxu0 %v1834
    %2447 = vmatprep.subr.bf16.mxu0 %v1839
    %2448 = vmatpush1.bf16.msra.mxu0 %v1838
    %2449 = vmatprep.subr.bf16.mxu0 %v1843
    %2450 = vmatpush1.bf16.msra.mxu0 %v1842
    %2451 = vmatprep.subr.bf16.mxu0 %v1847
    %2452 = vmatpush1.bf16.msra.mxu0 %v1846
    %2453 = vmatprep.subr.bf16.mxu0 %v1851
    %2454 = vmatpush1.bf16.msra.mxu0 %v1850
    %2455 = vmatprep.subr.bf16.mxu0 %v1855
    %2456 = vmatpush1.bf16.msra.mxu0 %v1854
    %2457 = vmatprep.subr.bf16.mxu0 %v1859
    %2458 = vmatpush1.bf16.msra.mxu0 %v1858
    %2459 = vmatprep.subr.bf16.mxu0 %v1863
    %2460 = vmatpush1.bf16.msra.mxu0 %v1862
    %2461 = vmatprep.subr.bf16.mxu0 %v1867
    %2462 = vmatpush1.bf16.msra.mxu0 %v1866
    %2463 = vmatprep.subr.bf16.mxu0 %v1871
    %2464 = vmatpush1.bf16.msra.mxu0 %v1870
    %2465 = vmatprep.subr.bf16.mxu0 %v1875
    %2466 = vmatpush1.bf16.msra.mxu0 %v1874
    %2467 = vmatprep.subr.bf16.mxu0 %v1879
    %2468 = vmatpush1.bf16.msra.mxu0 %v1878
    %2469 = vmatprep.mubr.bf16.mxu0 %v304
    %2470 = vmatmul.mubr.bf16.gmra.mrb[0].mxu0 %v303
    %v2471 = vpop.f32.mrb[0].mxu0
    %v2472 = vadd.f32 %v2429, %v2471
    %v2473 = vpop.f32.mrb[0].mxu0
    %v2474 = vadd.f32 %v2431, %v2473
    %v2475 = vpop.f32.mrb[0].mxu0
    %v2476 = vadd.f32 %v2433, %v2475
    %v2477 = vpop.f32.mrb[0].mxu0
    %v2478 = vadd.f32 %v2435, %v2477
    %2479 = vdwg.mxu0
    %v2480 = vmul.f32 %v2300, 0.2
    %v2481 = vmul.f32 %v2302, 0.2
    %v2482 = vmul.f32 %v2472, 0.2
    %v2483 = vmul.f32 %v2474, 0.2
    %v2484 = vmul.f32 %v2304, 0.2
    %v2485 = vmul.f32 %v2306, 0.2
    %v2486 = vmul.f32 %v2476, 0.2
    %v2487 = vmul.f32 %v2478, 0.2
    %v2488 = vmax.f32 %v2300, %v2480
    %v2489 = vmax.f32 %v2302, %v2481
    %v2490 = vmax.f32 %v2472, %v2482
    %v2491 = vmax.f32 %v2474, %v2483
    %v2492 = vmax.f32 %v2304, %v2484
    %v2493 = vmax.f32 %v2306, %v2485
    %v2494 = vmax.f32 %v2476, %v2486
    %v2495 = vmax.f32 %v2478, %v2487
    %v2496 = vpack.c.bf16 %v2492, %v2488
    %v2497 = vpack.c.bf16 %v2493, %v2489
    %v2498 = vpack.c.bf16 %v2494, %v2490
    %v2499 = vpack.c.bf16 %v2495, %v2491
    %v2500 = vld [vmem:[#allocation8] sm:$0xff]
    %v2501 = vld [vmem:[#allocation8 + $0x8] sm:$0xff]
    %v2502 = vld [vmem:[#allocation8 + $0x10] sm:$0xff]
    %v2503 = vld [vmem:[#allocation8 + $0x18] sm:$0xff]
    %v2504 = vld [vmem:[#allocation8 + $0x20] sm:$0xff]
    %v2505 = vld [vmem:[#allocation8 + $0x28] sm:$0xff]
    %v2506 = vld [vmem:[#allocation8 + $0x30] sm:$0xff]
    %v2507 = vld [vmem:[#allocation8 + $0x38] sm:$0xff]
    %v2508 = vld [vmem:[#allocation8 + $0x40] sm:$0xff]
    %v2509 = vld [vmem:[#allocation8 + $0x48] sm:$0xff]
    %v2510 = vld [vmem:[#allocation8 + $0x50] sm:$0xff]
    %v2511 = vld [vmem:[#allocation8 + $0x58] sm:$0xff]
    %v2512 = vld [vmem:[#allocation8 + $0x60] sm:$0xff]
    %v2513 = vld [vmem:[#allocation8 + $0x68] sm:$0xff]
    %v2514 = vld [vmem:[#allocation8 + $0x70] sm:$0xff]
    %v2515 = vld [vmem:[#allocation8 + $0x78] sm:$0xff]
    %v2516 = vld [vmem:[#allocation8 + $0x80] sm:$0xff]
    %v2517 = vld [vmem:[#allocation8 + $0x88] sm:$0xff]
    %v2518 = vld [vmem:[#allocation8 + $0x90] sm:$0xff]
    %v2519 = vld [vmem:[#allocation8 + $0x98] sm:$0xff]
    %v2520 = vld [vmem:[#allocation8 + $0xa0] sm:$0xff]
    %v2521 = vld [vmem:[#allocation8 + $0xa8] sm:$0xff]
    %v2522 = vld [vmem:[#allocation8 + $0xb0] sm:$0xff]
    %v2523 = vld [vmem:[#allocation8 + $0xb8] sm:$0xff]
    %v2524 = vld [vmem:[#allocation8 + $0xc0] sm:$0xff]
    %v2525 = vld [vmem:[#allocation8 + $0xc8] sm:$0xff]
    %v2526 = vld [vmem:[#allocation8 + $0xd0] sm:$0xff]
    %v2527 = vld [vmem:[#allocation8 + $0xd8] sm:$0xff]
    %v2528 = vld [vmem:[#allocation8 + $0xe0] sm:$0xff]
    %v2529 = vld [vmem:[#allocation8 + $0xe8] sm:$0xff]
    %v2530 = vld [vmem:[#allocation8 + $0xf0] sm:$0xff]
    %v2531 = vld [vmem:[#allocation8 + $0xf8] sm:$0xff]
    %v2532 = vld [vmem:[#allocation8 + $0x100] sm:$0xff]
    %v2533 = vld [vmem:[#allocation8 + $0x108] sm:$0xff]
    %v2534 = vld [vmem:[#allocation8 + $0x110] sm:$0xff]
    %v2535 = vld [vmem:[#allocation8 + $0x118] sm:$0xff]
    %v2536 = vld [vmem:[#allocation8 + $0x120] sm:$0xff]
    %v2537 = vld [vmem:[#allocation8 + $0x128] sm:$0xff]
    %v2538 = vld [vmem:[#allocation8 + $0x130] sm:$0xff]
    %v2539 = vld [vmem:[#allocation8 + $0x138] sm:$0xff]
    %v2540 = vld [vmem:[#allocation8 + $0x140] sm:$0xff]
    %v2541 = vld [vmem:[#allocation8 + $0x148] sm:$0xff]
    %v2542 = vld [vmem:[#allocation8 + $0x150] sm:$0xff]
    %v2543 = vld [vmem:[#allocation8 + $0x158] sm:$0xff]
    %v2544 = vld [vmem:[#allocation8 + $0x160] sm:$0xff]
    %v2545 = vld [vmem:[#allocation8 + $0x168] sm:$0xff]
    %v2546 = vld [vmem:[#allocation8 + $0x170] sm:$0xff]
    %v2547 = vld [vmem:[#allocation8 + $0x178] sm:$0xff]
    %v2548 = vld [vmem:[#allocation8 + $0x180] sm:$0xff]
    %v2549 = vld [vmem:[#allocation8 + $0x188] sm:$0xff]
    %v2550 = vld [vmem:[#allocation8 + $0x190] sm:$0xff]
    %v2551 = vld [vmem:[#allocation8 + $0x198] sm:$0xff]
    %v2552 = vld [vmem:[#allocation8 + $0x1a0] sm:$0xff]
    %v2553 = vld [vmem:[#allocation8 + $0x1a8] sm:$0xff]
    %v2554 = vld [vmem:[#allocation8 + $0x1b0] sm:$0xff]
    %v2555 = vld [vmem:[#allocation8 + $0x1b8] sm:$0xff]
    %v2556 = vld [vmem:[#allocation8 + $0x1c0] sm:$0xff]
    %v2557 = vld [vmem:[#allocation8 + $0x1c8] sm:$0xff]
    %v2558 = vld [vmem:[#allocation8 + $0x1d0] sm:$0xff]
    %v2559 = vld [vmem:[#allocation8 + $0x1d8] sm:$0xff]
    %v2560 = vld [vmem:[#allocation8 + $0x1e0] sm:$0xff]
    %v2561 = vld [vmem:[#allocation8 + $0x1e8] sm:$0xff]
    %v2562 = vld [vmem:[#allocation8 + $0x1f0] sm:$0xff]
    %v2563 = vld [vmem:[#allocation8 + $0x1f8] sm:$0xff]
    %v2564 = vld [vmem:[#allocation8 + $0x200] sm:$0xff]
    %v2565 = vld [vmem:[#allocation8 + $0x208] sm:$0xff]
    %v2566 = vld [vmem:[#allocation8 + $0x210] sm:$0xff]
    %v2567 = vld [vmem:[#allocation8 + $0x218] sm:$0xff]
    %v2568 = vld [vmem:[#allocation8 + $0x220] sm:$0xff]
    %v2569 = vld [vmem:[#allocation8 + $0x228] sm:$0xff]
    %v2570 = vld [vmem:[#allocation8 + $0x230] sm:$0xff]
    %v2571 = vld [vmem:[#allocation8 + $0x238] sm:$0xff]
    %v2572 = vld [vmem:[#allocation8 + $0x240] sm:$0xff]
    %v2573 = vld [vmem:[#allocation8 + $0x248] sm:$0xff]
    %v2574 = vld [vmem:[#allocation8 + $0x250] sm:$0xff]
    %v2575 = vld [vmem:[#allocation8 + $0x258] sm:$0xff]
    %v2576 = vld [vmem:[#allocation8 + $0x260] sm:$0xff]
    %v2577 = vld [vmem:[#allocation8 + $0x268] sm:$0xff]
    %v2578 = vld [vmem:[#allocation8 + $0x270] sm:$0xff]
    %v2579 = vld [vmem:[#allocation8 + $0x278] sm:$0xff]
    %v2580 = vld [vmem:[#allocation8 + $0x280] sm:$0xff]
    %v2581 = vld [vmem:[#allocation8 + $0x288] sm:$0xff]
    %v2582 = vld [vmem:[#allocation8 + $0x290] sm:$0xff]
    %v2583 = vld [vmem:[#allocation8 + $0x298] sm:$0xff]
    %v2584 = vld [vmem:[#allocation8 + $0x2a0] sm:$0xff]
    %v2585 = vld [vmem:[#allocation8 + $0x2a8] sm:$0xff]
    %v2586 = vld [vmem:[#allocation8 + $0x2b0] sm:$0xff]
    %v2587 = vld [vmem:[#allocation8 + $0x2b8] sm:$0xff]
    %v2588 = vld [vmem:[#allocation8 + $0x2c0] sm:$0xff]
    %v2589 = vld [vmem:[#allocation8 + $0x2c8] sm:$0xff]
    %v2590 = vld [vmem:[#allocation8 + $0x2d0] sm:$0xff]
    %v2591 = vld [vmem:[#allocation8 + $0x2d8] sm:$0xff]
    %v2592 = vld [vmem:[#allocation8 + $0x2e0] sm:$0xff]
    %v2593 = vld [vmem:[#allocation8 + $0x2e8] sm:$0xff]
    %v2594 = vld [vmem:[#allocation8 + $0x2f0] sm:$0xff]
    %v2595 = vld [vmem:[#allocation8 + $0x2f8] sm:$0xff]
    %v2596 = vld [vmem:[#allocation8 + $0x300] sm:$0xff]
    %v2597 = vld [vmem:[#allocation8 + $0x308] sm:$0xff]
    %v2598 = vld [vmem:[#allocation8 + $0x310] sm:$0xff]
    %v2599 = vld [vmem:[#allocation8 + $0x318] sm:$0xff]
    %v2600 = vld [vmem:[#allocation8 + $0x320] sm:$0xff]
    %v2601 = vld [vmem:[#allocation8 + $0x328] sm:$0xff]
    %v2602 = vld [vmem:[#allocation8 + $0x330] sm:$0xff]
    %v2603 = vld [vmem:[#allocation8 + $0x338] sm:$0xff]
    %v2604 = vld [vmem:[#allocation8 + $0x340] sm:$0xff]
    %v2605 = vld [vmem:[#allocation8 + $0x348] sm:$0xff]
    %v2606 = vld [vmem:[#allocation8 + $0x350] sm:$0xff]
    %v2607 = vld [vmem:[#allocation8 + $0x358] sm:$0xff]
    %v2608 = vld [vmem:[#allocation8 + $0x360] sm:$0xff]
    %v2609 = vld [vmem:[#allocation8 + $0x368] sm:$0xff]
    %v2610 = vld [vmem:[#allocation8 + $0x370] sm:$0xff]
    %v2611 = vld [vmem:[#allocation8 + $0x378] sm:$0xff]
    %v2612 = vld [vmem:[#allocation8 + $0x380] sm:$0xff]
    %v2613 = vld [vmem:[#allocation8 + $0x388] sm:$0xff]
    %v2614 = vld [vmem:[#allocation8 + $0x390] sm:$0xff]
    %v2615 = vld [vmem:[#allocation8 + $0x398] sm:$0xff]
    %v2616 = vld [vmem:[#allocation8 + $0x3a0] sm:$0xff]
    %v2617 = vld [vmem:[#allocation8 + $0x3a8] sm:$0xff]
    %v2618 = vld [vmem:[#allocation8 + $0x3b0] sm:$0xff]
    %v2619 = vld [vmem:[#allocation8 + $0x3b8] sm:$0xff]
    %v2620 = vld [vmem:[#allocation8 + $0x3c0] sm:$0xff]
    %v2621 = vld [vmem:[#allocation8 + $0x3c8] sm:$0xff]
    %v2622 = vld [vmem:[#allocation8 + $0x3d0] sm:$0xff]
    %v2623 = vld [vmem:[#allocation8 + $0x3d8] sm:$0xff]
    %v2624 = vld [vmem:[#allocation8 + $0x3e0] sm:$0xff]
    %v2625 = vld [vmem:[#allocation8 + $0x3e8] sm:$0xff]
    %v2626 = vld [vmem:[#allocation8 + $0x3f0] sm:$0xff]
    %v2627 = vld [vmem:[#allocation8 + $0x3f8] sm:$0xff]
    %v2628 = vld [vmem:[%s5] sm:$0xf]
    %v2630 = vlaneseq
    %v2631 = vshrl.u32 %v2630, 7
    %v2632 = vsub.s32 0, %v2631
    %v2633 = vrot.slane %v2628, %v2632
    %v2634 = vlaneseq
    %v2635 = vshrl.u32 %v2634, 7
    %v2636 = vsub.s32 1, %v2635
    %v2637 = vrot.slane %v2628, %v2636
    %v2638 = vlaneseq
    %v2639 = vshrl.u32 %v2638, 7
    %v2640 = vsub.s32 2, %v2639
    %v2641 = vrot.slane %v2628, %v2640
    %v2642 = vlaneseq
    %v2643 = vshrl.u32 %v2642, 7
    %v2644 = vsub.s32 3, %v2643
    %v2645 = vrot.slane %v2628, %v2644
    %v2778 = vunpack.c.l.b16 %v2500
    %v2779 = vunpack.c.h.b16 %v2500
    %v2780 = vunpack.c.l.b16 %v2501
    %v2781 = vunpack.c.h.b16 %v2501
    %v2782 = vunpack.c.l.b16 %v2502
    %v2783 = vunpack.c.h.b16 %v2502
    %v2784 = vunpack.c.l.b16 %v2503
    %v2785 = vunpack.c.h.b16 %v2503
    %v2786 = vunpack.c.l.b16 %v2504
    %v2787 = vunpack.c.h.b16 %v2504
    %v2788 = vunpack.c.l.b16 %v2505
    %v2789 = vunpack.c.h.b16 %v2505
    %v2790 = vunpack.c.l.b16 %v2506
    %v2791 = vunpack.c.h.b16 %v2506
    %v2792 = vunpack.c.l.b16 %v2507
    %v2793 = vunpack.c.h.b16 %v2507
    %v2794 = vunpack.c.l.b16 %v2508
    %v2795 = vunpack.c.h.b16 %v2508
    %v2796 = vunpack.c.l.b16 %v2509
    %v2797 = vunpack.c.h.b16 %v2509
    %v2798 = vunpack.c.l.b16 %v2510
    %v2799 = vunpack.c.h.b16 %v2510
    %v2800 = vunpack.c.l.b16 %v2511
    %v2801 = vunpack.c.h.b16 %v2511
    %v2802 = vunpack.c.l.b16 %v2512
    %v2803 = vunpack.c.h.b16 %v2512
    %v2804 = vunpack.c.l.b16 %v2513
    %v2805 = vunpack.c.h.b16 %v2513
    %v2806 = vunpack.c.l.b16 %v2514
    %v2807 = vunpack.c.h.b16 %v2514
    %v2808 = vunpack.c.l.b16 %v2515
    %v2809 = vunpack.c.h.b16 %v2515
    %v2810 = vunpack.c.l.b16 %v2516
    %v2811 = vunpack.c.h.b16 %v2516
    %v2812 = vunpack.c.l.b16 %v2517
    %v2813 = vunpack.c.h.b16 %v2517
    %v2814 = vunpack.c.l.b16 %v2518
    %v2815 = vunpack.c.h.b16 %v2518
    %v2816 = vunpack.c.l.b16 %v2519
    %v2817 = vunpack.c.h.b16 %v2519
    %v2818 = vunpack.c.l.b16 %v2520
    %v2819 = vunpack.c.h.b16 %v2520
    %v2820 = vunpack.c.l.b16 %v2521
    %v2821 = vunpack.c.h.b16 %v2521
    %v2822 = vunpack.c.l.b16 %v2522
    %v2823 = vunpack.c.h.b16 %v2522
    %v2824 = vunpack.c.l.b16 %v2523
    %v2825 = vunpack.c.h.b16 %v2523
    %v2826 = vunpack.c.l.b16 %v2524
    %v2827 = vunpack.c.h.b16 %v2524
    %v2828 = vunpack.c.l.b16 %v2525
    %v2829 = vunpack.c.h.b16 %v2525
    %v2830 = vunpack.c.l.b16 %v2526
    %v2831 = vunpack.c.h.b16 %v2526
    %v2832 = vunpack.c.l.b16 %v2527
    %v2833 = vunpack.c.h.b16 %v2527
    %v2834 = vunpack.c.l.b16 %v2528
    %v2835 = vunpack.c.h.b16 %v2528
    %v2836 = vunpack.c.l.b16 %v2529
    %v2837 = vunpack.c.h.b16 %v2529
    %v2838 = vunpack.c.l.b16 %v2530
    %v2839 = vunpack.c.h.b16 %v2530
    %v2840 = vunpack.c.l.b16 %v2531
    %v2841 = vunpack.c.h.b16 %v2531
    %v2842 = vunpack.c.l.b16 %v2532
    %v2843 = vunpack.c.h.b16 %v2532
    %v2844 = vunpack.c.l.b16 %v2533
    %v2845 = vunpack.c.h.b16 %v2533
    %v2846 = vunpack.c.l.b16 %v2534
    %v2847 = vunpack.c.h.b16 %v2534
    %v2848 = vunpack.c.l.b16 %v2535
    %v2849 = vunpack.c.h.b16 %v2535
    %v2850 = vunpack.c.l.b16 %v2536
    %v2851 = vunpack.c.h.b16 %v2536
    %v2852 = vunpack.c.l.b16 %v2537
    %v2853 = vunpack.c.h.b16 %v2537
    %v2854 = vunpack.c.l.b16 %v2538
    %v2855 = vunpack.c.h.b16 %v2538
    %v2856 = vunpack.c.l.b16 %v2539
    %v2857 = vunpack.c.h.b16 %v2539
    %v2858 = vunpack.c.l.b16 %v2540
    %v2859 = vunpack.c.h.b16 %v2540
    %v2860 = vunpack.c.l.b16 %v2541
    %v2861 = vunpack.c.h.b16 %v2541
    %v2862 = vunpack.c.l.b16 %v2542
    %v2863 = vunpack.c.h.b16 %v2542
    %v2864 = vunpack.c.l.b16 %v2543
    %v2865 = vunpack.c.h.b16 %v2543
    %v2866 = vunpack.c.l.b16 %v2544
    %v2867 = vunpack.c.h.b16 %v2544
    %v2868 = vunpack.c.l.b16 %v2545
    %v2869 = vunpack.c.h.b16 %v2545
    %v2870 = vunpack.c.l.b16 %v2546
    %v2871 = vunpack.c.h.b16 %v2546
    %v2872 = vunpack.c.l.b16 %v2547
    %v2873 = vunpack.c.h.b16 %v2547
    %v2874 = vunpack.c.l.b16 %v2548
    %v2875 = vunpack.c.h.b16 %v2548
    %v2876 = vunpack.c.l.b16 %v2549
    %v2877 = vunpack.c.h.b16 %v2549
    %v2878 = vunpack.c.l.b16 %v2550
    %v2879 = vunpack.c.h.b16 %v2550
    %v2880 = vunpack.c.l.b16 %v2551
    %v2881 = vunpack.c.h.b16 %v2551
    %v2882 = vunpack.c.l.b16 %v2552
    %v2883 = vunpack.c.h.b16 %v2552
    %v2884 = vunpack.c.l.b16 %v2553
    %v2885 = vunpack.c.h.b16 %v2553
    %v2886 = vunpack.c.l.b16 %v2554
    %v2887 = vunpack.c.h.b16 %v2554
    %v2888 = vunpack.c.l.b16 %v2555
    %v2889 = vunpack.c.h.b16 %v2555
    %v2890 = vunpack.c.l.b16 %v2556
    %v2891 = vunpack.c.h.b16 %v2556
    %v2892 = vunpack.c.l.b16 %v2557
    %v2893 = vunpack.c.h.b16 %v2557
    %v2894 = vunpack.c.l.b16 %v2558
    %v2895 = vunpack.c.h.b16 %v2558
    %v2896 = vunpack.c.l.b16 %v2559
    %v2897 = vunpack.c.h.b16 %v2559
    %v2898 = vunpack.c.l.b16 %v2560
    %v2899 = vunpack.c.h.b16 %v2560
    %v2900 = vunpack.c.l.b16 %v2561
    %v2901 = vunpack.c.h.b16 %v2561
    %v2902 = vunpack.c.l.b16 %v2562
    %v2903 = vunpack.c.h.b16 %v2562
    %v2904 = vunpack.c.l.b16 %v2563
    %v2905 = vunpack.c.h.b16 %v2563
    %v2906 = vunpack.c.l.b16 %v2564
    %v2907 = vunpack.c.h.b16 %v2564
    %v2908 = vunpack.c.l.b16 %v2565
    %v2909 = vunpack.c.h.b16 %v2565
    %v2910 = vunpack.c.l.b16 %v2566
    %v2911 = vunpack.c.h.b16 %v2566
    %v2912 = vunpack.c.l.b16 %v2567
    %v2913 = vunpack.c.h.b16 %v2567
    %v2914 = vunpack.c.l.b16 %v2568
    %v2915 = vunpack.c.h.b16 %v2568
    %v2916 = vunpack.c.l.b16 %v2569
    %v2917 = vunpack.c.h.b16 %v2569
    %v2918 = vunpack.c.l.b16 %v2570
    %v2919 = vunpack.c.h.b16 %v2570
    %v2920 = vunpack.c.l.b16 %v2571
    %v2921 = vunpack.c.h.b16 %v2571
    %v2922 = vunpack.c.l.b16 %v2572
    %v2923 = vunpack.c.h.b16 %v2572
    %v2924 = vunpack.c.l.b16 %v2573
    %v2925 = vunpack.c.h.b16 %v2573
    %v2926 = vunpack.c.l.b16 %v2574
    %v2927 = vunpack.c.h.b16 %v2574
    %v2928 = vunpack.c.l.b16 %v2575
    %v2929 = vunpack.c.h.b16 %v2575
    %v2930 = vunpack.c.l.b16 %v2576
    %v2931 = vunpack.c.h.b16 %v2576
    %v2932 = vunpack.c.l.b16 %v2577
    %v2933 = vunpack.c.h.b16 %v2577
    %v2934 = vunpack.c.l.b16 %v2578
    %v2935 = vunpack.c.h.b16 %v2578
    %v2936 = vunpack.c.l.b16 %v2579
    %v2937 = vunpack.c.h.b16 %v2579
    %v2938 = vunpack.c.l.b16 %v2580
    %v2939 = vunpack.c.h.b16 %v2580
    %v2940 = vunpack.c.l.b16 %v2581
    %v2941 = vunpack.c.h.b16 %v2581
    %v2942 = vunpack.c.l.b16 %v2582
    %v2943 = vunpack.c.h.b16 %v2582
    %v2944 = vunpack.c.l.b16 %v2583
    %v2945 = vunpack.c.h.b16 %v2583
    %v2946 = vunpack.c.l.b16 %v2584
    %v2947 = vunpack.c.h.b16 %v2584
    %v2948 = vunpack.c.l.b16 %v2585
    %v2949 = vunpack.c.h.b16 %v2585
    %v2950 = vunpack.c.l.b16 %v2586
    %v2951 = vunpack.c.h.b16 %v2586
    %v2952 = vunpack.c.l.b16 %v2587
    %v2953 = vunpack.c.h.b16 %v2587
    %v2954 = vunpack.c.l.b16 %v2588
    %v2955 = vunpack.c.h.b16 %v2588
    %v2956 = vunpack.c.l.b16 %v2589
    %v2957 = vunpack.c.h.b16 %v2589
    %v2958 = vunpack.c.l.b16 %v2590
    %v2959 = vunpack.c.h.b16 %v2590
    %v2960 = vunpack.c.l.b16 %v2591
    %v2961 = vunpack.c.h.b16 %v2591
    %v2962 = vunpack.c.l.b16 %v2592
    %v2963 = vunpack.c.h.b16 %v2592
    %v2964 = vunpack.c.l.b16 %v2593
    %v2965 = vunpack.c.h.b16 %v2593
    %v2966 = vunpack.c.l.b16 %v2594
    %v2967 = vunpack.c.h.b16 %v2594
    %v2968 = vunpack.c.l.b16 %v2595
    %v2969 = vunpack.c.h.b16 %v2595
    %v2970 = vunpack.c.l.b16 %v2596
    %v2971 = vunpack.c.h.b16 %v2596
    %v2972 = vunpack.c.l.b16 %v2597
    %v2973 = vunpack.c.h.b16 %v2597
    %v2974 = vunpack.c.l.b16 %v2598
    %v2975 = vunpack.c.h.b16 %v2598
    %v2976 = vunpack.c.l.b16 %v2599
    %v2977 = vunpack.c.h.b16 %v2599
    %v2978 = vunpack.c.l.b16 %v2600
    %v2979 = vunpack.c.h.b16 %v2600
    %v2980 = vunpack.c.l.b16 %v2601
    %v2981 = vunpack.c.h.b16 %v2601
    %v2982 = vunpack.c.l.b16 %v2602
    %v2983 = vunpack.c.h.b16 %v2602
    %v2984 = vunpack.c.l.b16 %v2603
    %v2985 = vunpack.c.h.b16 %v2603
    %v2986 = vunpack.c.l.b16 %v2604
    %v2987 = vunpack.c.h.b16 %v2604
    %v2988 = vunpack.c.l.b16 %v2605
    %v2989 = vunpack.c.h.b16 %v2605
    %v2990 = vunpack.c.l.b16 %v2606
    %v2991 = vunpack.c.h.b16 %v2606
    %v2992 = vunpack.c.l.b16 %v2607
    %v2993 = vunpack.c.h.b16 %v2607
    %v2994 = vunpack.c.l.b16 %v2608
    %v2995 = vunpack.c.h.b16 %v2608
    %v2996 = vunpack.c.l.b16 %v2609
    %v2997 = vunpack.c.h.b16 %v2609
    %v2998 = vunpack.c.l.b16 %v2610
    %v2999 = vunpack.c.h.b16 %v2610
    %v3000 = vunpack.c.l.b16 %v2611
    %v3001 = vunpack.c.h.b16 %v2611
    %v3002 = vunpack.c.l.b16 %v2612
    %v3003 = vunpack.c.h.b16 %v2612
    %v3004 = vunpack.c.l.b16 %v2613
    %v3005 = vunpack.c.h.b16 %v2613
    %v3006 = vunpack.c.l.b16 %v2614
    %v3007 = vunpack.c.h.b16 %v2614
    %v3008 = vunpack.c.l.b16 %v2615
    %v3009 = vunpack.c.h.b16 %v2615
    %v3010 = vunpack.c.l.b16 %v2616
    %v3011 = vunpack.c.h.b16 %v2616
    %v3012 = vunpack.c.l.b16 %v2617
    %v3013 = vunpack.c.h.b16 %v2617
    %v3014 = vunpack.c.l.b16 %v2618
    %v3015 = vunpack.c.h.b16 %v2618
    %v3016 = vunpack.c.l.b16 %v2619
    %v3017 = vunpack.c.h.b16 %v2619
    %v3018 = vunpack.c.l.b16 %v2620
    %v3019 = vunpack.c.h.b16 %v2620
    %v3020 = vunpack.c.l.b16 %v2621
    %v3021 = vunpack.c.h.b16 %v2621
    %v3022 = vunpack.c.l.b16 %v2622
    %v3023 = vunpack.c.h.b16 %v2622
    %v3024 = vunpack.c.l.b16 %v2623
    %v3025 = vunpack.c.h.b16 %v2623
    %v3026 = vunpack.c.l.b16 %v2624
    %v3027 = vunpack.c.h.b16 %v2624
    %v3028 = vunpack.c.l.b16 %v2625
    %v3029 = vunpack.c.h.b16 %v2625
    %v3030 = vunpack.c.l.b16 %v2626
    %v3031 = vunpack.c.h.b16 %v2626
    %v3032 = vunpack.c.l.b16 %v2627
    %v3033 = vunpack.c.h.b16 %v2627
    %v3034 = vpack.c.b16 %v2782, %v2778
    %v3035 = vpack.c.b16 %v2783, %v2779
    %v3036 = vpack.c.b16 %v2784, %v2780
    %v3037 = vpack.c.b16 %v2785, %v2781
    %v3038 = vpack.c.b16 %v2790, %v2786
    %v3039 = vpack.c.b16 %v2791, %v2787
    %v3040 = vpack.c.b16 %v2792, %v2788
    %v3041 = vpack.c.b16 %v2793, %v2789
    %v3042 = vpack.c.b16 %v2798, %v2794
    %v3043 = vpack.c.b16 %v2799, %v2795
    %v3044 = vpack.c.b16 %v2800, %v2796
    %v3045 = vpack.c.b16 %v2801, %v2797
    %v3046 = vpack.c.b16 %v2806, %v2802
    %v3047 = vpack.c.b16 %v2807, %v2803
    %v3048 = vpack.c.b16 %v2808, %v2804
    %v3049 = vpack.c.b16 %v2809, %v2805
    %v3050 = vpack.c.b16 %v2814, %v2810
    %v3051 = vpack.c.b16 %v2815, %v2811
    %v3052 = vpack.c.b16 %v2816, %v2812
    %v3053 = vpack.c.b16 %v2817, %v2813
    %v3054 = vpack.c.b16 %v2822, %v2818
    %v3055 = vpack.c.b16 %v2823, %v2819
    %v3056 = vpack.c.b16 %v2824, %v2820
    %v3057 = vpack.c.b16 %v2825, %v2821
    %v3058 = vpack.c.b16 %v2830, %v2826
    %v3059 = vpack.c.b16 %v2831, %v2827
    %v3060 = vpack.c.b16 %v2832, %v2828
    %v3061 = vpack.c.b16 %v2833, %v2829
    %v3062 = vpack.c.b16 %v2838, %v2834
    %v3063 = vpack.c.b16 %v2839, %v2835
    %v3064 = vpack.c.b16 %v2840, %v2836
    %v3065 = vpack.c.b16 %v2841, %v2837
    %v3066 = vpack.c.b16 %v2846, %v2842
    %v3067 = vpack.c.b16 %v2847, %v2843
    %v3068 = vpack.c.b16 %v2848, %v2844
    %v3069 = vpack.c.b16 %v2849, %v2845
    %v3070 = vpack.c.b16 %v2854, %v2850
    %v3071 = vpack.c.b16 %v2855, %v2851
    %v3072 = vpack.c.b16 %v2856, %v2852
    %v3073 = vpack.c.b16 %v2857, %v2853
    %v3074 = vpack.c.b16 %v2862, %v2858
    %v3075 = vpack.c.b16 %v2863, %v2859
    %v3076 = vpack.c.b16 %v2864, %v2860
    %v3077 = vpack.c.b16 %v2865, %v2861
    %v3078 = vpack.c.b16 %v2870, %v2866
    %v3079 = vpack.c.b16 %v2871, %v2867
    %v3080 = vpack.c.b16 %v2872, %v2868
    %v3081 = vpack.c.b16 %v2873, %v2869
    %v3082 = vpack.c.b16 %v2878, %v2874
    %v3083 = vpack.c.b16 %v2879, %v2875
    %v3084 = vpack.c.b16 %v2880, %v2876
    %v3085 = vpack.c.b16 %v2881, %v2877
    %v3086 = vpack.c.b16 %v2886, %v2882
    %v3087 = vpack.c.b16 %v2887, %v2883
    %v3088 = vpack.c.b16 %v2888, %v2884
    %v3089 = vpack.c.b16 %v2889, %v2885
    %v3090 = vpack.c.b16 %v2894, %v2890
    %v3091 = vpack.c.b16 %v2895, %v2891
    %v3092 = vpack.c.b16 %v2896, %v2892
    %v3093 = vpack.c.b16 %v2897, %v2893
    %v3094 = vpack.c.b16 %v2902, %v2898
    %v3095 = vpack.c.b16 %v2903, %v2899
    %v3096 = vpack.c.b16 %v2904, %v2900
    %v3097 = vpack.c.b16 %v2905, %v2901
    %v3098 = vpack.c.b16 %v2910, %v2906
    %v3099 = vpack.c.b16 %v2911, %v2907
    %v3100 = vpack.c.b16 %v2912, %v2908
    %v3101 = vpack.c.b16 %v2913, %v2909
    %v3102 = vpack.c.b16 %v2918, %v2914
    %v3103 = vpack.c.b16 %v2919, %v2915
    %v3104 = vpack.c.b16 %v2920, %v2916
    %v3105 = vpack.c.b16 %v2921, %v2917
    %v3106 = vpack.c.b16 %v2926, %v2922
    %v3107 = vpack.c.b16 %v2927, %v2923
    %v3108 = vpack.c.b16 %v2928, %v2924
    %v3109 = vpack.c.b16 %v2929, %v2925
    %v3110 = vpack.c.b16 %v2934, %v2930
    %v3111 = vpack.c.b16 %v2935, %v2931
    %v3112 = vpack.c.b16 %v2936, %v2932
    %v3113 = vpack.c.b16 %v2937, %v2933
    %v3114 = vpack.c.b16 %v2942, %v2938
    %v3115 = vpack.c.b16 %v2943, %v2939
    %v3116 = vpack.c.b16 %v2944, %v2940
    %v3117 = vpack.c.b16 %v2945, %v2941
    %v3118 = vpack.c.b16 %v2950, %v2946
    %v3119 = vpack.c.b16 %v2951, %v2947
    %v3120 = vpack.c.b16 %v2952, %v2948
    %v3121 = vpack.c.b16 %v2953, %v2949
    %v3122 = vpack.c.b16 %v2958, %v2954
    %v3123 = vpack.c.b16 %v2959, %v2955
    %v3124 = vpack.c.b16 %v2960, %v2956
    %v3125 = vpack.c.b16 %v2961, %v2957
    %v3126 = vpack.c.b16 %v2966, %v2962
    %v3127 = vpack.c.b16 %v2967, %v2963
    %v3128 = vpack.c.b16 %v2968, %v2964
    %v3129 = vpack.c.b16 %v2969, %v2965
    %v3130 = vpack.c.b16 %v2974, %v2970
    %v3131 = vpack.c.b16 %v2975, %v2971
    %v3132 = vpack.c.b16 %v2976, %v2972
    %v3133 = vpack.c.b16 %v2977, %v2973
    %v3134 = vpack.c.b16 %v2982, %v2978
    %v3135 = vpack.c.b16 %v2983, %v2979
    %v3136 = vpack.c.b16 %v2984, %v2980
    %v3137 = vpack.c.b16 %v2985, %v2981
    %v3138 = vpack.c.b16 %v2990, %v2986
    %v3139 = vpack.c.b16 %v2991, %v2987
    %v3140 = vpack.c.b16 %v2992, %v2988
    %v3141 = vpack.c.b16 %v2993, %v2989
    %v3142 = vpack.c.b16 %v2998, %v2994
    %v3143 = vpack.c.b16 %v2999, %v2995
    %v3144 = vpack.c.b16 %v3000, %v2996
    %v3145 = vpack.c.b16 %v3001, %v2997
    %v3146 = vpack.c.b16 %v3006, %v3002
    %v3147 = vpack.c.b16 %v3007, %v3003
    %v3148 = vpack.c.b16 %v3008, %v3004
    %v3149 = vpack.c.b16 %v3009, %v3005
    %v3150 = vpack.c.b16 %v3014, %v3010
    %v3151 = vpack.c.b16 %v3015, %v3011
    %v3152 = vpack.c.b16 %v3016, %v3012
    %v3153 = vpack.c.b16 %v3017, %v3013
    %v3154 = vpack.c.b16 %v3022, %v3018
    %v3155 = vpack.c.b16 %v3023, %v3019
    %v3156 = vpack.c.b16 %v3024, %v3020
    %v3157 = vpack.c.b16 %v3025, %v3021
    %v3158 = vpack.c.b16 %v3030, %v3026
    %v3159 = vpack.c.b16 %v3031, %v3027
    %v3160 = vpack.c.b16 %v3032, %v3028
    %v3161 = vpack.c.b16 %v3033, %v3029
    %3290 = vmatprep.subr.bf16.mxu0 %v3035
    %3291 = vmatpush1.bf16.msra.mxu0 %v3034
    %3292 = vmatprep.subr.bf16.mxu0 %v3039
    %3293 = vmatpush1.bf16.msra.mxu0 %v3038
    %3294 = vmatprep.subr.bf16.mxu0 %v3043
    %3295 = vmatpush1.bf16.msra.mxu0 %v3042
    %3296 = vmatprep.subr.bf16.mxu0 %v3047
    %3297 = vmatpush1.bf16.msra.mxu0 %v3046
    %3298 = vmatprep.subr.bf16.mxu0 %v3051
    %3299 = vmatpush1.bf16.msra.mxu0 %v3050
    %3300 = vmatprep.subr.bf16.mxu0 %v3055
    %3301 = vmatpush1.bf16.msra.mxu0 %v3054
    %3302 = vmatprep.subr.bf16.mxu0 %v3059
    %3303 = vmatpush1.bf16.msra.mxu0 %v3058
    %3304 = vmatprep.subr.bf16.mxu0 %v3063
    %3305 = vmatpush1.bf16.msra.mxu0 %v3062
    %3306 = vmatprep.subr.bf16.mxu0 %v3067
    %3307 = vmatpush1.bf16.msra.mxu0 %v3066
    %3308 = vmatprep.subr.bf16.mxu0 %v3071
    %3309 = vmatpush1.bf16.msra.mxu0 %v3070
    %3310 = vmatprep.subr.bf16.mxu0 %v3075
    %3311 = vmatpush1.bf16.msra.mxu0 %v3074
    %3312 = vmatprep.subr.bf16.mxu0 %v3079
    %3313 = vmatpush1.bf16.msra.mxu0 %v3078
    %3314 = vmatprep.subr.bf16.mxu0 %v3083
    %3315 = vmatpush1.bf16.msra.mxu0 %v3082
    %3316 = vmatprep.subr.bf16.mxu0 %v3087
    %3317 = vmatpush1.bf16.msra.mxu0 %v3086
    %3318 = vmatprep.subr.bf16.mxu0 %v3091
    %3319 = vmatpush1.bf16.msra.mxu0 %v3090
    %3320 = vmatprep.subr.bf16.mxu0 %v3095
    %3321 = vmatpush1.bf16.msra.mxu0 %v3094
    %3322 = vmatprep.mubr.bf16.mxu0 %v2497
    %3323 = vmatmul.mubr.bf16.gmra.mrb[0].mxu0 %v2496
    %v3324 = vpop.f32.mrb[0].mxu0
    %v3325 = vadd.f32 %v2633, %v3324
    %v3326 = vpop.f32.mrb[0].mxu0
    %v3327 = vadd.f32 %v2637, %v3326
    %v3328 = vpop.f32.mrb[0].mxu0
    %v3329 = vadd.f32 %v2633, %v3328
    %v3330 = vpop.f32.mrb[0].mxu0
    %v3331 = vadd.f32 %v2637, %v3330
    %3332 = vdwg.mxu0
    %3333 = vmatprep.subr.bf16.mxu0 %v3099
    %3334 = vmatpush1.bf16.msra.mxu0 %v3098
    %3335 = vmatprep.subr.bf16.mxu0 %v3103
    %3336 = vmatpush1.bf16.msra.mxu0 %v3102
    %3337 = vmatprep.subr.bf16.mxu0 %v3107
    %3338 = vmatpush1.bf16.msra.mxu0 %v3106
    %3339 = vmatprep.subr.bf16.mxu0 %v3111
    %3340 = vmatpush1.bf16.msra.mxu0 %v3110
    %3341 = vmatprep.subr.bf16.mxu0 %v3115
    %3342 = vmatpush1.bf16.msra.mxu0 %v3114
    %3343 = vmatprep.subr.bf16.mxu0 %v3119
    %3344 = vmatpush1.bf16.msra.mxu0 %v3118
    %3345 = vmatprep.subr.bf16.mxu0 %v3123
    %3346 = vmatpush1.bf16.msra.mxu0 %v3122
    %3347 = vmatprep.subr.bf16.mxu0 %v3127
    %3348 = vmatpush1.bf16.msra.mxu0 %v3126
    %3349 = vmatprep.subr.bf16.mxu0 %v3131
    %3350 = vmatpush1.bf16.msra.mxu0 %v3130
    %3351 = vmatprep.subr.bf16.mxu0 %v3135
    %3352 = vmatpush1.bf16.msra.mxu0 %v3134
    %3353 = vmatprep.subr.bf16.mxu0 %v3139
    %3354 = vmatpush1.bf16.msra.mxu0 %v3138
    %3355 = vmatprep.subr.bf16.mxu0 %v3143
    %3356 = vmatpush1.bf16.msra.mxu0 %v3142
    %3357 = vmatprep.subr.bf16.mxu0 %v3147
    %3358 = vmatpush1.bf16.msra.mxu0 %v3146
    %3359 = vmatprep.subr.bf16.mxu0 %v3151
    %3360 = vmatpush1.bf16.msra.mxu0 %v3150
    %3361 = vmatprep.subr.bf16.mxu0 %v3155
    %3362 = vmatpush1.bf16.msra.mxu0 %v3154
    %3363 = vmatprep.subr.bf16.mxu0 %v3159
    %3364 = vmatpush1.bf16.msra.mxu0 %v3158
    %3365 = vmatprep.mubr.bf16.mxu0 %v2499
    %3366 = vmatmul.mubr.bf16.gmra.mrb[0].mxu0 %v2498
    %v3367 = vpop.f32.mrb[0].mxu0
    %v3368 = vadd.f32 %v3325, %v3367
    %v3369 = vpop.f32.mrb[0].mxu0
    %v3370 = vadd.f32 %v3327, %v3369
    %v3371 = vpop.f32.mrb[0].mxu0
    %v3372 = vadd.f32 %v3329, %v3371
    %v3373 = vpop.f32.mrb[0].mxu0
    %v3374 = vadd.f32 %v3331, %v3373
    %3375 = vdwg.mxu0
    %3376 = vmatprep.subr.bf16.mxu0 %v3037
    %3377 = vmatpush1.bf16.msra.mxu0 %v3036
    %3378 = vmatprep.subr.bf16.mxu0 %v3041
    %3379 = vmatpush1.bf16.msra.mxu0 %v3040
    %3380 = vmatprep.subr.bf16.mxu0 %v3045
    %3381 = vmatpush1.bf16.msra.mxu0 %v3044
    %3382 = vmatprep.subr.bf16.mxu0 %v3049
    %3383 = vmatpush1.bf16.msra.mxu0 %v3048
    %3384 = vmatprep.subr.bf16.mxu0 %v3053
    %3385 = vmatpush1.bf16.msra.mxu0 %v3052
    %3386 = vmatprep.subr.bf16.mxu0 %v3057
    %3387 = vmatpush1.bf16.msra.mxu0 %v3056
    %3388 = vmatprep.subr.bf16.mxu0 %v3061
    %3389 = vmatpush1.bf16.msra.mxu0 %v3060
    %3390 = vmatprep.subr.bf16.mxu0 %v3065
    %3391 = vmatpush1.bf16.msra.mxu0 %v3064
    %3392 = vmatprep.subr.bf16.mxu0 %v3069
    %3393 = vmatpush1.bf16.msra.mxu0 %v3068
    %3394 = vmatprep.subr.bf16.mxu0 %v3073
    %3395 = vmatpush1.bf16.msra.mxu0 %v3072
    %3396 = vmatprep.subr.bf16.mxu0 %v3077
    %3397 = vmatpush1.bf16.msra.mxu0 %v3076
    %3398 = vmatprep.subr.bf16.mxu0 %v3081
    %3399 = vmatpush1.bf16.msra.mxu0 %v3080
    %3400 = vmatprep.subr.bf16.mxu0 %v3085
    %3401 = vmatpush1.bf16.msra.mxu0 %v3084
    %3402 = vmatprep.subr.bf16.mxu0 %v3089
    %3403 = vmatpush1.bf16.msra.mxu0 %v3088
    %3404 = vmatprep.subr.bf16.mxu0 %v3093
    %3405 = vmatpush1.bf16.msra.mxu0 %v3092
    %3406 = vmatprep.subr.bf16.mxu0 %v3097
    %3407 = vmatpush1.bf16.msra.mxu0 %v3096
    %3408 = vmatprep.mubr.bf16.mxu0 %v2497
    %3409 = vmatmul.mubr.bf16.gmra.mrb[0].mxu0 %v2496
    %v3410 = vpop.f32.mrb[0].mxu0
    %v3411 = vadd.f32 %v2641, %v3410
    %v3412 = vpop.f32.mrb[0].mxu0
    %v3413 = vadd.f32 %v2645, %v3412
    %v3414 = vpop.f32.mrb[0].mxu0
    %v3415 = vadd.f32 %v2641, %v3414
    %v3416 = vpop.f32.mrb[0].mxu0
    %v3417 = vadd.f32 %v2645, %v3416
    %3418 = vdwg.mxu0
    %3419 = vmatprep.subr.bf16.mxu0 %v3101
    %3420 = vmatpush1.bf16.msra.mxu0 %v3100
    %3421 = vmatprep.subr.bf16.mxu0 %v3105
    %3422 = vmatpush1.bf16.msra.mxu0 %v3104
    %3423 = vmatprep.subr.bf16.mxu0 %v3109
    %3424 = vmatpush1.bf16.msra.mxu0 %v3108
    %3425 = vmatprep.subr.bf16.mxu0 %v3113
    %3426 = vmatpush1.bf16.msra.mxu0 %v3112
    %3427 = vmatprep.subr.bf16.mxu0 %v3117
    %3428 = vmatpush1.bf16.msra.mxu0 %v3116
    %3429 = vmatprep.subr.bf16.mxu0 %v3121
    %3430 = vmatpush1.bf16.msra.mxu0 %v3120
    %3431 = vmatprep.subr.bf16.mxu0 %v3125
    %3432 = vmatpush1.bf16.msra.mxu0 %v3124
    %3433 = vmatprep.subr.bf16.mxu0 %v3129
    %3434 = vmatpush1.bf16.msra.mxu0 %v3128
    %3435 = vmatprep.subr.bf16.mxu0 %v3133
    %3436 = vmatpush1.bf16.msra.mxu0 %v3132
    %3437 = vmatprep.subr.bf16.mxu0 %v3137
    %3438 = vmatpush1.bf16.msra.mxu0 %v3136
    %3439 = vmatprep.subr.bf16.mxu0 %v3141
    %3440 = vmatpush1.bf16.msra.mxu0 %v3140
    %3441 = vmatprep.subr.bf16.mxu0 %v3145
    %3442 = vmatpush1.bf16.msra.mxu0 %v3144
    %3443 = vmatprep.subr.bf16.mxu0 %v3149
    %3444 = vmatpush1.bf16.msra.mxu0 %v3148
    %3445 = vmatprep.subr.bf16.mxu0 %v3153
    %3446 = vmatpush1.bf16.msra.mxu0 %v3152
    %3447 = vmatprep.subr.bf16.mxu0 %v3157
    %3448 = vmatpush1.bf16.msra.mxu0 %v3156
    %3449 = vmatprep.subr.bf16.mxu0 %v3161
    %3450 = vmatpush1.bf16.msra.mxu0 %v3160
    %3451 = vmatprep.mubr.bf16.mxu0 %v2499
    %3452 = vmatmul.mubr.bf16.gmra.mrb[0].mxu0 %v2498
    %v3453 = vpop.f32.mrb[0].mxu0
    %v3454 = vadd.f32 %v3411, %v3453
    %v3455 = vpop.f32.mrb[0].mxu0
    %v3456 = vadd.f32 %v3413, %v3455
    %v3457 = vpop.f32.mrb[0].mxu0
    %v3458 = vadd.f32 %v3415, %v3457
    %v3459 = vpop.f32.mrb[0].mxu0
    %v3460 = vadd.f32 %v3417, %v3459
    %3461 = vdwg.mxu0
    %v3462 = vmul.f32 %v3368, 0.2
    %v3463 = vmul.f32 %v3370, 0.2
    %v3464 = vmul.f32 %v3454, 0.2
    %v3465 = vmul.f32 %v3456, 0.2
    %v3466 = vmul.f32 %v3372, 0.2
    %v3467 = vmul.f32 %v3374, 0.2
    %v3468 = vmul.f32 %v3458, 0.2
    %v3469 = vmul.f32 %v3460, 0.2
    %v3470 = vmax.f32 %v3368, %v3462
    %v3471 = vmax.f32 %v3370, %v3463
    %v3472 = vmax.f32 %v3454, %v3464
    %v3473 = vmax.f32 %v3456, %v3465
    %v3474 = vmax.f32 %v3372, %v3466
    %v3475 = vmax.f32 %v3374, %v3467
    %v3476 = vmax.f32 %v3458, %v3468
    %v3477 = vmax.f32 %v3460, %v3469
    %v3478 = vpack.c.bf16 %v3474, %v3470
    %v3479 = vpack.c.bf16 %v3475, %v3471
    %v3480 = vpack.c.bf16 %v3476, %v3472
    %v3481 = vpack.c.bf16 %v3477, %v3473
    %v3482 = vld [vmem:[#allocation10] sm:$0xff]
    %v3483 = vld [vmem:[#allocation10 + $0x8] sm:$0xff]
    %v3484 = vld [vmem:[#allocation10 + $0x10] sm:$0xff]
    %v3485 = vld [vmem:[#allocation10 + $0x18] sm:$0xff]
    %v3486 = vld [vmem:[#allocation10 + $0x20] sm:$0xff]
    %v3487 = vld [vmem:[#allocation10 + $0x28] sm:$0xff]
    %v3488 = vld [vmem:[#allocation10 + $0x30] sm:$0xff]
    %v3489 = vld [vmem:[#allocation10 + $0x38] sm:$0xff]
    %v3490 = vld [vmem:[#allocation10 + $0x40] sm:$0xff]
    %v3491 = vld [vmem:[#allocation10 + $0x48] sm:$0xff]
    %v3492 = vld [vmem:[#allocation10 + $0x50] sm:$0xff]
    %v3493 = vld [vmem:[#allocation10 + $0x58] sm:$0xff]
    %v3494 = vld [vmem:[#allocation10 + $0x60] sm:$0xff]
    %v3495 = vld [vmem:[#allocation10 + $0x68] sm:$0xff]
    %v3496 = vld [vmem:[#allocation10 + $0x70] sm:$0xff]
    %v3497 = vld [vmem:[#allocation10 + $0x78] sm:$0xff]
    %v3498 = vld [vmem:[#allocation10 + $0x80] sm:$0xff]
    %v3499 = vld [vmem:[#allocation10 + $0x88] sm:$0xff]
    %v3500 = vld [vmem:[#allocation10 + $0x90] sm:$0xff]
    %v3501 = vld [vmem:[#allocation10 + $0x98] sm:$0xff]
    %v3502 = vld [vmem:[#allocation10 + $0xa0] sm:$0xff]
    %v3503 = vld [vmem:[#allocation10 + $0xa8] sm:$0xff]
    %v3504 = vld [vmem:[#allocation10 + $0xb0] sm:$0xff]
    %v3505 = vld [vmem:[#allocation10 + $0xb8] sm:$0xff]
    %v3506 = vld [vmem:[#allocation10 + $0xc0] sm:$0xff]
    %v3507 = vld [vmem:[#allocation10 + $0xc8] sm:$0xff]
    %v3508 = vld [vmem:[#allocation10 + $0xd0] sm:$0xff]
    %v3509 = vld [vmem:[#allocation10 + $0xd8] sm:$0xff]
    %v3510 = vld [vmem:[#allocation10 + $0xe0] sm:$0xff]
    %v3511 = vld [vmem:[#allocation10 + $0xe8] sm:$0xff]
    %v3512 = vld [vmem:[#allocation10 + $0xf0] sm:$0xff]
    %v3513 = vld [vmem:[#allocation10 + $0xf8] sm:$0xff]
    %v3514 = vld [vmem:[#allocation10 + $0x100] sm:$0xff]
    %v3515 = vld [vmem:[#allocation10 + $0x108] sm:$0xff]
    %v3516 = vld [vmem:[#allocation10 + $0x110] sm:$0xff]
    %v3517 = vld [vmem:[#allocation10 + $0x118] sm:$0xff]
    %v3518 = vld [vmem:[#allocation10 + $0x120] sm:$0xff]
    %v3519 = vld [vmem:[#allocation10 + $0x128] sm:$0xff]
    %v3520 = vld [vmem:[#allocation10 + $0x130] sm:$0xff]
    %v3521 = vld [vmem:[#allocation10 + $0x138] sm:$0xff]
    %v3522 = vld [vmem:[#allocation10 + $0x140] sm:$0xff]
    %v3523 = vld [vmem:[#allocation10 + $0x148] sm:$0xff]
    %v3524 = vld [vmem:[#allocation10 + $0x150] sm:$0xff]
    %v3525 = vld [vmem:[#allocation10 + $0x158] sm:$0xff]
    %v3526 = vld [vmem:[#allocation10 + $0x160] sm:$0xff]
    %v3527 = vld [vmem:[#allocation10 + $0x168] sm:$0xff]
    %v3528 = vld [vmem:[#allocation10 + $0x170] sm:$0xff]
    %v3529 = vld [vmem:[#allocation10 + $0x178] sm:$0xff]
    %v3530 = vld [vmem:[#allocation10 + $0x180] sm:$0xff]
    %v3531 = vld [vmem:[#allocation10 + $0x188] sm:$0xff]
    %v3532 = vld [vmem:[#allocation10 + $0x190] sm:$0xff]
    %v3533 = vld [vmem:[#allocation10 + $0x198] sm:$0xff]
    %v3534 = vld [vmem:[#allocation10 + $0x1a0] sm:$0xff]
    %v3535 = vld [vmem:[#allocation10 + $0x1a8] sm:$0xff]
    %v3536 = vld [vmem:[#allocation10 + $0x1b0] sm:$0xff]
    %v3537 = vld [vmem:[#allocation10 + $0x1b8] sm:$0xff]
    %v3538 = vld [vmem:[#allocation10 + $0x1c0] sm:$0xff]
    %v3539 = vld [vmem:[#allocation10 + $0x1c8] sm:$0xff]
    %v3540 = vld [vmem:[#allocation10 + $0x1d0] sm:$0xff]
    %v3541 = vld [vmem:[#allocation10 + $0x1d8] sm:$0xff]
    %v3542 = vld [vmem:[#allocation10 + $0x1e0] sm:$0xff]
    %v3543 = vld [vmem:[#allocation10 + $0x1e8] sm:$0xff]
    %v3544 = vld [vmem:[#allocation10 + $0x1f0] sm:$0xff]
    %v3545 = vld [vmem:[#allocation10 + $0x1f8] sm:$0xff]
    %v3546 = vld [vmem:[#allocation10 + $0x200] sm:$0xff]
    %v3547 = vld [vmem:[#allocation10 + $0x208] sm:$0xff]
    %v3548 = vld [vmem:[#allocation10 + $0x210] sm:$0xff]
    %v3549 = vld [vmem:[#allocation10 + $0x218] sm:$0xff]
    %v3550 = vld [vmem:[#allocation10 + $0x220] sm:$0xff]
    %v3551 = vld [vmem:[#allocation10 + $0x228] sm:$0xff]
    %v3552 = vld [vmem:[#allocation10 + $0x230] sm:$0xff]
    %v3553 = vld [vmem:[#allocation10 + $0x238] sm:$0xff]
    %v3554 = vld [vmem:[#allocation10 + $0x240] sm:$0xff]
    %v3555 = vld [vmem:[#allocation10 + $0x248] sm:$0xff]
    %v3556 = vld [vmem:[#allocation10 + $0x250] sm:$0xff]
    %v3557 = vld [vmem:[#allocation10 + $0x258] sm:$0xff]
    %v3558 = vld [vmem:[#allocation10 + $0x260] sm:$0xff]
    %v3559 = vld [vmem:[#allocation10 + $0x268] sm:$0xff]
    %v3560 = vld [vmem:[#allocation10 + $0x270] sm:$0xff]
    %v3561 = vld [vmem:[#allocation10 + $0x278] sm:$0xff]
    %v3562 = vld [vmem:[#allocation10 + $0x280] sm:$0xff]
    %v3563 = vld [vmem:[#allocation10 + $0x288] sm:$0xff]
    %v3564 = vld [vmem:[#allocation10 + $0x290] sm:$0xff]
    %v3565 = vld [vmem:[#allocation10 + $0x298] sm:$0xff]
    %v3566 = vld [vmem:[#allocation10 + $0x2a0] sm:$0xff]
    %v3567 = vld [vmem:[#allocation10 + $0x2a8] sm:$0xff]
    %v3568 = vld [vmem:[#allocation10 + $0x2b0] sm:$0xff]
    %v3569 = vld [vmem:[#allocation10 + $0x2b8] sm:$0xff]
    %v3570 = vld [vmem:[#allocation10 + $0x2c0] sm:$0xff]
    %v3571 = vld [vmem:[#allocation10 + $0x2c8] sm:$0xff]
    %v3572 = vld [vmem:[#allocation10 + $0x2d0] sm:$0xff]
    %v3573 = vld [vmem:[#allocation10 + $0x2d8] sm:$0xff]
    %v3574 = vld [vmem:[#allocation10 + $0x2e0] sm:$0xff]
    %v3575 = vld [vmem:[#allocation10 + $0x2e8] sm:$0xff]
    %v3576 = vld [vmem:[#allocation10 + $0x2f0] sm:$0xff]
    %v3577 = vld [vmem:[#allocation10 + $0x2f8] sm:$0xff]
    %v3578 = vld [vmem:[#allocation10 + $0x300] sm:$0xff]
    %v3579 = vld [vmem:[#allocation10 + $0x308] sm:$0xff]
    %v3580 = vld [vmem:[#allocation10 + $0x310] sm:$0xff]
    %v3581 = vld [vmem:[#allocation10 + $0x318] sm:$0xff]
    %v3582 = vld [vmem:[#allocation10 + $0x320] sm:$0xff]
    %v3583 = vld [vmem:[#allocation10 + $0x328] sm:$0xff]
    %v3584 = vld [vmem:[#allocation10 + $0x330] sm:$0xff]
    %v3585 = vld [vmem:[#allocation10 + $0x338] sm:$0xff]
    %v3586 = vld [vmem:[#allocation10 + $0x340] sm:$0xff]
    %v3587 = vld [vmem:[#allocation10 + $0x348] sm:$0xff]
    %v3588 = vld [vmem:[#allocation10 + $0x350] sm:$0xff]
    %v3589 = vld [vmem:[#allocation10 + $0x358] sm:$0xff]
    %v3590 = vld [vmem:[#allocation10 + $0x360] sm:$0xff]
    %v3591 = vld [vmem:[#allocation10 + $0x368] sm:$0xff]
    %v3592 = vld [vmem:[#allocation10 + $0x370] sm:$0xff]
    %v3593 = vld [vmem:[#allocation10 + $0x378] sm:$0xff]
    %v3594 = vld [vmem:[#allocation10 + $0x380] sm:$0xff]
    %v3595 = vld [vmem:[#allocation10 + $0x388] sm:$0xff]
    %v3596 = vld [vmem:[#allocation10 + $0x390] sm:$0xff]
    %v3597 = vld [vmem:[#allocation10 + $0x398] sm:$0xff]
    %v3598 = vld [vmem:[#allocation10 + $0x3a0] sm:$0xff]
    %v3599 = vld [vmem:[#allocation10 + $0x3a8] sm:$0xff]
    %v3600 = vld [vmem:[#allocation10 + $0x3b0] sm:$0xff]
    %v3601 = vld [vmem:[#allocation10 + $0x3b8] sm:$0xff]
    %v3602 = vld [vmem:[#allocation10 + $0x3c0] sm:$0xff]
    %v3603 = vld [vmem:[#allocation10 + $0x3c8] sm:$0xff]
    %v3604 = vld [vmem:[#allocation10 + $0x3d0] sm:$0xff]
    %v3605 = vld [vmem:[#allocation10 + $0x3d8] sm:$0xff]
    %v3606 = vld [vmem:[#allocation10 + $0x3e0] sm:$0xff]
    %v3607 = vld [vmem:[#allocation10 + $0x3e8] sm:$0xff]
    %v3608 = vld [vmem:[#allocation10 + $0x3f0] sm:$0xff]
    %v3609 = vld [vmem:[#allocation10 + $0x3f8] sm:$0xff]
    %v3610 = vld [vmem:[%s7] sm:$0xf]
    %v3612 = vlaneseq
    %v3613 = vshrl.u32 %v3612, 7
    %v3614 = vsub.s32 0, %v3613
    %v3615 = vrot.slane %v3610, %v3614
    %v3616 = vlaneseq
    %v3617 = vshrl.u32 %v3616, 7
    %v3618 = vsub.s32 1, %v3617
    %v3619 = vrot.slane %v3610, %v3618
    %v3620 = vlaneseq
    %v3621 = vshrl.u32 %v3620, 7
    %v3622 = vsub.s32 2, %v3621
    %v3623 = vrot.slane %v3610, %v3622
    %v3624 = vlaneseq
    %v3625 = vshrl.u32 %v3624, 7
    %v3626 = vsub.s32 3, %v3625
    %v3627 = vrot.slane %v3610, %v3626
    %v3760 = vunpack.c.l.b16 %v3482
    %v3761 = vunpack.c.h.b16 %v3482
    %v3762 = vunpack.c.l.b16 %v3483
    %v3763 = vunpack.c.h.b16 %v3483
    %v3764 = vunpack.c.l.b16 %v3484
    %v3765 = vunpack.c.h.b16 %v3484
    %v3766 = vunpack.c.l.b16 %v3485
    %v3767 = vunpack.c.h.b16 %v3485
    %v3768 = vunpack.c.l.b16 %v3486
    %v3769 = vunpack.c.h.b16 %v3486
    %v3770 = vunpack.c.l.b16 %v3487
    %v3771 = vunpack.c.h.b16 %v3487
    %v3772 = vunpack.c.l.b16 %v3488
    %v3773 = vunpack.c.h.b16 %v3488
    %v3774 = vunpack.c.l.b16 %v3489
    %v3775 = vunpack.c.h.b16 %v3489
    %v3776 = vunpack.c.l.b16 %v3490
    %v3777 = vunpack.c.h.b16 %v3490
    %v3778 = vunpack.c.l.b16 %v3491
    %v3779 = vunpack.c.h.b16 %v3491
    %v3780 = vunpack.c.l.b16 %v3492
    %v3781 = vunpack.c.h.b16 %v3492
    %v3782 = vunpack.c.l.b16 %v3493
    %v3783 = vunpack.c.h.b16 %v3493
    %v3784 = vunpack.c.l.b16 %v3494
    %v3785 = vunpack.c.h.b16 %v3494
    %v3786 = vunpack.c.l.b16 %v3495
    %v3787 = vunpack.c.h.b16 %v3495
    %v3788 = vunpack.c.l.b16 %v3496
    %v3789 = vunpack.c.h.b16 %v3496
    %v3790 = vunpack.c.l.b16 %v3497
    %v3791 = vunpack.c.h.b16 %v3497
    %v3792 = vunpack.c.l.b16 %v3498
    %v3793 = vunpack.c.h.b16 %v3498
    %v3794 = vunpack.c.l.b16 %v3499
    %v3795 = vunpack.c.h.b16 %v3499
    %v3796 = vunpack.c.l.b16 %v3500
    %v3797 = vunpack.c.h.b16 %v3500
    %v3798 = vunpack.c.l.b16 %v3501
    %v3799 = vunpack.c.h.b16 %v3501
    %v3800 = vunpack.c.l.b16 %v3502
    %v3801 = vunpack.c.h.b16 %v3502
    %v3802 = vunpack.c.l.b16 %v3503
    %v3803 = vunpack.c.h.b16 %v3503
    %v3804 = vunpack.c.l.b16 %v3504
    %v3805 = vunpack.c.h.b16 %v3504
    %v3806 = vunpack.c.l.b16 %v3505
    %v3807 = vunpack.c.h.b16 %v3505
    %v3808 = vunpack.c.l.b16 %v3506
    %v3809 = vunpack.c.h.b16 %v3506
    %v3810 = vunpack.c.l.b16 %v3507
    %v3811 = vunpack.c.h.b16 %v3507
    %v3812 = vunpack.c.l.b16 %v3508
    %v3813 = vunpack.c.h.b16 %v3508
    %v3814 = vunpack.c.l.b16 %v3509
    %v3815 = vunpack.c.h.b16 %v3509
    %v3816 = vunpack.c.l.b16 %v3510
    %v3817 = vunpack.c.h.b16 %v3510
    %v3818 = vunpack.c.l.b16 %v3511
    %v3819 = vunpack.c.h.b16 %v3511
    %v3820 = vunpack.c.l.b16 %v3512
    %v3821 = vunpack.c.h.b16 %v3512
    %v3822 = vunpack.c.l.b16 %v3513
    %v3823 = vunpack.c.h.b16 %v3513
    %v3824 = vunpack.c.l.b16 %v3514
    %v3825 = vunpack.c.h.b16 %v3514
    %v3826 = vunpack.c.l.b16 %v3515
    %v3827 = vunpack.c.h.b16 %v3515
    %v3828 = vunpack.c.l.b16 %v3516
    %v3829 = vunpack.c.h.b16 %v3516
    %v3830 = vunpack.c.l.b16 %v3517
    %v3831 = vunpack.c.h.b16 %v3517
    %v3832 = vunpack.c.l.b16 %v3518
    %v3833 = vunpack.c.h.b16 %v3518
    %v3834 = vunpack.c.l.b16 %v3519
    %v3835 = vunpack.c.h.b16 %v3519
    %v3836 = vunpack.c.l.b16 %v3520
    %v3837 = vunpack.c.h.b16 %v3520
    %v3838 = vunpack.c.l.b16 %v3521
    %v3839 = vunpack.c.h.b16 %v3521
    %v3840 = vunpack.c.l.b16 %v3522
    %v3841 = vunpack.c.h.b16 %v3522
    %v3842 = vunpack.c.l.b16 %v3523
    %v3843 = vunpack.c.h.b16 %v3523
    %v3844 = vunpack.c.l.b16 %v3524
    %v3845 = vunpack.c.h.b16 %v3524
    %v3846 = vunpack.c.l.b16 %v3525
    %v3847 = vunpack.c.h.b16 %v3525
    %v3848 = vunpack.c.l.b16 %v3526
    %v3849 = vunpack.c.h.b16 %v3526
    %v3850 = vunpack.c.l.b16 %v3527
    %v3851 = vunpack.c.h.b16 %v3527
    %v3852 = vunpack.c.l.b16 %v3528
    %v3853 = vunpack.c.h.b16 %v3528
    %v3854 = vunpack.c.l.b16 %v3529
    %v3855 = vunpack.c.h.b16 %v3529
    %v3856 = vunpack.c.l.b16 %v3530
    %v3857 = vunpack.c.h.b16 %v3530
    %v3858 = vunpack.c.l.b16 %v3531
    %v3859 = vunpack.c.h.b16 %v3531
    %v3860 = vunpack.c.l.b16 %v3532
    %v3861 = vunpack.c.h.b16 %v3532
    %v3862 = vunpack.c.l.b16 %v3533
    %v3863 = vunpack.c.h.b16 %v3533
    %v3864 = vunpack.c.l.b16 %v3534
    %v3865 = vunpack.c.h.b16 %v3534
    %v3866 = vunpack.c.l.b16 %v3535
    %v3867 = vunpack.c.h.b16 %v3535
    %v3868 = vunpack.c.l.b16 %v3536
    %v3869 = vunpack.c.h.b16 %v3536
    %v3870 = vunpack.c.l.b16 %v3537
    %v3871 = vunpack.c.h.b16 %v3537
    %v3872 = vunpack.c.l.b16 %v3538
    %v3873 = vunpack.c.h.b16 %v3538
    %v3874 = vunpack.c.l.b16 %v3539
    %v3875 = vunpack.c.h.b16 %v3539
    %v3876 = vunpack.c.l.b16 %v3540
    %v3877 = vunpack.c.h.b16 %v3540
    %v3878 = vunpack.c.l.b16 %v3541
    %v3879 = vunpack.c.h.b16 %v3541
    %v3880 = vunpack.c.l.b16 %v3542
    %v3881 = vunpack.c.h.b16 %v3542
    %v3882 = vunpack.c.l.b16 %v3543
    %v3883 = vunpack.c.h.b16 %v3543
    %v3884 = vunpack.c.l.b16 %v3544
    %v3885 = vunpack.c.h.b16 %v3544
    %v3886 = vunpack.c.l.b16 %v3545
    %v3887 = vunpack.c.h.b16 %v3545
    %v3888 = vunpack.c.l.b16 %v3546
    %v3889 = vunpack.c.h.b16 %v3546
    %v3890 = vunpack.c.l.b16 %v3547
    %v3891 = vunpack.c.h.b16 %v3547
    %v3892 = vunpack.c.l.b16 %v3548
    %v3893 = vunpack.c.h.b16 %v3548
    %v3894 = vunpack.c.l.b16 %v3549
    %v3895 = vunpack.c.h.b16 %v3549
    %v3896 = vunpack.c.l.b16 %v3550
    %v3897 = vunpack.c.h.b16 %v3550
    %v3898 = vunpack.c.l.b16 %v3551
    %v3899 = vunpack.c.h.b16 %v3551
    %v3900 = vunpack.c.l.b16 %v3552
    %v3901 = vunpack.c.h.b16 %v3552
    %v3902 = vunpack.c.l.b16 %v3553
    %v3903 = vunpack.c.h.b16 %v3553
    %v3904 = vunpack.c.l.b16 %v3554
    %v3905 = vunpack.c.h.b16 %v3554
    %v3906 = vunpack.c.l.b16 %v3555
    %v3907 = vunpack.c.h.b16 %v3555
    %v3908 = vunpack.c.l.b16 %v3556
    %v3909 = vunpack.c.h.b16 %v3556
    %v3910 = vunpack.c.l.b16 %v3557
    %v3911 = vunpack.c.h.b16 %v3557
    %v3912 = vunpack.c.l.b16 %v3558
    %v3913 = vunpack.c.h.b16 %v3558
    %v3914 = vunpack.c.l.b16 %v3559
    %v3915 = vunpack.c.h.b16 %v3559
    %v3916 = vunpack.c.l.b16 %v3560
    %v3917 = vunpack.c.h.b16 %v3560
    %v3918 = vunpack.c.l.b16 %v3561
    %v3919 = vunpack.c.h.b16 %v3561
    %v3920 = vunpack.c.l.b16 %v3562
    %v3921 = vunpack.c.h.b16 %v3562
    %v3922 = vunpack.c.l.b16 %v3563
    %v3923 = vunpack.c.h.b16 %v3563
    %v3924 = vunpack.c.l.b16 %v3564
    %v3925 = vunpack.c.h.b16 %v3564
    %v3926 = vunpack.c.l.b16 %v3565
    %v3927 = vunpack.c.h.b16 %v3565
    %v3928 = vunpack.c.l.b16 %v3566
    %v3929 = vunpack.c.h.b16 %v3566
    %v3930 = vunpack.c.l.b16 %v3567
    %v3931 = vunpack.c.h.b16 %v3567
    %v3932 = vunpack.c.l.b16 %v3568
    %v3933 = vunpack.c.h.b16 %v3568
    %v3934 = vunpack.c.l.b16 %v3569
    %v3935 = vunpack.c.h.b16 %v3569
    %v3936 = vunpack.c.l.b16 %v3570
    %v3937 = vunpack.c.h.b16 %v3570
    %v3938 = vunpack.c.l.b16 %v3571
    %v3939 = vunpack.c.h.b16 %v3571
    %v3940 = vunpack.c.l.b16 %v3572
    %v3941 = vunpack.c.h.b16 %v3572
    %v3942 = vunpack.c.l.b16 %v3573
    %v3943 = vunpack.c.h.b16 %v3573
    %v3944 = vunpack.c.l.b16 %v3574
    %v3945 = vunpack.c.h.b16 %v3574
    %v3946 = vunpack.c.l.b16 %v3575
    %v3947 = vunpack.c.h.b16 %v3575
    %v3948 = vunpack.c.l.b16 %v3576
    %v3949 = vunpack.c.h.b16 %v3576
    %v3950 = vunpack.c.l.b16 %v3577
    %v3951 = vunpack.c.h.b16 %v3577
    %v3952 = vunpack.c.l.b16 %v3578
    %v3953 = vunpack.c.h.b16 %v3578
    %v3954 = vunpack.c.l.b16 %v3579
    %v3955 = vunpack.c.h.b16 %v3579
    %v3956 = vunpack.c.l.b16 %v3580
    %v3957 = vunpack.c.h.b16 %v3580
    %v3958 = vunpack.c.l.b16 %v3581
    %v3959 = vunpack.c.h.b16 %v3581
    %v3960 = vunpack.c.l.b16 %v3582
    %v3961 = vunpack.c.h.b16 %v3582
    %v3962 = vunpack.c.l.b16 %v3583
    %v3963 = vunpack.c.h.b16 %v3583
    %v3964 = vunpack.c.l.b16 %v3584
    %v3965 = vunpack.c.h.b16 %v3584
    %v3966 = vunpack.c.l.b16 %v3585
    %v3967 = vunpack.c.h.b16 %v3585
    %v3968 = vunpack.c.l.b16 %v3586
    %v3969 = vunpack.c.h.b16 %v3586
    %v3970 = vunpack.c.l.b16 %v3587
    %v3971 = vunpack.c.h.b16 %v3587
    %v3972 = vunpack.c.l.b16 %v3588
    %v3973 = vunpack.c.h.b16 %v3588
    %v3974 = vunpack.c.l.b16 %v3589
    %v3975 = vunpack.c.h.b16 %v3589
    %v3976 = vunpack.c.l.b16 %v3590
    %v3977 = vunpack.c.h.b16 %v3590
    %v3978 = vunpack.c.l.b16 %v3591
    %v3979 = vunpack.c.h.b16 %v3591
    %v3980 = vunpack.c.l.b16 %v3592
    %v3981 = vunpack.c.h.b16 %v3592
    %v3982 = vunpack.c.l.b16 %v3593
    %v3983 = vunpack.c.h.b16 %v3593
    %v3984 = vunpack.c.l.b16 %v3594
    %v3985 = vunpack.c.h.b16 %v3594
    %v3986 = vunpack.c.l.b16 %v3595
    %v3987 = vunpack.c.h.b16 %v3595
    %v3988 = vunpack.c.l.b16 %v3596
    %v3989 = vunpack.c.h.b16 %v3596
    %v3990 = vunpack.c.l.b16 %v3597
    %v3991 = vunpack.c.h.b16 %v3597
    %v3992 = vunpack.c.l.b16 %v3598
    %v3993 = vunpack.c.h.b16 %v3598
    %v3994 = vunpack.c.l.b16 %v3599
    %v3995 = vunpack.c.h.b16 %v3599
    %v3996 = vunpack.c.l.b16 %v3600
    %v3997 = vunpack.c.h.b16 %v3600
    %v3998 = vunpack.c.l.b16 %v3601
    %v3999 = vunpack.c.h.b16 %v3601
    %v4000 = vunpack.c.l.b16 %v3602
    %v4001 = vunpack.c.h.b16 %v3602
    %v4002 = vunpack.c.l.b16 %v3603
    %v4003 = vunpack.c.h.b16 %v3603
    %v4004 = vunpack.c.l.b16 %v3604
    %v4005 = vunpack.c.h.b16 %v3604
    %v4006 = vunpack.c.l.b16 %v3605
    %v4007 = vunpack.c.h.b16 %v3605
    %v4008 = vunpack.c.l.b16 %v3606
    %v4009 = vunpack.c.h.b16 %v3606
    %v4010 = vunpack.c.l.b16 %v3607
    %v4011 = vunpack.c.h.b16 %v3607
    %v4012 = vunpack.c.l.b16 %v3608
    %v4013 = vunpack.c.h.b16 %v3608
    %v4014 = vunpack.c.l.b16 %v3609
    %v4015 = vunpack.c.h.b16 %v3609
    %v4016 = vpack.c.b16 %v3764, %v3760
    %v4017 = vpack.c.b16 %v3765, %v3761
    %v4018 = vpack.c.b16 %v3766, %v3762
    %v4019 = vpack.c.b16 %v3767, %v3763
    %v4020 = vpack.c.b16 %v3772, %v3768
    %v4021 = vpack.c.b16 %v3773, %v3769
    %v4022 = vpack.c.b16 %v3774, %v3770
    %v4023 = vpack.c.b16 %v3775, %v3771
    %v4024 = vpack.c.b16 %v3780, %v3776
    %v4025 = vpack.c.b16 %v3781, %v3777
    %v4026 = vpack.c.b16 %v3782, %v3778
    %v4027 = vpack.c.b16 %v3783, %v3779
    %v4028 = vpack.c.b16 %v3788, %v3784
    %v4029 = vpack.c.b16 %v3789, %v3785
    %v4030 = vpack.c.b16 %v3790, %v3786
    %v4031 = vpack.c.b16 %v3791, %v3787
    %v4032 = vpack.c.b16 %v3796, %v3792
    %v4033 = vpack.c.b16 %v3797, %v3793
    %v4034 = vpack.c.b16 %v3798, %v3794
    %v4035 = vpack.c.b16 %v3799, %v3795
    %v4036 = vpack.c.b16 %v3804, %v3800
    %v4037 = vpack.c.b16 %v3805, %v3801
    %v4038 = vpack.c.b16 %v3806, %v3802
    %v4039 = vpack.c.b16 %v3807, %v3803
    %v4040 = vpack.c.b16 %v3812, %v3808
    %v4041 = vpack.c.b16 %v3813, %v3809
    %v4042 = vpack.c.b16 %v3814, %v3810
    %v4043 = vpack.c.b16 %v3815, %v3811
    %v4044 = vpack.c.b16 %v3820, %v3816
    %v4045 = vpack.c.b16 %v3821, %v3817
    %v4046 = vpack.c.b16 %v3822, %v3818
    %v4047 = vpack.c.b16 %v3823, %v3819
    %v4048 = vpack.c.b16 %v3828, %v3824
    %v4049 = vpack.c.b16 %v3829, %v3825
    %v4050 = vpack.c.b16 %v3830, %v3826
    %v4051 = vpack.c.b16 %v3831, %v3827
    %v4052 = vpack.c.b16 %v3836, %v3832
    %v4053 = vpack.c.b16 %v3837, %v3833
    %v4054 = vpack.c.b16 %v3838, %v3834
    %v4055 = vpack.c.b16 %v3839, %v3835
    %v4056 = vpack.c.b16 %v3844, %v3840
    %v4057 = vpack.c.b16 %v3845, %v3841
    %v4058 = vpack.c.b16 %v3846, %v3842
    %v4059 = vpack.c.b16 %v3847, %v3843
    %v4060 = vpack.c.b16 %v3852, %v3848
    %v4061 = vpack.c.b16 %v3853, %v3849
    %v4062 = vpack.c.b16 %v3854, %v3850
    %v4063 = vpack.c.b16 %v3855, %v3851
    %v4064 = vpack.c.b16 %v3860, %v3856
    %v4065 = vpack.c.b16 %v3861, %v3857
    %v4066 = vpack.c.b16 %v3862, %v3858
    %v4067 = vpack.c.b16 %v3863, %v3859
    %v4068 = vpack.c.b16 %v3868, %v3864
    %v4069 = vpack.c.b16 %v3869, %v3865
    %v4070 = vpack.c.b16 %v3870, %v3866
    %v4071 = vpack.c.b16 %v3871, %v3867
    %v4072 = vpack.c.b16 %v3876, %v3872
    %v4073 = vpack.c.b16 %v3877, %v3873
    %v4074 = vpack.c.b16 %v3878, %v3874
    %v4075 = vpack.c.b16 %v3879, %v3875
    %v4076 = vpack.c.b16 %v3884, %v3880
    %v4077 = vpack.c.b16 %v3885, %v3881
    %v4078 = vpack.c.b16 %v3886, %v3882
    %v4079 = vpack.c.b16 %v3887, %v3883
    %v4080 = vpack.c.b16 %v3892, %v3888
    %v4081 = vpack.c.b16 %v3893, %v3889
    %v4082 = vpack.c.b16 %v3894, %v3890
    %v4083 = vpack.c.b16 %v3895, %v3891
    %v4084 = vpack.c.b16 %v3900, %v3896
    %v4085 = vpack.c.b16 %v3901, %v3897
    %v4086 = vpack.c.b16 %v3902, %v3898
    %v4087 = vpack.c.b16 %v3903, %v3899
    %v4088 = vpack.c.b16 %v3908, %v3904
    %v4089 = vpack.c.b16 %v3909, %v3905
    %v4090 = vpack.c.b16 %v3910, %v3906
    %v4091 = vpack.c.b16 %v3911, %v3907
    %v4092 = vpack.c.b16 %v3916, %v3912
    %v4093 = vpack.c.b16 %v3917, %v3913
    %v4094 = vpack.c.b16 %v3918, %v3914
    %v4095 = vpack.c.b16 %v3919, %v3915
    %v4096 = vpack.c.b16 %v3924, %v3920
    %v4097 = vpack.c.b16 %v3925, %v3921
    %v4098 = vpack.c.b16 %v3926, %v3922
    %v4099 = vpack.c.b16 %v3927, %v3923
    %v4100 = vpack.c.b16 %v3932, %v3928
    %v4101 = vpack.c.b16 %v3933, %v3929
    %v4102 = vpack.c.b16 %v3934, %v3930
    %v4103 = vpack.c.b16 %v3935, %v3931
    %v4104 = vpack.c.b16 %v3940, %v3936
    %v4105 = vpack.c.b16 %v3941, %v3937
    %v4106 = vpack.c.b16 %v3942, %v3938
    %v4107 = vpack.c.b16 %v3943, %v3939
    %v4108 = vpack.c.b16 %v3948, %v3944
    %v4109 = vpack.c.b16 %v3949, %v3945
    %v4110 = vpack.c.b16 %v3950, %v3946
    %v4111 = vpack.c.b16 %v3951, %v3947
    %v4112 = vpack.c.b16 %v3956, %v3952
    %v4113 = vpack.c.b16 %v3957, %v3953
    %v4114 = vpack.c.b16 %v3958, %v3954
    %v4115 = vpack.c.b16 %v3959, %v3955
    %v4116 = vpack.c.b16 %v3964, %v3960
    %v4117 = vpack.c.b16 %v3965, %v3961
    %v4118 = vpack.c.b16 %v3966, %v3962
    %v4119 = vpack.c.b16 %v3967, %v3963
    %v4120 = vpack.c.b16 %v3972, %v3968
    %v4121 = vpack.c.b16 %v3973, %v3969
    %v4122 = vpack.c.b16 %v3974, %v3970
    %v4123 = vpack.c.b16 %v3975, %v3971
    %v4124 = vpack.c.b16 %v3980, %v3976
    %v4125 = vpack.c.b16 %v3981, %v3977
    %v4126 = vpack.c.b16 %v3982, %v3978
    %v4127 = vpack.c.b16 %v3983, %v3979
    %v4128 = vpack.c.b16 %v3988, %v3984
    %v4129 = vpack.c.b16 %v3989, %v3985
    %v4130 = vpack.c.b16 %v3990, %v3986
    %v4131 = vpack.c.b16 %v3991, %v3987
    %v4132 = vpack.c.b16 %v3996, %v3992
    %v4133 = vpack.c.b16 %v3997, %v3993
    %v4134 = vpack.c.b16 %v3998, %v3994
    %v4135 = vpack.c.b16 %v3999, %v3995
    %v4136 = vpack.c.b16 %v4004, %v4000
    %v4137 = vpack.c.b16 %v4005, %v4001
    %v4138 = vpack.c.b16 %v4006, %v4002
    %v4139 = vpack.c.b16 %v4007, %v4003
    %v4140 = vpack.c.b16 %v4012, %v4008
    %v4141 = vpack.c.b16 %v4013, %v4009
    %v4142 = vpack.c.b16 %v4014, %v4010
    %v4143 = vpack.c.b16 %v4015, %v4011
    %4272 = vmatprep.subr.bf16.mxu0 %v4017
    %4273 = vmatpush1.bf16.msra.mxu0 %v4016
    %4274 = vmatprep.subr.bf16.mxu0 %v4021
    %4275 = vmatpush1.bf16.msra.mxu0 %v4020
    %4276 = vmatprep.subr.bf16.mxu0 %v4025
    %4277 = vmatpush1.bf16.msra.mxu0 %v4024
    %4278 = vmatprep.subr.bf16.mxu0 %v4029
    %4279 = vmatpush1.bf16.msra.mxu0 %v4028
    %4280 = vmatprep.subr.bf16.mxu0 %v4033
    %4281 = vmatpush1.bf16.msra.mxu0 %v4032
    %4282 = vmatprep.subr.bf16.mxu0 %v4037
    %4283 = vmatpush1.bf16.msra.mxu0 %v4036
    %4284 = vmatprep.subr.bf16.mxu0 %v4041
    %4285 = vmatpush1.bf16.msra.mxu0 %v4040
    %4286 = vmatprep.subr.bf16.mxu0 %v4045
    %4287 = vmatpush1.bf16.msra.mxu0 %v4044
    %4288 = vmatprep.subr.bf16.mxu0 %v4049
    %4289 = vmatpush1.bf16.msra.mxu0 %v4048
    %4290 = vmatprep.subr.bf16.mxu0 %v4053
    %4291 = vmatpush1.bf16.msra.mxu0 %v4052
    %4292 = vmatprep.subr.bf16.mxu0 %v4057
    %4293 = vmatpush1.bf16.msra.mxu0 %v4056
    %4294 = vmatprep.subr.bf16.mxu0 %v4061
    %4295 = vmatpush1.bf16.msra.mxu0 %v4060
    %4296 = vmatprep.subr.bf16.mxu0 %v4065
    %4297 = vmatpush1.bf16.msra.mxu0 %v4064
    %4298 = vmatprep.subr.bf16.mxu0 %v4069
    %4299 = vmatpush1.bf16.msra.mxu0 %v4068
    %4300 = vmatprep.subr.bf16.mxu0 %v4073
    %4301 = vmatpush1.bf16.msra.mxu0 %v4072
    %4302 = vmatprep.subr.bf16.mxu0 %v4077
    %4303 = vmatpush1.bf16.msra.mxu0 %v4076
    %4304 = vmatprep.mubr.bf16.mxu0 %v3479
    %4305 = vmatmul.mubr.bf16.gmra.mrb[0].mxu0 %v3478
    %v4306 = vpop.f32.mrb[0].mxu0
    %v4307 = vadd.f32 %v3615, %v4306
    %v4308 = vpop.f32.mrb[0].mxu0
    %v4309 = vadd.f32 %v3619, %v4308
    %v4310 = vpop.f32.mrb[0].mxu0
    %v4311 = vadd.f32 %v3615, %v4310
    %v4312 = vpop.f32.mrb[0].mxu0
    %v4313 = vadd.f32 %v3619, %v4312
    %4314 = vdwg.mxu0
    %4315 = vmatprep.subr.bf16.mxu0 %v4081
    %4316 = vmatpush1.bf16.msra.mxu0 %v4080
    %4317 = vmatprep.subr.bf16.mxu0 %v4085
    %4318 = vmatpush1.bf16.msra.mxu0 %v4084
    %4319 = vmatprep.subr.bf16.mxu0 %v4089
    %4320 = vmatpush1.bf16.msra.mxu0 %v4088
    %4321 = vmatprep.subr.bf16.mxu0 %v4093
    %4322 = vmatpush1.bf16.msra.mxu0 %v4092
    %4323 = vmatprep.subr.bf16.mxu0 %v4097
    %4324 = vmatpush1.bf16.msra.mxu0 %v4096
    %4325 = vmatprep.subr.bf16.mxu0 %v4101
    %4326 = vmatpush1.bf16.msra.mxu0 %v4100
    %4327 = vmatprep.subr.bf16.mxu0 %v4105
    %4328 = vmatpush1.bf16.msra.mxu0 %v4104
    %4329 = vmatprep.subr.bf16.mxu0 %v4109
    %4330 = vmatpush1.bf16.msra.mxu0 %v4108
    %4331 = vmatprep.subr.bf16.mxu0 %v4113
    %4332 = vmatpush1.bf16.msra.mxu0 %v4112
    %4333 = vmatprep.subr.bf16.mxu0 %v4117
    %4334 = vmatpush1.bf16.msra.mxu0 %v4116
    %4335 = vmatprep.subr.bf16.mxu0 %v4121
    %4336 = vmatpush1.bf16.msra.mxu0 %v4120
    %4337 = vmatprep.subr.bf16.mxu0 %v4125
    %4338 = vmatpush1.bf16.msra.mxu0 %v4124
    %4339 = vmatprep.subr.bf16.mxu0 %v4129
    %4340 = vmatpush1.bf16.msra.mxu0 %v4128
    %4341 = vmatprep.subr.bf16.mxu0 %v4133
    %4342 = vmatpush1.bf16.msra.mxu0 %v4132
    %4343 = vmatprep.subr.bf16.mxu0 %v4137
    %4344 = vmatpush1.bf16.msra.mxu0 %v4136
    %4345 = vmatprep.subr.bf16.mxu0 %v4141
    %4346 = vmatpush1.bf16.msra.mxu0 %v4140
    %4347 = vmatprep.mubr.bf16.mxu0 %v3481
    %4348 = vmatmul.mubr.bf16.gmra.mrb[0].mxu0 %v3480
    %v4349 = vpop.f32.mrb[0].mxu0
    %v4350 = vadd.f32 %v4307, %v4349
    %v4351 = vpop.f32.mrb[0].mxu0
    %v4352 = vadd.f32 %v4309, %v4351
    %v4353 = vpop.f32.mrb[0].mxu0
    %v4354 = vadd.f32 %v4311, %v4353
    %v4355 = vpop.f32.mrb[0].mxu0
    %v4356 = vadd.f32 %v4313, %v4355
    %4357 = vdwg.mxu0
    %4358 = vmatprep.subr.bf16.mxu0 %v4019
    %4359 = vmatpush1.bf16.msra.mxu0 %v4018
    %4360 = vmatprep.subr.bf16.mxu0 %v4023
    %4361 = vmatpush1.bf16.msra.mxu0 %v4022
    %4362 = vmatprep.subr.bf16.mxu0 %v4027
    %4363 = vmatpush1.bf16.msra.mxu0 %v4026
    %4364 = vmatprep.subr.bf16.mxu0 %v4031
    %4365 = vmatpush1.bf16.msra.mxu0 %v4030
    %4366 = vmatprep.subr.bf16.mxu0 %v4035
    %4367 = vmatpush1.bf16.msra.mxu0 %v4034
    %4368 = vmatprep.subr.bf16.mxu0 %v4039
    %4369 = vmatpush1.bf16.msra.mxu0 %v4038
    %4370 = vmatprep.subr.bf16.mxu0 %v4043
    %4371 = vmatpush1.bf16.msra.mxu0 %v4042
    %4372 = vmatprep.subr.bf16.mxu0 %v4047
    %4373 = vmatpush1.bf16.msra.mxu0 %v4046
    %4374 = vmatprep.subr.bf16.mxu0 %v4051
    %4375 = vmatpush1.bf16.msra.mxu0 %v4050
    %4376 = vmatprep.subr.bf16.mxu0 %v4055
    %4377 = vmatpush1.bf16.msra.mxu0 %v4054
    %4378 = vmatprep.subr.bf16.mxu0 %v4059
    %4379 = vmatpush1.bf16.msra.mxu0 %v4058
    %4380 = vmatprep.subr.bf16.mxu0 %v4063
    %4381 = vmatpush1.bf16.msra.mxu0 %v4062
    %4382 = vmatprep.subr.bf16.mxu0 %v4067
    %4383 = vmatpush1.bf16.msra.mxu0 %v4066
    %4384 = vmatprep.subr.bf16.mxu0 %v4071
    %4385 = vmatpush1.bf16.msra.mxu0 %v4070
    %4386 = vmatprep.subr.bf16.mxu0 %v4075
    %4387 = vmatpush1.bf16.msra.mxu0 %v4074
    %4388 = vmatprep.subr.bf16.mxu0 %v4079
    %4389 = vmatpush1.bf16.msra.mxu0 %v4078
    %4390 = vmatprep.mubr.bf16.mxu0 %v3479
    %4391 = vmatmul.mubr.bf16.gmra.mrb[0].mxu0 %v3478
    %v4392 = vpop.f32.mrb[0].mxu0
    %v4393 = vadd.f32 %v3623, %v4392
    %v4394 = vpop.f32.mrb[0].mxu0
    %v4395 = vadd.f32 %v3627, %v4394
    %v4396 = vpop.f32.mrb[0].mxu0
    %v4397 = vadd.f32 %v3623, %v4396
    %v4398 = vpop.f32.mrb[0].mxu0
    %v4399 = vadd.f32 %v3627, %v4398
    %4400 = vdwg.mxu0
    %4401 = vmatprep.subr.bf16.mxu0 %v4083
    %4402 = vmatpush1.bf16.msra.mxu0 %v4082
    %4403 = vmatprep.subr.bf16.mxu0 %v4087
    %4404 = vmatpush1.bf16.msra.mxu0 %v4086
    %4405 = vmatprep.subr.bf16.mxu0 %v4091
    %4406 = vmatpush1.bf16.msra.mxu0 %v4090
    %4407 = vmatprep.subr.bf16.mxu0 %v4095
    %4408 = vmatpush1.bf16.msra.mxu0 %v4094
    %4409 = vmatprep.subr.bf16.mxu0 %v4099
    %4410 = vmatpush1.bf16.msra.mxu0 %v4098
    %4411 = vmatprep.subr.bf16.mxu0 %v4103
    %4412 = vmatpush1.bf16.msra.mxu0 %v4102
    %4413 = vmatprep.subr.bf16.mxu0 %v4107
    %4414 = vmatpush1.bf16.msra.mxu0 %v4106
    %4415 = vmatprep.subr.bf16.mxu0 %v4111
    %4416 = vmatpush1.bf16.msra.mxu0 %v4110
    %4417 = vmatprep.subr.bf16.mxu0 %v4115
    %4418 = vmatpush1.bf16.msra.mxu0 %v4114
    %4419 = vmatprep.subr.bf16.mxu0 %v4119
    %4420 = vmatpush1.bf16.msra.mxu0 %v4118
    %4421 = vmatprep.subr.bf16.mxu0 %v4123
    %4422 = vmatpush1.bf16.msra.mxu0 %v4122
    %4423 = vmatprep.subr.bf16.mxu0 %v4127
    %4424 = vmatpush1.bf16.msra.mxu0 %v4126
    %4425 = vmatprep.subr.bf16.mxu0 %v4131
    %4426 = vmatpush1.bf16.msra.mxu0 %v4130
    %4427 = vmatprep.subr.bf16.mxu0 %v4135
    %4428 = vmatpush1.bf16.msra.mxu0 %v4134
    %4429 = vmatprep.subr.bf16.mxu0 %v4139
    %4430 = vmatpush1.bf16.msra.mxu0 %v4138
    %4431 = vmatprep.subr.bf16.mxu0 %v4143
    %4432 = vmatpush1.bf16.msra.mxu0 %v4142
    %4433 = vmatprep.mubr.bf16.mxu0 %v3481
    %4434 = vmatmul.mubr.bf16.gmra.mrb[0].mxu0 %v3480
    %v4435 = vpop.f32.mrb[0].mxu0
    %v4436 = vadd.f32 %v4393, %v4435
    %v4437 = vpop.f32.mrb[0].mxu0
    %v4438 = vadd.f32 %v4395, %v4437
    %v4439 = vpop.f32.mrb[0].mxu0
    %v4440 = vadd.f32 %v4397, %v4439
    %v4441 = vpop.f32.mrb[0].mxu0
    %v4442 = vadd.f32 %v4399, %v4441
    %4443 = vdwg.mxu0
    %v4444 = vmul.f32 %v4350, 0.2
    %v4445 = vmul.f32 %v4352, 0.2
    %v4446 = vmul.f32 %v4436, 0.2
    %v4447 = vmul.f32 %v4438, 0.2
    %v4448 = vmul.f32 %v4354, 0.2
    %v4449 = vmul.f32 %v4356, 0.2
    %v4450 = vmul.f32 %v4440, 0.2
    %v4451 = vmul.f32 %v4442, 0.2
    %v4452 = vmax.f32 %v4350, %v4444
    %v4453 = vmax.f32 %v4352, %v4445
    %v4454 = vmax.f32 %v4436, %v4446
    %v4455 = vmax.f32 %v4438, %v4447
    %v4456 = vmax.f32 %v4354, %v4448
    %v4457 = vmax.f32 %v4356, %v4449
    %v4458 = vmax.f32 %v4440, %v4450
    %v4459 = vmax.f32 %v4442, %v4451
    %v4460 = vld [vmem:[%s8] sm:$0xf]
    %v4462 = vlaneseq
    %v4463 = vshrl.u32 %v4462, 7
    %v4464 = vsub.s32 0, %v4463
    %v4465 = vrot.slane %v4460, %v4464
    %v4466 = vlaneseq
    %v4467 = vshrl.u32 %v4466, 7
    %v4468 = vsub.s32 1, %v4467
    %v4469 = vrot.slane %v4460, %v4468
    %v4470 = vlaneseq
    %v4471 = vshrl.u32 %v4470, 7
    %v4472 = vsub.s32 2, %v4471
    %v4473 = vrot.slane %v4460, %v4472
    %v4474 = vlaneseq
    %v4475 = vshrl.u32 %v4474, 7
    %v4476 = vsub.s32 3, %v4475
    %v4477 = vrot.slane %v4460, %v4476
    %v4482 = vmul.f32 %v4452, %v4465
    %v4483 = vmul.f32 %v4453, %v4469
    %v4484 = vmul.f32 %v4454, %v4473
    %v4485 = vmul.f32 %v4455, %v4477
    %v4486 = vmul.f32 %v4456, %v4465
    %v4487 = vmul.f32 %v4457, %v4469
    %v4488 = vmul.f32 %v4458, %v4473
    %v4489 = vmul.f32 %v4459, %v4477
    %v4490 = vadd.f32 %v4482, %v4483
    %v4491 = vadd.f32 %v4490, %v4484
    %v4492 = vadd.f32 %v4491, %v4485
    %4493 = vadd.xlane.f32.xlu0 %v4492
    %v4494 = vpop.xlane.xlu0 %4493
    %v4495 = vadd.f32 %v4486, %v4487
    %v4496 = vadd.f32 %v4495, %v4488
    %v4497 = vadd.f32 %v4496, %v4489
    %4498 = vadd.xlane.f32.xlu0 %v4497
    %v4499 = vpop.xlane.xlu0 %4498
    %s4500 = sld [smem:[#allocation2]]
    %v4501 = vstv %s4500
    %v4502 = vadd.f32 %v4494, %v4501
    %v4503 = vadd.f32 %v4499, %v4501
    %vm4504 = vcmask 7168
    %4505 = vst.msk [vmem:[#allocation11] sm:$0xff] %vm4504, %v4502
    %4506 = vst.msk [vmem:[#allocation11 + $0x8] sm:$0xff] %vm4504, %v4503
    // Predicated region
    $region62: #{tpu_custom_call.1} parent=1 // pred_check
      _
    $region63: #{tpu_custom_call.1} parent=1 // pred_check_branch
      %4508 = sbr.rel (0) target = $region65
    $region64: #{tpu_custom_call.1} parent=1 // pred_region
      // Predicated region
      $region66: #{tpu_custom_call.1} parent=64 // pred_check
        _
      $region67: #{tpu_custom_call.1} parent=64 // pred_check_branch
        %4510 = sbr.rel (0) target = $region69
      $region68: #{tpu_custom_call.1} parent=64 // pred_region
        // Predicated region
        $region70: #{tpu_custom_call.1} parent=68 // pred_check
          _
        $region71: #{tpu_custom_call.1} parent=68 // pred_check_branch
          %4512 = sbr.rel target = $region73
        $region72: #{tpu_custom_call.1} parent=68 // pred_region
          // Predicated region
          $region85: #{tpu_custom_call.1} parent=72 // pred_check
            _
          $region86: #{tpu_custom_call.1} parent=72 // pred_check_branch
            %4527 = sbr.rel (0) target = $region88
          $region87: #{tpu_custom_call.1} parent=72 // pred_region
            loop: start=0, step=1, limit=1
            $region89: #{tpu_custom_call.1} parent=87 // loop_pre_header
              _
            $region90: #{tpu_custom_call.1} parent=87 // loop_header
              %s4530 = sphi 0, %s4534
              %p4531 = scmp.ge.s32.totalorder %s4530, 1
              %s4535 = sphi [#allocation11], [#allocation11]
              %s4536 = sphi %s10, %s10
            $region91: #{tpu_custom_call.1} parent=87 // loop_header_branch
              %4533 = sbr.rel (%p4531) target = $region95
            $region92: #{tpu_custom_call.1} parent=87 // loop_body
              %v4537 = vld [vmem:[%s4535] sm:$0x3]
              %4538 = vst [vmem:[%s4536] sm:$0x3] %v4537
            $region93: #{tpu_custom_call.1} parent=87 // loop_footer
              %s4534 = sadd.s32 1, %s4530
            $region94: #{tpu_custom_call.1} parent=87 // loop_footer_branch
              %4529 = sbr.rel target = $region90
            $region95: #{tpu_custom_call.1} parent=87 // loop_exit
              _
          $region88: #{tpu_custom_call.1} parent=72 // pred_fallthru
            _
        $region73: #{tpu_custom_call.1} parent=68 // pred_fallthru
          _
        // Predicated region
        $region74: #{tpu_custom_call.1} parent=68 // pred_check
          _
        $region75: #{tpu_custom_call.1} parent=68 // pred_check_branch
          %4514 = sbr.rel (0) target = $region77
        $region76: #{tpu_custom_call.1} parent=68 // pred_region
          loop: start=0, step=1, limit=1
          $region78: #{tpu_custom_call.1} parent=76 // loop_pre_header
            _
          $region79: #{tpu_custom_call.1} parent=76 // loop_header
            %s4517 = sphi 0, %s4521
            %p4518 = scmp.ge.s32.totalorder %s4517, 1
            %s4522 = sphi [#allocation11], [#allocation11]
            %s4523 = sphi %s10, %s10
          $region80: #{tpu_custom_call.1} parent=76 // loop_header_branch
            %4520 = sbr.rel (%p4518) target = $region84
          $region81: #{tpu_custom_call.1} parent=76 // loop_body
            %v4524 = vld [vmem:[%s4522] sm:$0x3]
            %4525 = vst [vmem:[%s4523] sm:$0x3] %v4524
          $region82: #{tpu_custom_call.1} parent=76 // loop_footer
            %s4521 = sadd.s32 1, %s4517
          $region83: #{tpu_custom_call.1} parent=76 // loop_footer_branch
            %4516 = sbr.rel target = $region79
          $region84: #{tpu_custom_call.1} parent=76 // loop_exit
            _
        $region77: #{tpu_custom_call.1} parent=68 // pred_fallthru
          _
      $region69: #{tpu_custom_call.1} parent=64 // pred_fallthru
        _
      %4539 = vnop
    $region65: #{tpu_custom_call.1} parent=1 // pred_fallthru
      _
    // Predicated region
    $region96: #{tpu_custom_call.1} parent=1 // pred_check
      _
    $region97: #{tpu_custom_call.1} parent=1 // pred_check_branch
      %4541 = sbr.rel (0) target = $region99
    $region98: #{tpu_custom_call.1} parent=1 // pred_region
      _
    $region99: #{tpu_custom_call.1} parent=1 // pred_fallthru
      _
    %4542 = vsyncpa [#allocation4], 1
    %4543 = vsyncpa [#allocation6], 1
    %4544 = vsyncpa [#allocation9], 1

</llo_original>
